<compile_context>
chip_gen: v6e
topology: v6e:2x2x1
jax: 0.10.0
libtpu: 0.0.40
codegen_flags: <defaults>
</compile_context>

<pallas_src>
import functools

import jax
import jax.numpy as jnp
from jax.experimental import pallas as pl
from jax.experimental.pallas import tpu as pltpu

DROP_P = 0.1
SCALE = 1.0 / 0.02  # == 50.0


@functools.partial(jax.jit, static_argnames=("drop_p", "scale"))
def attention_dropout(query, key, value, seed, drop_p=DROP_P, scale=SCALE):
    """query/key/value: (B, H, S, D) float32; seed: (1,) int32."""
    B, H, S, D = query.shape
    BH = B * H

    # Batch up to 4 heads per grid step (amortize ~0.35us/step overhead, bigger DMAs).
    G = max(g for g in range(1, min(BH, 4) + 1) if BH % g == 0)

    q = query.reshape(BH, S, D)
    k = key.reshape(BH, S, D)
    v = value.reshape(BH, S, D)

    keep_scale = 1.0 / (1.0 - drop_p)
    threshold = int(round(drop_p * (1 << 24)))  # drop if top-24 hash bits < threshold

    def kernel(seed_ref, q_ref, k_ref, v_ref, o_ref):
        # Fold the 1/0.02 scale into q: O(S*D) multiplies instead of O(S*S).
        qb = q_ref[...].astype(jnp.float32) * jnp.float32(scale)
        kb = k_ref[...].astype(jnp.float32)
        vb = v_ref[...].astype(jnp.float32)

        # Batched q @ k^T without materializing an explicit transpose of k.
        s = jnp.einsum("gqd,gkd->gqk", qb, kb, preferred_element_type=jnp.float32)

        # Numerically-stable softmax along the last axis.
        m = jnp.max(s, axis=-1, keepdims=True)
        e = jnp.exp(s - m)
        denom = jnp.sum(e, axis=-1, keepdims=True)
        # Fold the dropout 1/(1-p) rescale into the per-row normalizer (O(S) work).
        inv = jnp.float32(keep_scale) / denom

        if threshold > 0:
            # Inverted dropout.  Keep mask from a deterministic counter-based hash of
            # (seed, head, row, col) -- portable (no pltpu.prng_*), distinct per head.
            # TODO(synk): cannot bit-match torch's dropout RNG stream; semantics only.
            hh = jax.lax.broadcasted_iota(jnp.uint32, s.shape, 0)
            rr = jax.lax.broadcasted_iota(jnp.uint32, s.shape, 1)
            cc = jax.lax.broadcasted_iota(jnp.uint32, s.shape, 2)
            head0 = pl.program_id(0).astype(jnp.uint32) * jnp.uint32(G)
            x = (seed_ref[0].astype(jnp.uint32)
                 ^ ((head0 + hh) * jnp.uint32(0x9E3779B1))
                 ^ (rr * jnp.uint32(0x85EBCA6B))
                 ^ (cc * jnp.uint32(0xC2B2AE35)))
            x = x ^ (x >> 16)
            x = x * jnp.uint32(0x7FEB352D)
            x = x ^ (x >> 15)
            x = x * jnp.uint32(0x846CA68B)
            x = x ^ (x >> 16)
            keep = (x >> 8) >= jnp.uint32(threshold)  # P(keep) = 1 - drop_p
            p = jnp.where(keep, e * inv, jnp.zeros_like(e))
        else:
            p = e * inv

        # (dropped softmax) @ value, f32 accumulation on the MXU.
        o_ref[...] = jnp.einsum(
            "gqk,gkd->gqd", p, vb, preferred_element_type=jnp.float32
        ).astype(o_ref.dtype)

    out = pl.pallas_call(
        kernel,
        out_shape=jax.ShapeDtypeStruct((BH, S, D), query.dtype),
        grid_spec=pltpu.PrefetchScalarGridSpec(
            num_scalar_prefetch=1,
            grid=(BH // G,),
            in_specs=[
                pl.BlockSpec((G, S, D), lambda i, seed_ref: (i, 0, 0)),
                pl.BlockSpec((G, S, D), lambda i, seed_ref: (i, 0, 0)),
                pl.BlockSpec((G, S, D), lambda i, seed_ref: (i, 0, 0)),
            ],
            out_specs=pl.BlockSpec((G, S, D), lambda i, seed_ref: (i, 0, 0)),
        ),
        compiler_params=pltpu.CompilerParams(
            dimension_semantics=("parallel",),      # disjoint output blocks -> megacore OK
            vmem_limit_bytes=64 * 1024 * 1024,      # headroom for the (G,S,S) temporaries
        ),
    )(seed, q, k, v)

    return out.reshape(B, H, S, D)


if __name__ == "__main__":
    # Shapes of the PyTorch module's inputs: (1, 3, 256, 256).
    B, H, S, D = 1, 3, 256, 256
    rng = jax.random.PRNGKey(0)
    kq, kk, kv = jax.random.split(rng, 3)
    query = jax.random.normal(kq, (B, H, S, D), dtype=jnp.float32)
    key = jax.random.normal(kk, (B, H, S, D), dtype=jnp.float32)
    value = jax.random.normal(kv, (B, H, S, D), dtype=jnp.float32)
    seed = jnp.array([1234], dtype=jnp.int32)

    # Correctness check of the attention mechanics with dropout disabled and a mild
    # scale (1/sqrt(D)); the module's 1/0.02 scale makes softmax a near-argmax, which
    # amplifies benign matmul rounding differences and would make a tight comparison flaky.
    chk_scale = 1.0 / float(D) ** 0.5
    out_chk = attention_dropout(query, key, value, seed, drop_p=0.0, scale=chk_scale)
    jax.block_until_ready(out_chk)
    s_ref = jnp.einsum("bhqd,bhkd->bhqk", query, key) * chk_scale
    ref = jnp.einsum("bhqk,bhkd->bhqd", jax.nn.softmax(s_ref, axis=-1), value)
    assert jnp.allclose(out_chk, ref, atol=2e-2, rtol=2e-2), float(
        jnp.max(jnp.abs(out_chk - ref))
    )

    # Actual module semantics: scale 1/0.02, dropout p=0.1 (training mode).
    out = attention_dropout(query, key, value, seed)
    out2 = attention_dropout(query, key, value, seed)
    out_nodrop = attention_dropout(query, key, value, seed, drop_p=0.0)
    jax.block_until_ready(out)

    assert out.shape == (B, H, S, D)
    assert out.dtype == jnp.float32
    assert bool(jnp.all(jnp.isfinite(out)))
    assert bool(jnp.all(out == out2))                          # deterministic given seed
    assert bool(jnp.any(jnp.abs(out - out_nodrop) > 1e-3))     # dropout is actually applied
    print("KERNEL_OK")
</pallas_src>

<mosaic_0001>
module attributes {stable_mosaic.version = 11 : i64} {
  func.func @kernel(%arg0: i32, %arg1: memref<1xi32, #tpu.memory_space<smem>>, %arg2: memref<3x256x256xf32, #tpu.memory_space<vmem>>, %arg3: memref<3x256x256xf32, #tpu.memory_space<vmem>>, %arg4: memref<3x256x256xf32, #tpu.memory_space<vmem>>, %arg5: memref<3x256x256xf32, #tpu.memory_space<vmem>>) attributes {dimension_semantics = [#tpu.dimension_semantics<parallel>], iteration_bounds = array<i64: 1>, scalar_prefetch = 1 : i64, scratch_operands = 0 : i64, tpu.core_type = #tpu.core_type<tc>, window_params = [{transform_indices = @transform_0, window_bounds = array<i64: 3, 256, 256>}, {transform_indices = @transform_1, window_bounds = array<i64: 3, 256, 256>}, {transform_indices = @transform_2, window_bounds = array<i64: 3, 256, 256>}, {transform_indices = @transform_3, window_bounds = array<i64: 3, 256, 256>}]} {
    %c0 = arith.constant 0 : index
    %c0_0 = arith.constant 0 : index
    %c0_1 = arith.constant 0 : index
    %0 = vector.load %arg2[%c0, %c0_0, %c0_1] : memref<3x256x256xf32, #tpu.memory_space<vmem>>, vector<3x256x256xf32>
    %cst = arith.constant 6.250000e-02 : f32
    %1 = vector.broadcast %cst : f32 to vector<3x256x256xf32>
    %2 = arith.mulf %0, %1 : vector<3x256x256xf32>
    %c0_2 = arith.constant 0 : index
    %c0_3 = arith.constant 0 : index
    %c0_4 = arith.constant 0 : index
    %3 = vector.load %arg3[%c0_2, %c0_3, %c0_4] : memref<3x256x256xf32, #tpu.memory_space<vmem>>, vector<3x256x256xf32>
    %c0_5 = arith.constant 0 : index
    %c0_6 = arith.constant 0 : index
    %c0_7 = arith.constant 0 : index
    %4 = vector.load %arg4[%c0_5, %c0_6, %c0_7] : memref<3x256x256xf32, #tpu.memory_space<vmem>>, vector<3x256x256xf32>
    "tpu.trace_start"() <{level = 10 : i32, message = "gqd,gkd->gqk"}> : () -> ()
    %cst_8 = arith.constant dense<0.000000e+00> : vector<3x256x256xf32>
    %5 = tpu.matmul %2, %3, %cst_8 {dimension_numbers = #tpu.dot_dimension_numbers<[2], [2], [1], [1], [0, 0, 0, 1, 1, 1], [0], [0]>} : vector<3x256x256xf32>, vector<3x256x256xf32>, vector<3x256x256xf32> -> vector<3x256x256xf32>
    "tpu.trace_stop"() : () -> ()
    %cst_9 = arith.constant dense<0xFF800000> : vector<3x256xf32>
    %6 = vector.multi_reduction <maximumf>, %5, %cst_9 [2] : vector<3x256x256xf32> to vector<3x256xf32>
    %7 = vector.shape_cast %6 : vector<3x256xf32> to vector<3x256x1xf32>
    %8 = vector.broadcast %7 : vector<3x256x1xf32> to vector<3x256x256xf32>
    %9 = arith.subf %5, %8 : vector<3x256x256xf32>
    %10 = math.exp %9 : vector<3x256x256xf32>
    %cst_10 = arith.constant dense<0.000000e+00> : vector<3x256xf32>
    %11 = vector.multi_reduction <add>, %10, %cst_10 [2] : vector<3x256x256xf32> to vector<3x256xf32>
    %12 = vector.shape_cast %11 : vector<3x256xf32> to vector<3x256x1xf32>
    %cst_11 = arith.constant 1.000000e+00 : f32
    %13 = vector.broadcast %cst_11 : f32 to vector<3x256x1xf32>
    %14 = arith.divf %13, %12 : vector<3x256x1xf32>
    %15 = vector.broadcast %14 : vector<3x256x1xf32> to vector<3x256x256xf32>
    %16 = arith.mulf %10, %15 : vector<3x256x256xf32>
    "tpu.trace_start"() <{level = 10 : i32, message = "gqk,gkd->gqd"}> : () -> ()
    %cst_12 = arith.constant dense<0.000000e+00> : vector<3x256x256xf32>
    %17 = tpu.matmul %16, %4, %cst_12 {dimension_numbers = #tpu.dot_dimension_numbers<[2], [1], [1], [2], [0, 0, 0, 1, 1, 2], [0], [0]>} : vector<3x256x256xf32>, vector<3x256x256xf32>, vector<3x256x256xf32> -> vector<3x256x256xf32>
    "tpu.trace_stop"() : () -> ()
    %c0_13 = arith.constant 0 : index
    %c0_14 = arith.constant 0 : index
    %c0_15 = arith.constant 0 : index
    %18 = vector.load %arg5[%c0_13, %c0_14, %c0_15] : memref<3x256x256xf32, #tpu.memory_space<vmem>>, vector<3x256x256xf32>
    tpu.vector_store %arg5[%c0_13, %c0_14, %c0_15], %17 {strides = array<i32>} : memref<3x256x256xf32, #tpu.memory_space<vmem>>, vector<3x256x256xf32>,
    return
  }
  func.func @transform_0(%arg0: i32, %arg1: memref<1xi32, #tpu.memory_space<smem>>) -> (i32, i32, i32) {
    %c0_i32 = arith.constant 0 : i32
    %c0_i32_0 = arith.constant 0 : i32
    %c0_i32_1 = arith.constant 0 : i32
    return %arg0, %c0_i32, %c0_i32_0 : i32, i32, i32
  }
  func.func @transform_1(%arg0: i32, %arg1: memref<1xi32, #tpu.memory_space<smem>>) -> (i32, i32, i32) {
    %c0_i32 = arith.constant 0 : i32
    %c0_i32_0 = arith.constant 0 : i32
    %c0_i32_1 = arith.constant 0 : i32
    return %arg0, %c0_i32, %c0_i32_0 : i32, i32, i32
  }
  func.func @transform_2(%arg0: i32, %arg1: memref<1xi32, #tpu.memory_space<smem>>) -> (i32, i32, i32) {
    %c0_i32 = arith.constant 0 : i32
    %c0_i32_0 = arith.constant 0 : i32
    %c0_i32_1 = arith.constant 0 : i32
    return %arg0, %c0_i32, %c0_i32_0 : i32, i32, i32
  }
  func.func @transform_3(%arg0: i32, %arg1: memref<1xi32, #tpu.memory_space<smem>>) -> (i32, i32, i32) {
    %c0_i32 = arith.constant 0 : i32
    %c0_i32_0 = arith.constant 0 : i32
    %c0_i32_1 = arith.constant 0 : i32
    return %arg0, %c0_i32, %c0_i32_0 : i32, i32, i32
  }
}

</mosaic_0001>

<llo_original>
// kernel: attention_dropout.1
$region0: #{attention_dropout.1}
  #allocation0 [shape = 'u32[]', space=smem, size = 0x4, offset = 0x4, fixed_abs, tag = 'smem constant byte address 0x4 - core index']
  #allocation1 [shape = 'u32[144,128]{1,0:T(1,128)}', space=vmem, size = 0x12000, scoped, tag = 'internal scratch']
  #allocation2 [shape = 's32[1]{0}', space=sflag, size = 0x4, scoped, tag = 'scoped memory for attention_dropout.1']
  #allocation3 [shape = 's32[1]{0:T(128)S(6)}', space=smem, size = 0x200, scoped, tag = 'prefetched SMEM operand 0']
  %s0 = inlined_call_operand.<no memory space> [shape: s32[1], index: 0, kind: input, shape index: {}]
  %s1 = inlined_call_operand.hbm [shape: f32[3,256,256], index: 1, kind: input, shape index: {}]
  %s2 = inlined_call_operand.hbm [shape: f32[3,256,256], index: 2, kind: input, shape index: {}]
  %s3 = inlined_call_operand.hbm [shape: f32[3,256,256], index: 3, kind: input, shape index: {}]
  %s4 = inlined_call_operand.hbm [shape: f32[3,256,256], index: 4, kind: output, shape index: {}]
  %s5 = sld [smem:[#allocation0]]
  $region34: #{attention_dropout.1} parent=0
    _
  %s7 = ssub.s32 1, %s5
  %s8 = scalar_select 0, %s7, %s5
  %9 = sst [smem:[#allocation3]] %s0
  $region1: #{attention_dropout.1} parent=0
    #allocation4 [shape = 'u8[786432]{0}', space=vmem, size = 0xc0000, scoped, tag = 'input window, operand 1, single buffered']
    #allocation5 [shape = 's32[1]{0}', space=sflag, size = 0x4, scoped, tag = 'scoped memory for attention_dropout.1']
    #allocation6 [shape = 's32[1]{0}', space=sflag, size = 0x4, scoped, tag = 'scoped memory for attention_dropout.1']
    #allocation7 [shape = 'u8[786432]{0}', space=vmem, size = 0xc0000, scoped, tag = 'input window, operand 2, single buffered']
    #allocation8 [shape = 's32[1]{0}', space=sflag, size = 0x4, scoped, tag = 'scoped memory for attention_dropout.1']
    #allocation9 [shape = 'u8[786432]{0}', space=vmem, size = 0xc0000, scoped, tag = 'input window, operand 3, single buffered']
    #allocation10 [shape = 'u8[786432]{0}', space=vmem, size = 0xc0000, scoped, tag = 'output window, operand 0, single buffered']
    %10 = vsyncpa [#allocation5], 0
    %11 = vsyncpa [#allocation8], 0
    %12 = vsyncpa [#allocation6], 0
    // Predicated region
    $region2: #{attention_dropout.1} parent=1 // pred_check
      _
    $region3: #{attention_dropout.1} parent=1 // pred_check_branch
      %14 = sbr.rel (0) target = $region5
    $region4: #{attention_dropout.1} parent=1 // pred_region
      %s16 = ssub.s32 24576, 24576
      %17 = vsyncadd [#allocation5], %s16
      %s18 = sshll.u32 [#allocation4], 4
      %s19 = int_to_ptr.vmem [resolvable:$true] %s18
      %24 = dma.hbm_to_vmem [thread:$0]  %s1, 24576, %s19, [#allocation5], 256, 256, 16
    $region5: #{attention_dropout.1} parent=1 // pred_fallthru
      _
    // Predicated region
    $region6: #{attention_dropout.1} parent=1 // pred_check
      _
    $region7: #{attention_dropout.1} parent=1 // pred_check_branch
      %26 = sbr.rel (0) target = $region9
    $region8: #{attention_dropout.1} parent=1 // pred_region
      %s28 = ssub.s32 24576, 24576
      %29 = vsyncadd [#allocation8], %s28
      %s30 = sshll.u32 [#allocation7], 4
      %s31 = int_to_ptr.vmem [resolvable:$true] %s30
      %36 = dma.hbm_to_vmem [thread:$0]  %s2, 24576, %s31, [#allocation8], 256, 256, 16
    $region9: #{attention_dropout.1} parent=1 // pred_fallthru
      _
    // Predicated region
    $region10: #{attention_dropout.1} parent=1 // pred_check
      _
    $region11: #{attention_dropout.1} parent=1 // pred_check_branch
      %38 = sbr.rel (0) target = $region13
    $region12: #{attention_dropout.1} parent=1 // pred_region
      %s40 = ssub.s32 24576, 24576
      %41 = vsyncadd [#allocation8], %s40
      %s42 = sshll.u32 [#allocation9], 4
      %s43 = int_to_ptr.vmem [resolvable:$true] %s42
      %48 = dma.hbm_to_vmem [thread:$0]  %s3, 24576, %s43, [#allocation8], 256, 256, 16
    $region13: #{attention_dropout.1} parent=1 // pred_fallthru
      _
    // Predicated region
    $region14: #{attention_dropout.1} parent=1 // pred_check
      _
    $region15: #{attention_dropout.1} parent=1 // pred_check_branch
      %50 = sbr.rel (0) target = $region17
    $region16: #{attention_dropout.1} parent=1 // pred_region
      %51 = dma.done [#allocation5], 24576
    $region17: #{attention_dropout.1} parent=1 // pred_fallthru
      _
    // Predicated region
    $region18: #{attention_dropout.1} parent=1 // pred_check
      _
    $region19: #{attention_dropout.1} parent=1 // pred_check_branch
      %53 = sbr.rel (0) target = $region21
    $region20: #{attention_dropout.1} parent=1 // pred_region
      %54 = dma.done [#allocation8], 24576
    $region21: #{attention_dropout.1} parent=1 // pred_fallthru
      _
    // Predicated region
    $region22: #{attention_dropout.1} parent=1 // pred_check
      _
    $region23: #{attention_dropout.1} parent=1 // pred_check_branch
      %56 = sbr.rel (0) target = $region25
    $region24: #{attention_dropout.1} parent=1 // pred_region
      %57 = dma.done [#allocation8], 24576
    $region25: #{attention_dropout.1} parent=1 // pred_fallthru
      _
    %v58 = vld [vmem:[#allocation4] sm:$0xff]
    %v59 = vld [vmem:[#allocation4 + $0x8] sm:$0xff]
    %v60 = vld [vmem:[#allocation4 + $0x10] sm:$0xff]
    %v61 = vld [vmem:[#allocation4 + $0x18] sm:$0xff]
    %v62 = vld [vmem:[#allocation4 + $0x20] sm:$0xff]
    %v63 = vld [vmem:[#allocation4 + $0x28] sm:$0xff]
    %v64 = vld [vmem:[#allocation4 + $0x30] sm:$0xff]
    %v65 = vld [vmem:[#allocation4 + $0x38] sm:$0xff]
    %v66 = vld [vmem:[#allocation4 + $0x40] sm:$0xff]
    %v67 = vld [vmem:[#allocation4 + $0x48] sm:$0xff]
    %v68 = vld [vmem:[#allocation4 + $0x50] sm:$0xff]
    %v69 = vld [vmem:[#allocation4 + $0x58] sm:$0xff]
    %v70 = vld [vmem:[#allocation4 + $0x60] sm:$0xff]
    %v71 = vld [vmem:[#allocation4 + $0x68] sm:$0xff]
    %v72 = vld [vmem:[#allocation4 + $0x70] sm:$0xff]
    %v73 = vld [vmem:[#allocation4 + $0x78] sm:$0xff]
    %v74 = vld [vmem:[#allocation4 + $0x80] sm:$0xff]
    %v75 = vld [vmem:[#allocation4 + $0x88] sm:$0xff]
    %v76 = vld [vmem:[#allocation4 + $0x90] sm:$0xff]
    %v77 = vld [vmem:[#allocation4 + $0x98] sm:$0xff]
    %v78 = vld [vmem:[#allocation4 + $0xa0] sm:$0xff]
    %v79 = vld [vmem:[#allocation4 + $0xa8] sm:$0xff]
    %v80 = vld [vmem:[#allocation4 + $0xb0] sm:$0xff]
    %v81 = vld [vmem:[#allocation4 + $0xb8] sm:$0xff]
    %v82 = vld [vmem:[#allocation4 + $0xc0] sm:$0xff]
    %v83 = vld [vmem:[#allocation4 + $0xc8] sm:$0xff]
    %v84 = vld [vmem:[#allocation4 + $0xd0] sm:$0xff]
    %v85 = vld [vmem:[#allocation4 + $0xd8] sm:$0xff]
    %v86 = vld [vmem:[#allocation4 + $0xe0] sm:$0xff]
    %v87 = vld [vmem:[#allocation4 + $0xe8] sm:$0xff]
    %v88 = vld [vmem:[#allocation4 + $0xf0] sm:$0xff]
    %v89 = vld [vmem:[#allocation4 + $0xf8] sm:$0xff]
    %v90 = vld [vmem:[#allocation4 + $0x100] sm:$0xff]
    %v91 = vld [vmem:[#allocation4 + $0x108] sm:$0xff]
    %v92 = vld [vmem:[#allocation4 + $0x110] sm:$0xff]
    %v93 = vld [vmem:[#allocation4 + $0x118] sm:$0xff]
    %v94 = vld [vmem:[#allocation4 + $0x120] sm:$0xff]
    %v95 = vld [vmem:[#allocation4 + $0x128] sm:$0xff]
    %v96 = vld [vmem:[#allocation4 + $0x130] sm:$0xff]
    %v97 = vld [vmem:[#allocation4 + $0x138] sm:$0xff]
    %v98 = vld [vmem:[#allocation4 + $0x140] sm:$0xff]
    %v99 = vld [vmem:[#allocation4 + $0x148] sm:$0xff]
    %v100 = vld [vmem:[#allocation4 + $0x150] sm:$0xff]
    %v101 = vld [vmem:[#allocation4 + $0x158] sm:$0xff]
    %v102 = vld [vmem:[#allocation4 + $0x160] sm:$0xff]
    %v103 = vld [vmem:[#allocation4 + $0x168] sm:$0xff]
    %v104 = vld [vmem:[#allocation4 + $0x170] sm:$0xff]
    %v105 = vld [vmem:[#allocation4 + $0x178] sm:$0xff]
    %v106 = vld [vmem:[#allocation4 + $0x180] sm:$0xff]
    %v107 = vld [vmem:[#allocation4 + $0x188] sm:$0xff]
    %v108 = vld [vmem:[#allocation4 + $0x190] sm:$0xff]
    %v109 = vld [vmem:[#allocation4 + $0x198] sm:$0xff]
    %v110 = vld [vmem:[#allocation4 + $0x1a0] sm:$0xff]
    %v111 = vld [vmem:[#allocation4 + $0x1a8] sm:$0xff]
    %v112 = vld [vmem:[#allocation4 + $0x1b0] sm:$0xff]
    %v113 = vld [vmem:[#allocation4 + $0x1b8] sm:$0xff]
    %v114 = vld [vmem:[#allocation4 + $0x1c0] sm:$0xff]
    %v115 = vld [vmem:[#allocation4 + $0x1c8] sm:$0xff]
    %v116 = vld [vmem:[#allocation4 + $0x1d0] sm:$0xff]
    %v117 = vld [vmem:[#allocation4 + $0x1d8] sm:$0xff]
    %v118 = vld [vmem:[#allocation4 + $0x1e0] sm:$0xff]
    %v119 = vld [vmem:[#allocation4 + $0x1e8] sm:$0xff]
    %v120 = vld [vmem:[#allocation4 + $0x1f0] sm:$0xff]
    %v121 = vld [vmem:[#allocation4 + $0x1f8] sm:$0xff]
    %v122 = vld [vmem:[#allocation4 + $0x200] sm:$0xff]
    %v123 = vld [vmem:[#allocation4 + $0x208] sm:$0xff]
    %v124 = vld [vmem:[#allocation4 + $0x210] sm:$0xff]
    %v125 = vld [vmem:[#allocation4 + $0x218] sm:$0xff]
    %v126 = vld [vmem:[#allocation4 + $0x220] sm:$0xff]
    %v127 = vld [vmem:[#allocation4 + $0x228] sm:$0xff]
    %v128 = vld [vmem:[#allocation4 + $0x230] sm:$0xff]
    %v129 = vld [vmem:[#allocation4 + $0x238] sm:$0xff]
    %v130 = vld [vmem:[#allocation4 + $0x240] sm:$0xff]
    %v131 = vld [vmem:[#allocation4 + $0x248] sm:$0xff]
    %v132 = vld [vmem:[#allocation4 + $0x250] sm:$0xff]
    %v133 = vld [vmem:[#allocation4 + $0x258] sm:$0xff]
    %v134 = vld [vmem:[#allocation4 + $0x260] sm:$0xff]
    %v135 = vld [vmem:[#allocation4 + $0x268] sm:$0xff]
    %v136 = vld [vmem:[#allocation4 + $0x270] sm:$0xff]
    %v137 = vld [vmem:[#allocation4 + $0x278] sm:$0xff]
    %v138 = vld [vmem:[#allocation4 + $0x280] sm:$0xff]
    %v139 = vld [vmem:[#allocation4 + $0x288] sm:$0xff]
    %v140 = vld [vmem:[#allocation4 + $0x290] sm:$0xff]
    %v141 = vld [vmem:[#allocation4 + $0x298] sm:$0xff]
    %v142 = vld [vmem:[#allocation4 + $0x2a0] sm:$0xff]
    %v143 = vld [vmem:[#allocation4 + $0x2a8] sm:$0xff]
    %v144 = vld [vmem:[#allocation4 + $0x2b0] sm:$0xff]
    %v145 = vld [vmem:[#allocation4 + $0x2b8] sm:$0xff]
    %v146 = vld [vmem:[#allocation4 + $0x2c0] sm:$0xff]
    %v147 = vld [vmem:[#allocation4 + $0x2c8] sm:$0xff]
    %v148 = vld [vmem:[#allocation4 + $0x2d0] sm:$0xff]
    %v149 = vld [vmem:[#allocation4 + $0x2d8] sm:$0xff]
    %v150 = vld [vmem:[#allocation4 + $0x2e0] sm:$0xff]
    %v151 = vld [vmem:[#allocation4 + $0x2e8] sm:$0xff]
    %v152 = vld [vmem:[#allocation4 + $0x2f0] sm:$0xff]
    %v153 = vld [vmem:[#allocation4 + $0x2f8] sm:$0xff]
    %v154 = vld [vmem:[#allocation4 + $0x300] sm:$0xff]
    %v155 = vld [vmem:[#allocation4 + $0x308] sm:$0xff]
    %v156 = vld [vmem:[#allocation4 + $0x310] sm:$0xff]
    %v157 = vld [vmem:[#allocation4 + $0x318] sm:$0xff]
    %v158 = vld [vmem:[#allocation4 + $0x320] sm:$0xff]
    %v159 = vld [vmem:[#allocation4 + $0x328] sm:$0xff]
    %v160 = vld [vmem:[#allocation4 + $0x330] sm:$0xff]
    %v161 = vld [vmem:[#allocation4 + $0x338] sm:$0xff]
    %v162 = vld [vmem:[#allocation4 + $0x340] sm:$0xff]
    %v163 = vld [vmem:[#allocation4 + $0x348] sm:$0xff]
    %v164 = vld [vmem:[#allocation4 + $0x350] sm:$0xff]
    %v165 = vld [vmem:[#allocation4 + $0x358] sm:$0xff]
    %v166 = vld [vmem:[#allocation4 + $0x360] sm:$0xff]
    %v167 = vld [vmem:[#allocation4 + $0x368] sm:$0xff]
    %v168 = vld [vmem:[#allocation4 + $0x370] sm:$0xff]
    %v169 = vld [vmem:[#allocation4 + $0x378] sm:$0xff]
    %v170 = vld [vmem:[#allocation4 + $0x380] sm:$0xff]
    %v171 = vld [vmem:[#allocation4 + $0x388] sm:$0xff]
    %v172 = vld [vmem:[#allocation4 + $0x390] sm:$0xff]
    %v173 = vld [vmem:[#allocation4 + $0x398] sm:$0xff]
    %v174 = vld [vmem:[#allocation4 + $0x3a0] sm:$0xff]
    %v175 = vld [vmem:[#allocation4 + $0x3a8] sm:$0xff]
    %v176 = vld [vmem:[#allocation4 + $0x3b0] sm:$0xff]
    %v177 = vld [vmem:[#allocation4 + $0x3b8] sm:$0xff]
    %v178 = vld [vmem:[#allocation4 + $0x3c0] sm:$0xff]
    %v179 = vld [vmem:[#allocation4 + $0x3c8] sm:$0xff]
    %v180 = vld [vmem:[#allocation4 + $0x3d0] sm:$0xff]
    %v181 = vld [vmem:[#allocation4 + $0x3d8] sm:$0xff]
    %v182 = vld [vmem:[#allocation4 + $0x3e0] sm:$0xff]
    %v183 = vld [vmem:[#allocation4 + $0x3e8] sm:$0xff]
    %v184 = vld [vmem:[#allocation4 + $0x3f0] sm:$0xff]
    %v185 = vld [vmem:[#allocation4 + $0x3f8] sm:$0xff]
    %v186 = vld [vmem:[#allocation4 + $0x400] sm:$0xff]
    %v187 = vld [vmem:[#allocation4 + $0x408] sm:$0xff]
    %v188 = vld [vmem:[#allocation4 + $0x410] sm:$0xff]
    %v189 = vld [vmem:[#allocation4 + $0x418] sm:$0xff]
    %v190 = vld [vmem:[#allocation4 + $0x420] sm:$0xff]
    %v191 = vld [vmem:[#allocation4 + $0x428] sm:$0xff]
    %v192 = vld [vmem:[#allocation4 + $0x430] sm:$0xff]
    %v193 = vld [vmem:[#allocation4 + $0x438] sm:$0xff]
    %v194 = vld [vmem:[#allocation4 + $0x440] sm:$0xff]
    %v195 = vld [vmem:[#allocation4 + $0x448] sm:$0xff]
    %v196 = vld [vmem:[#allocation4 + $0x450] sm:$0xff]
    %v197 = vld [vmem:[#allocation4 + $0x458] sm:$0xff]
    %v198 = vld [vmem:[#allocation4 + $0x460] sm:$0xff]
    %v199 = vld [vmem:[#allocation4 + $0x468] sm:$0xff]
    %v200 = vld [vmem:[#allocation4 + $0x470] sm:$0xff]
    %v201 = vld [vmem:[#allocation4 + $0x478] sm:$0xff]
    %v202 = vld [vmem:[#allocation4 + $0x480] sm:$0xff]
    %v203 = vld [vmem:[#allocation4 + $0x488] sm:$0xff]
    %v204 = vld [vmem:[#allocation4 + $0x490] sm:$0xff]
    %v205 = vld [vmem:[#allocation4 + $0x498] sm:$0xff]
    %v206 = vld [vmem:[#allocation4 + $0x4a0] sm:$0xff]
    %v207 = vld [vmem:[#allocation4 + $0x4a8] sm:$0xff]
    %v208 = vld [vmem:[#allocation4 + $0x4b0] sm:$0xff]
    %v209 = vld [vmem:[#allocation4 + $0x4b8] sm:$0xff]
    %v210 = vld [vmem:[#allocation4 + $0x4c0] sm:$0xff]
    %v211 = vld [vmem:[#allocation4 + $0x4c8] sm:$0xff]
    %v212 = vld [vmem:[#allocation4 + $0x4d0] sm:$0xff]
    %v213 = vld [vmem:[#allocation4 + $0x4d8] sm:$0xff]
    %v214 = vld [vmem:[#allocation4 + $0x4e0] sm:$0xff]
    %v215 = vld [vmem:[#allocation4 + $0x4e8] sm:$0xff]
    %v216 = vld [vmem:[#allocation4 + $0x4f0] sm:$0xff]
    %v217 = vld [vmem:[#allocation4 + $0x4f8] sm:$0xff]
    %v218 = vld [vmem:[#allocation4 + $0x500] sm:$0xff]
    %v219 = vld [vmem:[#allocation4 + $0x508] sm:$0xff]
    %v220 = vld [vmem:[#allocation4 + $0x510] sm:$0xff]
    %v221 = vld [vmem:[#allocation4 + $0x518] sm:$0xff]
    %v222 = vld [vmem:[#allocation4 + $0x520] sm:$0xff]
    %v223 = vld [vmem:[#allocation4 + $0x528] sm:$0xff]
    %v224 = vld [vmem:[#allocation4 + $0x530] sm:$0xff]
    %v225 = vld [vmem:[#allocation4 + $0x538] sm:$0xff]
    %v226 = vld [vmem:[#allocation4 + $0x540] sm:$0xff]
    %v227 = vld [vmem:[#allocation4 + $0x548] sm:$0xff]
    %v228 = vld [vmem:[#allocation4 + $0x550] sm:$0xff]
    %v229 = vld [vmem:[#allocation4 + $0x558] sm:$0xff]
    %v230 = vld [vmem:[#allocation4 + $0x560] sm:$0xff]
    %v231 = vld [vmem:[#allocation4 + $0x568] sm:$0xff]
    %v232 = vld [vmem:[#allocation4 + $0x570] sm:$0xff]
    %v233 = vld [vmem:[#allocation4 + $0x578] sm:$0xff]
    %v234 = vld [vmem:[#allocation4 + $0x580] sm:$0xff]
    %v235 = vld [vmem:[#allocation4 + $0x588] sm:$0xff]
    %v236 = vld [vmem:[#allocation4 + $0x590] sm:$0xff]
    %v237 = vld [vmem:[#allocation4 + $0x598] sm:$0xff]
    %v238 = vld [vmem:[#allocation4 + $0x5a0] sm:$0xff]
    %v239 = vld [vmem:[#allocation4 + $0x5a8] sm:$0xff]
    %v240 = vld [vmem:[#allocation4 + $0x5b0] sm:$0xff]
    %v241 = vld [vmem:[#allocation4 + $0x5b8] sm:$0xff]
    %v242 = vld [vmem:[#allocation4 + $0x5c0] sm:$0xff]
    %v243 = vld [vmem:[#allocation4 + $0x5c8] sm:$0xff]
    %v244 = vld [vmem:[#allocation4 + $0x5d0] sm:$0xff]
    %v245 = vld [vmem:[#allocation4 + $0x5d8] sm:$0xff]
    %v246 = vld [vmem:[#allocation4 + $0x5e0] sm:$0xff]
    %v247 = vld [vmem:[#allocation4 + $0x5e8] sm:$0xff]
    %v248 = vld [vmem:[#allocation4 + $0x5f0] sm:$0xff]
    %v249 = vld [vmem:[#allocation4 + $0x5f8] sm:$0xff]
    %v250 = vmul.f32 %v58, 0.0625
    %v251 = vmul.f32 %v59, 0.0625
    %v252 = vmul.f32 %v60, 0.0625
    %v253 = vmul.f32 %v61, 0.0625
    %v254 = vmul.f32 %v62, 0.0625
    %v255 = vmul.f32 %v63, 0.0625
    %v256 = vmul.f32 %v64, 0.0625
    %v257 = vmul.f32 %v65, 0.0625
    %v258 = vmul.f32 %v66, 0.0625
    %v259 = vmul.f32 %v67, 0.0625
    %v260 = vmul.f32 %v68, 0.0625
    %v261 = vmul.f32 %v69, 0.0625
    %v262 = vmul.f32 %v70, 0.0625
    %v263 = vmul.f32 %v71, 0.0625
    %v264 = vmul.f32 %v72, 0.0625
    %v265 = vmul.f32 %v73, 0.0625
    %v266 = vmul.f32 %v74, 0.0625
    %v267 = vmul.f32 %v75, 0.0625
    %v268 = vmul.f32 %v76, 0.0625
    %v269 = vmul.f32 %v77, 0.0625
    %v270 = vmul.f32 %v78, 0.0625
    %v271 = vmul.f32 %v79, 0.0625
    %v272 = vmul.f32 %v80, 0.0625
    %v273 = vmul.f32 %v81, 0.0625
    %v274 = vmul.f32 %v82, 0.0625
    %v275 = vmul.f32 %v83, 0.0625
    %v276 = vmul.f32 %v84, 0.0625
    %v277 = vmul.f32 %v85, 0.0625
    %v278 = vmul.f32 %v86, 0.0625
    %v279 = vmul.f32 %v87, 0.0625
    %v280 = vmul.f32 %v88, 0.0625
    %v281 = vmul.f32 %v89, 0.0625
    %v282 = vmul.f32 %v90, 0.0625
    %v283 = vmul.f32 %v91, 0.0625
    %v284 = vmul.f32 %v92, 0.0625
    %v285 = vmul.f32 %v93, 0.0625
    %v286 = vmul.f32 %v94, 0.0625
    %v287 = vmul.f32 %v95, 0.0625
    %v288 = vmul.f32 %v96, 0.0625
    %v289 = vmul.f32 %v97, 0.0625
    %v290 = vmul.f32 %v98, 0.0625
    %v291 = vmul.f32 %v99, 0.0625
    %v292 = vmul.f32 %v100, 0.0625
    %v293 = vmul.f32 %v101, 0.0625
    %v294 = vmul.f32 %v102, 0.0625
    %v295 = vmul.f32 %v103, 0.0625
    %v296 = vmul.f32 %v104, 0.0625
    %v297 = vmul.f32 %v105, 0.0625
    %v298 = vmul.f32 %v106, 0.0625
    %v299 = vmul.f32 %v107, 0.0625
    %v300 = vmul.f32 %v108, 0.0625
    %v301 = vmul.f32 %v109, 0.0625
    %v302 = vmul.f32 %v110, 0.0625
    %v303 = vmul.f32 %v111, 0.0625
    %v304 = vmul.f32 %v112, 0.0625
    %v305 = vmul.f32 %v113, 0.0625
    %v306 = vmul.f32 %v114, 0.0625
    %v307 = vmul.f32 %v115, 0.0625
    %v308 = vmul.f32 %v116, 0.0625
    %v309 = vmul.f32 %v117, 0.0625
    %v310 = vmul.f32 %v118, 0.0625
    %v311 = vmul.f32 %v119, 0.0625
    %v312 = vmul.f32 %v120, 0.0625
    %v313 = vmul.f32 %v121, 0.0625
    %v314 = vmul.f32 %v122, 0.0625
    %v315 = vmul.f32 %v123, 0.0625
    %v316 = vmul.f32 %v124, 0.0625
    %v317 = vmul.f32 %v125, 0.0625
    %v318 = vmul.f32 %v126, 0.0625
    %v319 = vmul.f32 %v127, 0.0625
    %v320 = vmul.f32 %v128, 0.0625
    %v321 = vmul.f32 %v129, 0.0625
    %v322 = vmul.f32 %v130, 0.0625
    %v323 = vmul.f32 %v131, 0.0625
    %v324 = vmul.f32 %v132, 0.0625
    %v325 = vmul.f32 %v133, 0.0625
    %v326 = vmul.f32 %v134, 0.0625
    %v327 = vmul.f32 %v135, 0.0625
    %v328 = vmul.f32 %v136, 0.0625
    %v329 = vmul.f32 %v137, 0.0625
    %v330 = vmul.f32 %v138, 0.0625
    %v331 = vmul.f32 %v139, 0.0625
    %v332 = vmul.f32 %v140, 0.0625
    %v333 = vmul.f32 %v141, 0.0625
    %v334 = vmul.f32 %v142, 0.0625
    %v335 = vmul.f32 %v143, 0.0625
    %v336 = vmul.f32 %v144, 0.0625
    %v337 = vmul.f32 %v145, 0.0625
    %v338 = vmul.f32 %v146, 0.0625
    %v339 = vmul.f32 %v147, 0.0625
    %v340 = vmul.f32 %v148, 0.0625
    %v341 = vmul.f32 %v149, 0.0625
    %v342 = vmul.f32 %v150, 0.0625
    %v343 = vmul.f32 %v151, 0.0625
    %v344 = vmul.f32 %v152, 0.0625
    %v345 = vmul.f32 %v153, 0.0625
    %v346 = vmul.f32 %v154, 0.0625
    %v347 = vmul.f32 %v155, 0.0625
    %v348 = vmul.f32 %v156, 0.0625
    %v349 = vmul.f32 %v157, 0.0625
    %v350 = vmul.f32 %v158, 0.0625
    %v351 = vmul.f32 %v159, 0.0625
    %v352 = vmul.f32 %v160, 0.0625
    %v353 = vmul.f32 %v161, 0.0625
    %v354 = vmul.f32 %v162, 0.0625
    %v355 = vmul.f32 %v163, 0.0625
    %v356 = vmul.f32 %v164, 0.0625
    %v357 = vmul.f32 %v165, 0.0625
    %v358 = vmul.f32 %v166, 0.0625
    %v359 = vmul.f32 %v167, 0.0625
    %v360 = vmul.f32 %v168, 0.0625
    %v361 = vmul.f32 %v169, 0.0625
    %v362 = vmul.f32 %v170, 0.0625
    %v363 = vmul.f32 %v171, 0.0625
    %v364 = vmul.f32 %v172, 0.0625
    %v365 = vmul.f32 %v173, 0.0625
    %v366 = vmul.f32 %v174, 0.0625
    %v367 = vmul.f32 %v175, 0.0625
    %v368 = vmul.f32 %v176, 0.0625
    %v369 = vmul.f32 %v177, 0.0625
    %v370 = vmul.f32 %v178, 0.0625
    %v371 = vmul.f32 %v179, 0.0625
    %v372 = vmul.f32 %v180, 0.0625
    %v373 = vmul.f32 %v181, 0.0625
    %v374 = vmul.f32 %v182, 0.0625
    %v375 = vmul.f32 %v183, 0.0625
    %v376 = vmul.f32 %v184, 0.0625
    %v377 = vmul.f32 %v185, 0.0625
    %v378 = vmul.f32 %v186, 0.0625
    %v379 = vmul.f32 %v187, 0.0625
    %v380 = vmul.f32 %v188, 0.0625
    %v381 = vmul.f32 %v189, 0.0625
    %v382 = vmul.f32 %v190, 0.0625
    %v383 = vmul.f32 %v191, 0.0625
    %v384 = vmul.f32 %v192, 0.0625
    %v385 = vmul.f32 %v193, 0.0625
    %v386 = vmul.f32 %v194, 0.0625
    %v387 = vmul.f32 %v195, 0.0625
    %v388 = vmul.f32 %v196, 0.0625
    %v389 = vmul.f32 %v197, 0.0625
    %v390 = vmul.f32 %v198, 0.0625
    %v391 = vmul.f32 %v199, 0.0625
    %v392 = vmul.f32 %v200, 0.0625
    %v393 = vmul.f32 %v201, 0.0625
    %v394 = vmul.f32 %v202, 0.0625
    %v395 = vmul.f32 %v203, 0.0625
    %v396 = vmul.f32 %v204, 0.0625
    %v397 = vmul.f32 %v205, 0.0625
    %v398 = vmul.f32 %v206, 0.0625
    %v399 = vmul.f32 %v207, 0.0625
    %v400 = vmul.f32 %v208, 0.0625
    %v401 = vmul.f32 %v209, 0.0625
    %v402 = vmul.f32 %v210, 0.0625
    %v403 = vmul.f32 %v211, 0.0625
    %v404 = vmul.f32 %v212, 0.0625
    %v405 = vmul.f32 %v213, 0.0625
    %v406 = vmul.f32 %v214, 0.0625
    %v407 = vmul.f32 %v215, 0.0625
    %v408 = vmul.f32 %v216, 0.0625
    %v409 = vmul.f32 %v217, 0.0625
    %v410 = vmul.f32 %v218, 0.0625
    %v411 = vmul.f32 %v219, 0.0625
    %v412 = vmul.f32 %v220, 0.0625
    %v413 = vmul.f32 %v221, 0.0625
    %v414 = vmul.f32 %v222, 0.0625
    %v415 = vmul.f32 %v223, 0.0625
    %v416 = vmul.f32 %v224, 0.0625
    %v417 = vmul.f32 %v225, 0.0625
    %v418 = vmul.f32 %v226, 0.0625
    %v419 = vmul.f32 %v227, 0.0625
    %v420 = vmul.f32 %v228, 0.0625
    %v421 = vmul.f32 %v229, 0.0625
    %v422 = vmul.f32 %v230, 0.0625
    %v423 = vmul.f32 %v231, 0.0625
    %v424 = vmul.f32 %v232, 0.0625
    %v425 = vmul.f32 %v233, 0.0625
    %v426 = vmul.f32 %v234, 0.0625
    %v427 = vmul.f32 %v235, 0.0625
    %v428 = vmul.f32 %v236, 0.0625
    %v429 = vmul.f32 %v237, 0.0625
    %v430 = vmul.f32 %v238, 0.0625
    %v431 = vmul.f32 %v239, 0.0625
    %v432 = vmul.f32 %v240, 0.0625
    %v433 = vmul.f32 %v241, 0.0625
    %v434 = vmul.f32 %v242, 0.0625
    %v435 = vmul.f32 %v243, 0.0625
    %v436 = vmul.f32 %v244, 0.0625
    %v437 = vmul.f32 %v245, 0.0625
    %v438 = vmul.f32 %v246, 0.0625
    %v439 = vmul.f32 %v247, 0.0625
    %v440 = vmul.f32 %v248, 0.0625
    %v441 = vmul.f32 %v249, 0.0625
    %v442 = vld [vmem:[#allocation7] sm:$0xff]
    %v443 = vld [vmem:[#allocation7 + $0x8] sm:$0xff]
    %v444 = vld [vmem:[#allocation7 + $0x10] sm:$0xff]
    %v445 = vld [vmem:[#allocation7 + $0x18] sm:$0xff]
    %v446 = vld [vmem:[#allocation7 + $0x20] sm:$0xff]
    %v447 = vld [vmem:[#allocation7 + $0x28] sm:$0xff]
    %v448 = vld [vmem:[#allocation7 + $0x30] sm:$0xff]
    %v449 = vld [vmem:[#allocation7 + $0x38] sm:$0xff]
    %v450 = vld [vmem:[#allocation7 + $0x40] sm:$0xff]
    %v451 = vld [vmem:[#allocation7 + $0x48] sm:$0xff]
    %v452 = vld [vmem:[#allocation7 + $0x50] sm:$0xff]
    %v453 = vld [vmem:[#allocation7 + $0x58] sm:$0xff]
    %v454 = vld [vmem:[#allocation7 + $0x60] sm:$0xff]
    %v455 = vld [vmem:[#allocation7 + $0x68] sm:$0xff]
    %v456 = vld [vmem:[#allocation7 + $0x70] sm:$0xff]
    %v457 = vld [vmem:[#allocation7 + $0x78] sm:$0xff]
    %v458 = vld [vmem:[#allocation7 + $0x80] sm:$0xff]
    %v459 = vld [vmem:[#allocation7 + $0x88] sm:$0xff]
    %v460 = vld [vmem:[#allocation7 + $0x90] sm:$0xff]
    %v461 = vld [vmem:[#allocation7 + $0x98] sm:$0xff]
    %v462 = vld [vmem:[#allocation7 + $0xa0] sm:$0xff]
    %v463 = vld [vmem:[#allocation7 + $0xa8] sm:$0xff]
    %v464 = vld [vmem:[#allocation7 + $0xb0] sm:$0xff]
    %v465 = vld [vmem:[#allocation7 + $0xb8] sm:$0xff]
    %v466 = vld [vmem:[#allocation7 + $0xc0] sm:$0xff]
    %v467 = vld [vmem:[#allocation7 + $0xc8] sm:$0xff]
    %v468 = vld [vmem:[#allocation7 + $0xd0] sm:$0xff]
    %v469 = vld [vmem:[#allocation7 + $0xd8] sm:$0xff]
    %v470 = vld [vmem:[#allocation7 + $0xe0] sm:$0xff]
    %v471 = vld [vmem:[#allocation7 + $0xe8] sm:$0xff]
    %v472 = vld [vmem:[#allocation7 + $0xf0] sm:$0xff]
    %v473 = vld [vmem:[#allocation7 + $0xf8] sm:$0xff]
    %v474 = vld [vmem:[#allocation7 + $0x100] sm:$0xff]
    %v475 = vld [vmem:[#allocation7 + $0x108] sm:$0xff]
    %v476 = vld [vmem:[#allocation7 + $0x110] sm:$0xff]
    %v477 = vld [vmem:[#allocation7 + $0x118] sm:$0xff]
    %v478 = vld [vmem:[#allocation7 + $0x120] sm:$0xff]
    %v479 = vld [vmem:[#allocation7 + $0x128] sm:$0xff]
    %v480 = vld [vmem:[#allocation7 + $0x130] sm:$0xff]
    %v481 = vld [vmem:[#allocation7 + $0x138] sm:$0xff]
    %v482 = vld [vmem:[#allocation7 + $0x140] sm:$0xff]
    %v483 = vld [vmem:[#allocation7 + $0x148] sm:$0xff]
    %v484 = vld [vmem:[#allocation7 + $0x150] sm:$0xff]
    %v485 = vld [vmem:[#allocation7 + $0x158] sm:$0xff]
    %v486 = vld [vmem:[#allocation7 + $0x160] sm:$0xff]
    %v487 = vld [vmem:[#allocation7 + $0x168] sm:$0xff]
    %v488 = vld [vmem:[#allocation7 + $0x170] sm:$0xff]
    %v489 = vld [vmem:[#allocation7 + $0x178] sm:$0xff]
    %v490 = vld [vmem:[#allocation7 + $0x180] sm:$0xff]
    %v491 = vld [vmem:[#allocation7 + $0x188] sm:$0xff]
    %v492 = vld [vmem:[#allocation7 + $0x190] sm:$0xff]
    %v493 = vld [vmem:[#allocation7 + $0x198] sm:$0xff]
    %v494 = vld [vmem:[#allocation7 + $0x1a0] sm:$0xff]
    %v495 = vld [vmem:[#allocation7 + $0x1a8] sm:$0xff]
    %v496 = vld [vmem:[#allocation7 + $0x1b0] sm:$0xff]
    %v497 = vld [vmem:[#allocation7 + $0x1b8] sm:$0xff]
    %v498 = vld [vmem:[#allocation7 + $0x1c0] sm:$0xff]
    %v499 = vld [vmem:[#allocation7 + $0x1c8] sm:$0xff]
    %v500 = vld [vmem:[#allocation7 + $0x1d0] sm:$0xff]
    %v501 = vld [vmem:[#allocation7 + $0x1d8] sm:$0xff]
    %v502 = vld [vmem:[#allocation7 + $0x1e0] sm:$0xff]
    %v503 = vld [vmem:[#allocation7 + $0x1e8] sm:$0xff]
    %v504 = vld [vmem:[#allocation7 + $0x1f0] sm:$0xff]
    %v505 = vld [vmem:[#allocation7 + $0x1f8] sm:$0xff]
    %v506 = vld [vmem:[#allocation7 + $0x200] sm:$0xff]
    %v507 = vld [vmem:[#allocation7 + $0x208] sm:$0xff]
    %v508 = vld [vmem:[#allocation7 + $0x210] sm:$0xff]
    %v509 = vld [vmem:[#allocation7 + $0x218] sm:$0xff]
    %v510 = vld [vmem:[#allocation7 + $0x220] sm:$0xff]
    %v511 = vld [vmem:[#allocation7 + $0x228] sm:$0xff]
    %v512 = vld [vmem:[#allocation7 + $0x230] sm:$0xff]
    %v513 = vld [vmem:[#allocation7 + $0x238] sm:$0xff]
    %v514 = vld [vmem:[#allocation7 + $0x240] sm:$0xff]
    %v515 = vld [vmem:[#allocation7 + $0x248] sm:$0xff]
    %v516 = vld [vmem:[#allocation7 + $0x250] sm:$0xff]
    %v517 = vld [vmem:[#allocation7 + $0x258] sm:$0xff]
    %v518 = vld [vmem:[#allocation7 + $0x260] sm:$0xff]
    %v519 = vld [vmem:[#allocation7 + $0x268] sm:$0xff]
    %v520 = vld [vmem:[#allocation7 + $0x270] sm:$0xff]
    %v521 = vld [vmem:[#allocation7 + $0x278] sm:$0xff]
    %v522 = vld [vmem:[#allocation7 + $0x280] sm:$0xff]
    %v523 = vld [vmem:[#allocation7 + $0x288] sm:$0xff]
    %v524 = vld [vmem:[#allocation7 + $0x290] sm:$0xff]
    %v525 = vld [vmem:[#allocation7 + $0x298] sm:$0xff]
    %v526 = vld [vmem:[#allocation7 + $0x2a0] sm:$0xff]
    %v527 = vld [vmem:[#allocation7 + $0x2a8] sm:$0xff]
    %v528 = vld [vmem:[#allocation7 + $0x2b0] sm:$0xff]
    %v529 = vld [vmem:[#allocation7 + $0x2b8] sm:$0xff]
    %v530 = vld [vmem:[#allocation7 + $0x2c0] sm:$0xff]
    %v531 = vld [vmem:[#allocation7 + $0x2c8] sm:$0xff]
    %v532 = vld [vmem:[#allocation7 + $0x2d0] sm:$0xff]
    %v533 = vld [vmem:[#allocation7 + $0x2d8] sm:$0xff]
    %v534 = vld [vmem:[#allocation7 + $0x2e0] sm:$0xff]
    %v535 = vld [vmem:[#allocation7 + $0x2e8] sm:$0xff]
    %v536 = vld [vmem:[#allocation7 + $0x2f0] sm:$0xff]
    %v537 = vld [vmem:[#allocation7 + $0x2f8] sm:$0xff]
    %v538 = vld [vmem:[#allocation7 + $0x300] sm:$0xff]
    %v539 = vld [vmem:[#allocation7 + $0x308] sm:$0xff]
    %v540 = vld [vmem:[#allocation7 + $0x310] sm:$0xff]
    %v541 = vld [vmem:[#allocation7 + $0x318] sm:$0xff]
    %v542 = vld [vmem:[#allocation7 + $0x320] sm:$0xff]
    %v543 = vld [vmem:[#allocation7 + $0x328] sm:$0xff]
    %v544 = vld [vmem:[#allocation7 + $0x330] sm:$0xff]
    %v545 = vld [vmem:[#allocation7 + $0x338] sm:$0xff]
    %v546 = vld [vmem:[#allocation7 + $0x340] sm:$0xff]
    %v547 = vld [vmem:[#allocation7 + $0x348] sm:$0xff]
    %v548 = vld [vmem:[#allocation7 + $0x350] sm:$0xff]
    %v549 = vld [vmem:[#allocation7 + $0x358] sm:$0xff]
    %v550 = vld [vmem:[#allocation7 + $0x360] sm:$0xff]
    %v551 = vld [vmem:[#allocation7 + $0x368] sm:$0xff]
    %v552 = vld [vmem:[#allocation7 + $0x370] sm:$0xff]
    %v553 = vld [vmem:[#allocation7 + $0x378] sm:$0xff]
    %v554 = vld [vmem:[#allocation7 + $0x380] sm:$0xff]
    %v555 = vld [vmem:[#allocation7 + $0x388] sm:$0xff]
    %v556 = vld [vmem:[#allocation7 + $0x390] sm:$0xff]
    %v557 = vld [vmem:[#allocation7 + $0x398] sm:$0xff]
    %v558 = vld [vmem:[#allocation7 + $0x3a0] sm:$0xff]
    %v559 = vld [vmem:[#allocation7 + $0x3a8] sm:$0xff]
    %v560 = vld [vmem:[#allocation7 + $0x3b0] sm:$0xff]
    %v561 = vld [vmem:[#allocation7 + $0x3b8] sm:$0xff]
    %v562 = vld [vmem:[#allocation7 + $0x3c0] sm:$0xff]
    %v563 = vld [vmem:[#allocation7 + $0x3c8] sm:$0xff]
    %v564 = vld [vmem:[#allocation7 + $0x3d0] sm:$0xff]
    %v565 = vld [vmem:[#allocation7 + $0x3d8] sm:$0xff]
    %v566 = vld [vmem:[#allocation7 + $0x3e0] sm:$0xff]
    %v567 = vld [vmem:[#allocation7 + $0x3e8] sm:$0xff]
    %v568 = vld [vmem:[#allocation7 + $0x3f0] sm:$0xff]
    %v569 = vld [vmem:[#allocation7 + $0x3f8] sm:$0xff]
    %v570 = vld [vmem:[#allocation7 + $0x400] sm:$0xff]
    %v571 = vld [vmem:[#allocation7 + $0x408] sm:$0xff]
    %v572 = vld [vmem:[#allocation7 + $0x410] sm:$0xff]
    %v573 = vld [vmem:[#allocation7 + $0x418] sm:$0xff]
    %v574 = vld [vmem:[#allocation7 + $0x420] sm:$0xff]
    %v575 = vld [vmem:[#allocation7 + $0x428] sm:$0xff]
    %v576 = vld [vmem:[#allocation7 + $0x430] sm:$0xff]
    %v577 = vld [vmem:[#allocation7 + $0x438] sm:$0xff]
    %v578 = vld [vmem:[#allocation7 + $0x440] sm:$0xff]
    %v579 = vld [vmem:[#allocation7 + $0x448] sm:$0xff]
    %v580 = vld [vmem:[#allocation7 + $0x450] sm:$0xff]
    %v581 = vld [vmem:[#allocation7 + $0x458] sm:$0xff]
    %v582 = vld [vmem:[#allocation7 + $0x460] sm:$0xff]
    %v583 = vld [vmem:[#allocation7 + $0x468] sm:$0xff]
    %v584 = vld [vmem:[#allocation7 + $0x470] sm:$0xff]
    %v585 = vld [vmem:[#allocation7 + $0x478] sm:$0xff]
    %v586 = vld [vmem:[#allocation7 + $0x480] sm:$0xff]
    %v587 = vld [vmem:[#allocation7 + $0x488] sm:$0xff]
    %v588 = vld [vmem:[#allocation7 + $0x490] sm:$0xff]
    %v589 = vld [vmem:[#allocation7 + $0x498] sm:$0xff]
    %v590 = vld [vmem:[#allocation7 + $0x4a0] sm:$0xff]
    %v591 = vld [vmem:[#allocation7 + $0x4a8] sm:$0xff]
    %v592 = vld [vmem:[#allocation7 + $0x4b0] sm:$0xff]
    %v593 = vld [vmem:[#allocation7 + $0x4b8] sm:$0xff]
    %v594 = vld [vmem:[#allocation7 + $0x4c0] sm:$0xff]
    %v595 = vld [vmem:[#allocation7 + $0x4c8] sm:$0xff]
    %v596 = vld [vmem:[#allocation7 + $0x4d0] sm:$0xff]
    %v597 = vld [vmem:[#allocation7 + $0x4d8] sm:$0xff]
    %v598 = vld [vmem:[#allocation7 + $0x4e0] sm:$0xff]
    %v599 = vld [vmem:[#allocation7 + $0x4e8] sm:$0xff]
    %v600 = vld [vmem:[#allocation7 + $0x4f0] sm:$0xff]
    %v601 = vld [vmem:[#allocation7 + $0x4f8] sm:$0xff]
    %v602 = vld [vmem:[#allocation7 + $0x500] sm:$0xff]
    %v603 = vld [vmem:[#allocation7 + $0x508] sm:$0xff]
    %v604 = vld [vmem:[#allocation7 + $0x510] sm:$0xff]
    %v605 = vld [vmem:[#allocation7 + $0x518] sm:$0xff]
    %v606 = vld [vmem:[#allocation7 + $0x520] sm:$0xff]
    %v607 = vld [vmem:[#allocation7 + $0x528] sm:$0xff]
    %v608 = vld [vmem:[#allocation7 + $0x530] sm:$0xff]
    %v609 = vld [vmem:[#allocation7 + $0x538] sm:$0xff]
    %v610 = vld [vmem:[#allocation7 + $0x540] sm:$0xff]
    %v611 = vld [vmem:[#allocation7 + $0x548] sm:$0xff]
    %v612 = vld [vmem:[#allocation7 + $0x550] sm:$0xff]
    %v613 = vld [vmem:[#allocation7 + $0x558] sm:$0xff]
    %v614 = vld [vmem:[#allocation7 + $0x560] sm:$0xff]
    %v615 = vld [vmem:[#allocation7 + $0x568] sm:$0xff]
    %v616 = vld [vmem:[#allocation7 + $0x570] sm:$0xff]
    %v617 = vld [vmem:[#allocation7 + $0x578] sm:$0xff]
    %v618 = vld [vmem:[#allocation7 + $0x580] sm:$0xff]
    %v619 = vld [vmem:[#allocation7 + $0x588] sm:$0xff]
    %v620 = vld [vmem:[#allocation7 + $0x590] sm:$0xff]
    %v621 = vld [vmem:[#allocation7 + $0x598] sm:$0xff]
    %v622 = vld [vmem:[#allocation7 + $0x5a0] sm:$0xff]
    %v623 = vld [vmem:[#allocation7 + $0x5a8] sm:$0xff]
    %v624 = vld [vmem:[#allocation7 + $0x5b0] sm:$0xff]
    %v625 = vld [vmem:[#allocation7 + $0x5b8] sm:$0xff]
    %v626 = vld [vmem:[#allocation7 + $0x5c0] sm:$0xff]
    %v627 = vld [vmem:[#allocation7 + $0x5c8] sm:$0xff]
    %v628 = vld [vmem:[#allocation7 + $0x5d0] sm:$0xff]
    %v629 = vld [vmem:[#allocation7 + $0x5d8] sm:$0xff]
    %v630 = vld [vmem:[#allocation7 + $0x5e0] sm:$0xff]
    %v631 = vld [vmem:[#allocation7 + $0x5e8] sm:$0xff]
    %v632 = vld [vmem:[#allocation7 + $0x5f0] sm:$0xff]
    %v633 = vld [vmem:[#allocation7 + $0x5f8] sm:$0xff]
    %v634 = vld [vmem:[#allocation9] sm:$0xff]
    %v635 = vld [vmem:[#allocation9 + $0x8] sm:$0xff]
    %v636 = vld [vmem:[#allocation9 + $0x10] sm:$0xff]
    %v637 = vld [vmem:[#allocation9 + $0x18] sm:$0xff]
    %v638 = vld [vmem:[#allocation9 + $0x20] sm:$0xff]
    %v639 = vld [vmem:[#allocation9 + $0x28] sm:$0xff]
    %v640 = vld [vmem:[#allocation9 + $0x30] sm:$0xff]
    %v641 = vld [vmem:[#allocation9 + $0x38] sm:$0xff]
    %v642 = vld [vmem:[#allocation9 + $0x40] sm:$0xff]
    %v643 = vld [vmem:[#allocation9 + $0x48] sm:$0xff]
    %v644 = vld [vmem:[#allocation9 + $0x50] sm:$0xff]
    %v645 = vld [vmem:[#allocation9 + $0x58] sm:$0xff]
    %v646 = vld [vmem:[#allocation9 + $0x60] sm:$0xff]
    %v647 = vld [vmem:[#allocation9 + $0x68] sm:$0xff]
    %v648 = vld [vmem:[#allocation9 + $0x70] sm:$0xff]
    %v649 = vld [vmem:[#allocation9 + $0x78] sm:$0xff]
    %v650 = vld [vmem:[#allocation9 + $0x80] sm:$0xff]
    %v651 = vld [vmem:[#allocation9 + $0x88] sm:$0xff]
    %v652 = vld [vmem:[#allocation9 + $0x90] sm:$0xff]
    %v653 = vld [vmem:[#allocation9 + $0x98] sm:$0xff]
    %v654 = vld [vmem:[#allocation9 + $0xa0] sm:$0xff]
    %v655 = vld [vmem:[#allocation9 + $0xa8] sm:$0xff]
    %v656 = vld [vmem:[#allocation9 + $0xb0] sm:$0xff]
    %v657 = vld [vmem:[#allocation9 + $0xb8] sm:$0xff]
    %v658 = vld [vmem:[#allocation9 + $0xc0] sm:$0xff]
    %v659 = vld [vmem:[#allocation9 + $0xc8] sm:$0xff]
    %v660 = vld [vmem:[#allocation9 + $0xd0] sm:$0xff]
    %v661 = vld [vmem:[#allocation9 + $0xd8] sm:$0xff]
    %v662 = vld [vmem:[#allocation9 + $0xe0] sm:$0xff]
    %v663 = vld [vmem:[#allocation9 + $0xe8] sm:$0xff]
    %v664 = vld [vmem:[#allocation9 + $0xf0] sm:$0xff]
    %v665 = vld [vmem:[#allocation9 + $0xf8] sm:$0xff]
    %v666 = vld [vmem:[#allocation9 + $0x100] sm:$0xff]
    %v667 = vld [vmem:[#allocation9 + $0x108] sm:$0xff]
    %v668 = vld [vmem:[#allocation9 + $0x110] sm:$0xff]
    %v669 = vld [vmem:[#allocation9 + $0x118] sm:$0xff]
    %v670 = vld [vmem:[#allocation9 + $0x120] sm:$0xff]
    %v671 = vld [vmem:[#allocation9 + $0x128] sm:$0xff]
    %v672 = vld [vmem:[#allocation9 + $0x130] sm:$0xff]
    %v673 = vld [vmem:[#allocation9 + $0x138] sm:$0xff]
    %v674 = vld [vmem:[#allocation9 + $0x140] sm:$0xff]
    %v675 = vld [vmem:[#allocation9 + $0x148] sm:$0xff]
    %v676 = vld [vmem:[#allocation9 + $0x150] sm:$0xff]
    %v677 = vld [vmem:[#allocation9 + $0x158] sm:$0xff]
    %v678 = vld [vmem:[#allocation9 + $0x160] sm:$0xff]
    %v679 = vld [vmem:[#allocation9 + $0x168] sm:$0xff]
    %v680 = vld [vmem:[#allocation9 + $0x170] sm:$0xff]
    %v681 = vld [vmem:[#allocation9 + $0x178] sm:$0xff]
    %v682 = vld [vmem:[#allocation9 + $0x180] sm:$0xff]
    %v683 = vld [vmem:[#allocation9 + $0x188] sm:$0xff]
    %v684 = vld [vmem:[#allocation9 + $0x190] sm:$0xff]
    %v685 = vld [vmem:[#allocation9 + $0x198] sm:$0xff]
    %v686 = vld [vmem:[#allocation9 + $0x1a0] sm:$0xff]
    %v687 = vld [vmem:[#allocation9 + $0x1a8] sm:$0xff]
    %v688 = vld [vmem:[#allocation9 + $0x1b0] sm:$0xff]
    %v689 = vld [vmem:[#allocation9 + $0x1b8] sm:$0xff]
    %v690 = vld [vmem:[#allocation9 + $0x1c0] sm:$0xff]
    %v691 = vld [vmem:[#allocation9 + $0x1c8] sm:$0xff]
    %v692 = vld [vmem:[#allocation9 + $0x1d0] sm:$0xff]
    %v693 = vld [vmem:[#allocation9 + $0x1d8] sm:$0xff]
    %v694 = vld [vmem:[#allocation9 + $0x1e0] sm:$0xff]
    %v695 = vld [vmem:[#allocation9 + $0x1e8] sm:$0xff]
    %v696 = vld [vmem:[#allocation9 + $0x1f0] sm:$0xff]
    %v697 = vld [vmem:[#allocation9 + $0x1f8] sm:$0xff]
    %v698 = vld [vmem:[#allocation9 + $0x200] sm:$0xff]
    %v699 = vld [vmem:[#allocation9 + $0x208] sm:$0xff]
    %v700 = vld [vmem:[#allocation9 + $0x210] sm:$0xff]
    %v701 = vld [vmem:[#allocation9 + $0x218] sm:$0xff]
    %v702 = vld [vmem:[#allocation9 + $0x220] sm:$0xff]
    %v703 = vld [vmem:[#allocation9 + $0x228] sm:$0xff]
    %v704 = vld [vmem:[#allocation9 + $0x230] sm:$0xff]
    %v705 = vld [vmem:[#allocation9 + $0x238] sm:$0xff]
    %v706 = vld [vmem:[#allocation9 + $0x240] sm:$0xff]
    %v707 = vld [vmem:[#allocation9 + $0x248] sm:$0xff]
    %v708 = vld [vmem:[#allocation9 + $0x250] sm:$0xff]
    %v709 = vld [vmem:[#allocation9 + $0x258] sm:$0xff]
    %v710 = vld [vmem:[#allocation9 + $0x260] sm:$0xff]
    %v711 = vld [vmem:[#allocation9 + $0x268] sm:$0xff]
    %v712 = vld [vmem:[#allocation9 + $0x270] sm:$0xff]
    %v713 = vld [vmem:[#allocation9 + $0x278] sm:$0xff]
    %v714 = vld [vmem:[#allocation9 + $0x280] sm:$0xff]
    %v715 = vld [vmem:[#allocation9 + $0x288] sm:$0xff]
    %v716 = vld [vmem:[#allocation9 + $0x290] sm:$0xff]
    %v717 = vld [vmem:[#allocation9 + $0x298] sm:$0xff]
    %v718 = vld [vmem:[#allocation9 + $0x2a0] sm:$0xff]
    %v719 = vld [vmem:[#allocation9 + $0x2a8] sm:$0xff]
    %v720 = vld [vmem:[#allocation9 + $0x2b0] sm:$0xff]
    %v721 = vld [vmem:[#allocation9 + $0x2b8] sm:$0xff]
    %v722 = vld [vmem:[#allocation9 + $0x2c0] sm:$0xff]
    %v723 = vld [vmem:[#allocation9 + $0x2c8] sm:$0xff]
    %v724 = vld [vmem:[#allocation9 + $0x2d0] sm:$0xff]
    %v725 = vld [vmem:[#allocation9 + $0x2d8] sm:$0xff]
    %v726 = vld [vmem:[#allocation9 + $0x2e0] sm:$0xff]
    %v727 = vld [vmem:[#allocation9 + $0x2e8] sm:$0xff]
    %v728 = vld [vmem:[#allocation9 + $0x2f0] sm:$0xff]
    %v729 = vld [vmem:[#allocation9 + $0x2f8] sm:$0xff]
    %v730 = vld [vmem:[#allocation9 + $0x300] sm:$0xff]
    %v731 = vld [vmem:[#allocation9 + $0x308] sm:$0xff]
    %v732 = vld [vmem:[#allocation9 + $0x310] sm:$0xff]
    %v733 = vld [vmem:[#allocation9 + $0x318] sm:$0xff]
    %v734 = vld [vmem:[#allocation9 + $0x320] sm:$0xff]
    %v735 = vld [vmem:[#allocation9 + $0x328] sm:$0xff]
    %v736 = vld [vmem:[#allocation9 + $0x330] sm:$0xff]
    %v737 = vld [vmem:[#allocation9 + $0x338] sm:$0xff]
    %v738 = vld [vmem:[#allocation9 + $0x340] sm:$0xff]
    %v739 = vld [vmem:[#allocation9 + $0x348] sm:$0xff]
    %v740 = vld [vmem:[#allocation9 + $0x350] sm:$0xff]
    %v741 = vld [vmem:[#allocation9 + $0x358] sm:$0xff]
    %v742 = vld [vmem:[#allocation9 + $0x360] sm:$0xff]
    %v743 = vld [vmem:[#allocation9 + $0x368] sm:$0xff]
    %v744 = vld [vmem:[#allocation9 + $0x370] sm:$0xff]
    %v745 = vld [vmem:[#allocation9 + $0x378] sm:$0xff]
    %v746 = vld [vmem:[#allocation9 + $0x380] sm:$0xff]
    %v747 = vld [vmem:[#allocation9 + $0x388] sm:$0xff]
    %v748 = vld [vmem:[#allocation9 + $0x390] sm:$0xff]
    %v749 = vld [vmem:[#allocation9 + $0x398] sm:$0xff]
    %v750 = vld [vmem:[#allocation9 + $0x3a0] sm:$0xff]
    %v751 = vld [vmem:[#allocation9 + $0x3a8] sm:$0xff]
    %v752 = vld [vmem:[#allocation9 + $0x3b0] sm:$0xff]
    %v753 = vld [vmem:[#allocation9 + $0x3b8] sm:$0xff]
    %v754 = vld [vmem:[#allocation9 + $0x3c0] sm:$0xff]
    %v755 = vld [vmem:[#allocation9 + $0x3c8] sm:$0xff]
    %v756 = vld [vmem:[#allocation9 + $0x3d0] sm:$0xff]
    %v757 = vld [vmem:[#allocation9 + $0x3d8] sm:$0xff]
    %v758 = vld [vmem:[#allocation9 + $0x3e0] sm:$0xff]
    %v759 = vld [vmem:[#allocation9 + $0x3e8] sm:$0xff]
    %v760 = vld [vmem:[#allocation9 + $0x3f0] sm:$0xff]
    %v761 = vld [vmem:[#allocation9 + $0x3f8] sm:$0xff]
    %v762 = vld [vmem:[#allocation9 + $0x400] sm:$0xff]
    %v763 = vld [vmem:[#allocation9 + $0x408] sm:$0xff]
    %v764 = vld [vmem:[#allocation9 + $0x410] sm:$0xff]
    %v765 = vld [vmem:[#allocation9 + $0x418] sm:$0xff]
    %v766 = vld [vmem:[#allocation9 + $0x420] sm:$0xff]
    %v767 = vld [vmem:[#allocation9 + $0x428] sm:$0xff]
    %v768 = vld [vmem:[#allocation9 + $0x430] sm:$0xff]
    %v769 = vld [vmem:[#allocation9 + $0x438] sm:$0xff]
    %v770 = vld [vmem:[#allocation9 + $0x440] sm:$0xff]
    %v771 = vld [vmem:[#allocation9 + $0x448] sm:$0xff]
    %v772 = vld [vmem:[#allocation9 + $0x450] sm:$0xff]
    %v773 = vld [vmem:[#allocation9 + $0x458] sm:$0xff]
    %v774 = vld [vmem:[#allocation9 + $0x460] sm:$0xff]
    %v775 = vld [vmem:[#allocation9 + $0x468] sm:$0xff]
    %v776 = vld [vmem:[#allocation9 + $0x470] sm:$0xff]
    %v777 = vld [vmem:[#allocation9 + $0x478] sm:$0xff]
    %v778 = vld [vmem:[#allocation9 + $0x480] sm:$0xff]
    %v779 = vld [vmem:[#allocation9 + $0x488] sm:$0xff]
    %v780 = vld [vmem:[#allocation9 + $0x490] sm:$0xff]
    %v781 = vld [vmem:[#allocation9 + $0x498] sm:$0xff]
    %v782 = vld [vmem:[#allocation9 + $0x4a0] sm:$0xff]
    %v783 = vld [vmem:[#allocation9 + $0x4a8] sm:$0xff]
    %v784 = vld [vmem:[#allocation9 + $0x4b0] sm:$0xff]
    %v785 = vld [vmem:[#allocation9 + $0x4b8] sm:$0xff]
    %v786 = vld [vmem:[#allocation9 + $0x4c0] sm:$0xff]
    %v787 = vld [vmem:[#allocation9 + $0x4c8] sm:$0xff]
    %v788 = vld [vmem:[#allocation9 + $0x4d0] sm:$0xff]
    %v789 = vld [vmem:[#allocation9 + $0x4d8] sm:$0xff]
    %v790 = vld [vmem:[#allocation9 + $0x4e0] sm:$0xff]
    %v791 = vld [vmem:[#allocation9 + $0x4e8] sm:$0xff]
    %v792 = vld [vmem:[#allocation9 + $0x4f0] sm:$0xff]
    %v793 = vld [vmem:[#allocation9 + $0x4f8] sm:$0xff]
    %v794 = vld [vmem:[#allocation9 + $0x500] sm:$0xff]
    %v795 = vld [vmem:[#allocation9 + $0x508] sm:$0xff]
    %v796 = vld [vmem:[#allocation9 + $0x510] sm:$0xff]
    %v797 = vld [vmem:[#allocation9 + $0x518] sm:$0xff]
    %v798 = vld [vmem:[#allocation9 + $0x520] sm:$0xff]
    %v799 = vld [vmem:[#allocation9 + $0x528] sm:$0xff]
    %v800 = vld [vmem:[#allocation9 + $0x530] sm:$0xff]
    %v801 = vld [vmem:[#allocation9 + $0x538] sm:$0xff]
    %v802 = vld [vmem:[#allocation9 + $0x540] sm:$0xff]
    %v803 = vld [vmem:[#allocation9 + $0x548] sm:$0xff]
    %v804 = vld [vmem:[#allocation9 + $0x550] sm:$0xff]
    %v805 = vld [vmem:[#allocation9 + $0x558] sm:$0xff]
    %v806 = vld [vmem:[#allocation9 + $0x560] sm:$0xff]
    %v807 = vld [vmem:[#allocation9 + $0x568] sm:$0xff]
    %v808 = vld [vmem:[#allocation9 + $0x570] sm:$0xff]
    %v809 = vld [vmem:[#allocation9 + $0x578] sm:$0xff]
    %v810 = vld [vmem:[#allocation9 + $0x580] sm:$0xff]
    %v811 = vld [vmem:[#allocation9 + $0x588] sm:$0xff]
    %v812 = vld [vmem:[#allocation9 + $0x590] sm:$0xff]
    %v813 = vld [vmem:[#allocation9 + $0x598] sm:$0xff]
    %v814 = vld [vmem:[#allocation9 + $0x5a0] sm:$0xff]
    %v815 = vld [vmem:[#allocation9 + $0x5a8] sm:$0xff]
    %v816 = vld [vmem:[#allocation9 + $0x5b0] sm:$0xff]
    %v817 = vld [vmem:[#allocation9 + $0x5b8] sm:$0xff]
    %v818 = vld [vmem:[#allocation9 + $0x5c0] sm:$0xff]
    %v819 = vld [vmem:[#allocation9 + $0x5c8] sm:$0xff]
    %v820 = vld [vmem:[#allocation9 + $0x5d0] sm:$0xff]
    %v821 = vld [vmem:[#allocation9 + $0x5d8] sm:$0xff]
    %v822 = vld [vmem:[#allocation9 + $0x5e0] sm:$0xff]
    %v823 = vld [vmem:[#allocation9 + $0x5e8] sm:$0xff]
    %v824 = vld [vmem:[#allocation9 + $0x5f0] sm:$0xff]
    %v825 = vld [vmem:[#allocation9 + $0x5f8] sm:$0xff]
    %826 = vmatprep.subr.mxu0 %v473
    %827 = vmatpush1.xpose.msra.mxu0 %v472
    %828 = vmatprep.subr.mxu0 %v471
    %829 = vmatpush1.xpose.msra.mxu0 %v470
    %830 = vmatprep.subr.mxu0 %v469
    %831 = vmatpush1.xpose.msra.mxu0 %v468
    %832 = vmatprep.subr.mxu0 %v467
    %833 = vmatpush1.xpose.msra.mxu0 %v466
    %834 = vmatprep.subr.mxu0 %v465
    %835 = vmatpush1.xpose.msra.mxu0 %v464
    %836 = vmatprep.subr.mxu0 %v463
    %837 = vmatpush1.xpose.msra.mxu0 %v462
    %838 = vmatprep.subr.mxu0 %v461
    %839 = vmatpush1.xpose.msra.mxu0 %v460
    %840 = vmatprep.subr.mxu0 %v459
    %841 = vmatpush1.xpose.msra.mxu0 %v458
    %842 = vmatprep.subr.mxu0 %v457
    %843 = vmatpush1.xpose.msra.mxu0 %v456
    %844 = vmatprep.subr.mxu0 %v455
    %845 = vmatpush1.xpose.msra.mxu0 %v454
    %846 = vmatprep.subr.mxu0 %v453
    %847 = vmatpush1.xpose.msra.mxu0 %v452
    %848 = vmatprep.subr.mxu0 %v451
    %849 = vmatpush1.xpose.msra.mxu0 %v450
    %850 = vmatprep.subr.mxu0 %v449
    %851 = vmatpush1.xpose.msra.mxu0 %v448
    %852 = vmatprep.subr.mxu0 %v447
    %853 = vmatpush1.xpose.msra.mxu0 %v446
    %854 = vmatprep.subr.mxu0 %v445
    %855 = vmatpush1.xpose.msra.mxu0 %v444
    %856 = vmatprep.subr.mxu0 %v443
    %857 = vmatpush1.xpose.msra.mxu0 %v442
    %858 = vmatprep.subr.mxu0 %v505
    %859 = vmatpush2.xpose.msra.mxu0 %v504
    %860 = vmatprep.subr.mxu0 %v503
    %861 = vmatpush2.xpose.msra.mxu0 %v502
    %862 = vmatprep.subr.mxu0 %v501
    %863 = vmatpush2.xpose.msra.mxu0 %v500
    %864 = vmatprep.subr.mxu0 %v499
    %865 = vmatpush2.xpose.msra.mxu0 %v498
    %866 = vmatprep.subr.mxu0 %v497
    %867 = vmatpush2.xpose.msra.mxu0 %v496
    %868 = vmatprep.subr.mxu0 %v495
    %869 = vmatpush2.xpose.msra.mxu0 %v494
    %870 = vmatprep.subr.mxu0 %v493
    %871 = vmatpush2.xpose.msra.mxu0 %v492
    %872 = vmatprep.subr.mxu0 %v491
    %873 = vmatpush2.xpose.msra.mxu0 %v490
    %874 = vmatprep.subr.mxu0 %v489
    %875 = vmatpush2.xpose.msra.mxu0 %v488
    %876 = vmatprep.subr.mxu0 %v487
    %877 = vmatpush2.xpose.msra.mxu0 %v486
    %878 = vmatprep.subr.mxu0 %v485
    %879 = vmatpush2.xpose.msra.mxu0 %v484
    %880 = vmatprep.subr.mxu0 %v483
    %881 = vmatpush2.xpose.msra.mxu0 %v482
    %882 = vmatprep.subr.mxu0 %v481
    %883 = vmatpush2.xpose.msra.mxu0 %v480
    %884 = vmatprep.subr.mxu0 %v479
    %885 = vmatpush2.xpose.msra.mxu0 %v478
    %886 = vmatprep.subr.mxu0 %v477
    %887 = vmatpush2.xpose.msra.mxu0 %v476
    %888 = vmatprep.subr.mxu0 %v475
    %889 = vmatpush2.xpose.msra.mxu0 %v474
    %890 = vmatprep.mubr.f32.mxu0 %v251
    %891 = vmatmul.mubr.f32.gmra.mxu0 %v250
    %v892 = vpop.f32.mrf.mxu0
    %v893 = vadd.f32 0.0, %v892
    %v894 = vpop.f32.mrf.mxu0
    %v895 = vadd.f32 0.0, %v894
    %896 = vmatprep.mubr.f32.mxu0 %v253
    %897 = vmatmul.mubr.f32.gmra.mxu0 %v252
    %v898 = vpop.f32.mrf.mxu0
    %v899 = vadd.f32 0.0, %v898
    %v900 = vpop.f32.mrf.mxu0
    %v901 = vadd.f32 0.0, %v900
    %902 = vmatprep.mubr.f32.mxu0 %v255
    %903 = vmatmul.mubr.f32.gmra.mxu0 %v254
    %v904 = vpop.f32.mrf.mxu0
    %v905 = vadd.f32 0.0, %v904
    %v906 = vpop.f32.mrf.mxu0
    %v907 = vadd.f32 0.0, %v906
    %908 = vmatprep.mubr.f32.mxu0 %v257
    %909 = vmatmul.mubr.f32.gmra.mxu0 %v256
    %v910 = vpop.f32.mrf.mxu0
    %v911 = vadd.f32 0.0, %v910
    %v912 = vpop.f32.mrf.mxu0
    %v913 = vadd.f32 0.0, %v912
    %914 = vmatprep.mubr.f32.mxu0 %v259
    %915 = vmatmul.mubr.f32.gmra.mxu0 %v258
    %v916 = vpop.f32.mrf.mxu0
    %v917 = vadd.f32 0.0, %v916
    %v918 = vpop.f32.mrf.mxu0
    %v919 = vadd.f32 0.0, %v918
    %920 = vmatprep.mubr.f32.mxu0 %v261
    %921 = vmatmul.mubr.f32.gmra.mxu0 %v260
    %v922 = vpop.f32.mrf.mxu0
    %v923 = vadd.f32 0.0, %v922
    %v924 = vpop.f32.mrf.mxu0
    %v925 = vadd.f32 0.0, %v924
    %926 = vmatprep.mubr.f32.mxu0 %v263
    %927 = vmatmul.mubr.f32.gmra.mxu0 %v262
    %v928 = vpop.f32.mrf.mxu0
    %v929 = vadd.f32 0.0, %v928
    %v930 = vpop.f32.mrf.mxu0
    %v931 = vadd.f32 0.0, %v930
    %932 = vmatprep.mubr.f32.mxu0 %v265
    %933 = vmatmul.mubr.f32.gmra.mxu0 %v264
    %v934 = vpop.f32.mrf.mxu0
    %v935 = vadd.f32 0.0, %v934
    %v936 = vpop.f32.mrf.mxu0
    %v937 = vadd.f32 0.0, %v936
    %938 = vmatprep.mubr.f32.mxu0 %v267
    %939 = vmatmul.mubr.f32.gmra.mxu0 %v266
    %v940 = vpop.f32.mrf.mxu0
    %v941 = vadd.f32 0.0, %v940
    %v942 = vpop.f32.mrf.mxu0
    %v943 = vadd.f32 0.0, %v942
    %944 = vmatprep.mubr.f32.mxu0 %v269
    %945 = vmatmul.mubr.f32.gmra.mxu0 %v268
    %v946 = vpop.f32.mrf.mxu0
    %v947 = vadd.f32 0.0, %v946
    %v948 = vpop.f32.mrf.mxu0
    %v949 = vadd.f32 0.0, %v948
    %950 = vmatprep.mubr.f32.mxu0 %v271
    %951 = vmatmul.mubr.f32.gmra.mxu0 %v270
    %v952 = vpop.f32.mrf.mxu0
    %v953 = vadd.f32 0.0, %v952
    %v954 = vpop.f32.mrf.mxu0
    %v955 = vadd.f32 0.0, %v954
    %956 = vmatprep.mubr.f32.mxu0 %v273
    %957 = vmatmul.mubr.f32.gmra.mxu0 %v272
    %v958 = vpop.f32.mrf.mxu0
    %v959 = vadd.f32 0.0, %v958
    %v960 = vpop.f32.mrf.mxu0
    %v961 = vadd.f32 0.0, %v960
    %962 = vmatprep.mubr.f32.mxu0 %v275
    %963 = vmatmul.mubr.f32.gmra.mxu0 %v274
    %v964 = vpop.f32.mrf.mxu0
    %v965 = vadd.f32 0.0, %v964
    %v966 = vpop.f32.mrf.mxu0
    %v967 = vadd.f32 0.0, %v966
    %968 = vmatprep.mubr.f32.mxu0 %v277
    %969 = vmatmul.mubr.f32.gmra.mxu0 %v276
    %v970 = vpop.f32.mrf.mxu0
    %v971 = vadd.f32 0.0, %v970
    %v972 = vpop.f32.mrf.mxu0
    %v973 = vadd.f32 0.0, %v972
    %974 = vmatprep.mubr.f32.mxu0 %v279
    %975 = vmatmul.mubr.f32.gmra.mxu0 %v278
    %v976 = vpop.f32.mrf.mxu0
    %v977 = vadd.f32 0.0, %v976
    %v978 = vpop.f32.mrf.mxu0
    %v979 = vadd.f32 0.0, %v978
    %980 = vmatprep.mubr.f32.mxu0 %v281
    %981 = vmatmul.mubr.f32.gmra.mxu0 %v280
    %v982 = vpop.f32.mrf.mxu0
    %v983 = vadd.f32 0.0, %v982
    %v984 = vpop.f32.mrf.mxu0
    %v985 = vadd.f32 0.0, %v984
    %986 = vmatprep.mubr.f32.mxu0 %v283
    %987 = vmatmul.mubr.f32.gmra.mxu0 %v282
    %v988 = vpop.f32.mrf.mxu0
    %v989 = vadd.f32 0.0, %v988
    %v990 = vpop.f32.mrf.mxu0
    %v991 = vadd.f32 0.0, %v990
    %992 = vmatprep.mubr.f32.mxu0 %v285
    %993 = vmatmul.mubr.f32.gmra.mxu0 %v284
    %v994 = vpop.f32.mrf.mxu0
    %v995 = vadd.f32 0.0, %v994
    %v996 = vpop.f32.mrf.mxu0
    %v997 = vadd.f32 0.0, %v996
    %998 = vmatprep.mubr.f32.mxu0 %v287
    %999 = vmatmul.mubr.f32.gmra.mxu0 %v286
    %v1000 = vpop.f32.mrf.mxu0
    %v1001 = vadd.f32 0.0, %v1000
    %v1002 = vpop.f32.mrf.mxu0
    %v1003 = vadd.f32 0.0, %v1002
    %1004 = vmatprep.mubr.f32.mxu0 %v289
    %1005 = vmatmul.mubr.f32.gmra.mxu0 %v288
    %v1006 = vpop.f32.mrf.mxu0
    %v1007 = vadd.f32 0.0, %v1006
    %v1008 = vpop.f32.mrf.mxu0
    %v1009 = vadd.f32 0.0, %v1008
    %1010 = vmatprep.mubr.f32.mxu0 %v291
    %1011 = vmatmul.mubr.f32.gmra.mxu0 %v290
    %v1012 = vpop.f32.mrf.mxu0
    %v1013 = vadd.f32 0.0, %v1012
    %v1014 = vpop.f32.mrf.mxu0
    %v1015 = vadd.f32 0.0, %v1014
    %1016 = vmatprep.mubr.f32.mxu0 %v293
    %1017 = vmatmul.mubr.f32.gmra.mxu0 %v292
    %v1018 = vpop.f32.mrf.mxu0
    %v1019 = vadd.f32 0.0, %v1018
    %v1020 = vpop.f32.mrf.mxu0
    %v1021 = vadd.f32 0.0, %v1020
    %1022 = vmatprep.mubr.f32.mxu0 %v295
    %1023 = vmatmul.mubr.f32.gmra.mxu0 %v294
    %v1024 = vpop.f32.mrf.mxu0
    %v1025 = vadd.f32 0.0, %v1024
    %v1026 = vpop.f32.mrf.mxu0
    %v1027 = vadd.f32 0.0, %v1026
    %1028 = vmatprep.mubr.f32.mxu0 %v297
    %1029 = vmatmul.mubr.f32.gmra.mxu0 %v296
    %v1030 = vpop.f32.mrf.mxu0
    %v1031 = vadd.f32 0.0, %v1030
    %v1032 = vpop.f32.mrf.mxu0
    %v1033 = vadd.f32 0.0, %v1032
    %1034 = vmatprep.mubr.f32.mxu0 %v299
    %1035 = vmatmul.mubr.f32.gmra.mxu0 %v298
    %v1036 = vpop.f32.mrf.mxu0
    %v1037 = vadd.f32 0.0, %v1036
    %v1038 = vpop.f32.mrf.mxu0
    %v1039 = vadd.f32 0.0, %v1038
    %1040 = vmatprep.mubr.f32.mxu0 %v301
    %1041 = vmatmul.mubr.f32.gmra.mxu0 %v300
    %v1042 = vpop.f32.mrf.mxu0
    %v1043 = vadd.f32 0.0, %v1042
    %v1044 = vpop.f32.mrf.mxu0
    %v1045 = vadd.f32 0.0, %v1044
    %1046 = vmatprep.mubr.f32.mxu0 %v303
    %1047 = vmatmul.mubr.f32.gmra.mxu0 %v302
    %v1048 = vpop.f32.mrf.mxu0
    %v1049 = vadd.f32 0.0, %v1048
    %v1050 = vpop.f32.mrf.mxu0
    %v1051 = vadd.f32 0.0, %v1050
    %1052 = vmatprep.mubr.f32.mxu0 %v305
    %1053 = vmatmul.mubr.f32.gmra.mxu0 %v304
    %v1054 = vpop.f32.mrf.mxu0
    %v1055 = vadd.f32 0.0, %v1054
    %v1056 = vpop.f32.mrf.mxu0
    %v1057 = vadd.f32 0.0, %v1056
    %1058 = vmatprep.mubr.f32.mxu0 %v307
    %1059 = vmatmul.mubr.f32.gmra.mxu0 %v306
    %v1060 = vpop.f32.mrf.mxu0
    %v1061 = vadd.f32 0.0, %v1060
    %v1062 = vpop.f32.mrf.mxu0
    %v1063 = vadd.f32 0.0, %v1062
    %1064 = vmatprep.mubr.f32.mxu0 %v309
    %1065 = vmatmul.mubr.f32.gmra.mxu0 %v308
    %v1066 = vpop.f32.mrf.mxu0
    %v1067 = vadd.f32 0.0, %v1066
    %v1068 = vpop.f32.mrf.mxu0
    %v1069 = vadd.f32 0.0, %v1068
    %1070 = vmatprep.mubr.f32.mxu0 %v311
    %1071 = vmatmul.mubr.f32.gmra.mxu0 %v310
    %v1072 = vpop.f32.mrf.mxu0
    %v1073 = vadd.f32 0.0, %v1072
    %v1074 = vpop.f32.mrf.mxu0
    %v1075 = vadd.f32 0.0, %v1074
    %1076 = vmatprep.mubr.f32.mxu0 %v313
    %1077 = vmatmul.mubr.f32.gmra.mxu0 %v312
    %v1078 = vpop.f32.mrf.mxu0
    %v1079 = vadd.f32 0.0, %v1078
    %v1080 = vpop.f32.mrf.mxu0
    %v1081 = vadd.f32 0.0, %v1080
    %1082 = vdwg.mxu0
    %1083 = vmatprep.subr.mxu0 %v537
    %1084 = vmatpush1.xpose.msra.mxu0 %v536
    %1085 = vmatprep.subr.mxu0 %v535
    %1086 = vmatpush1.xpose.msra.mxu0 %v534
    %1087 = vmatprep.subr.mxu0 %v533
    %1088 = vmatpush1.xpose.msra.mxu0 %v532
    %1089 = vmatprep.subr.mxu0 %v531
    %1090 = vmatpush1.xpose.msra.mxu0 %v530
    %1091 = vmatprep.subr.mxu0 %v529
    %1092 = vmatpush1.xpose.msra.mxu0 %v528
    %1093 = vmatprep.subr.mxu0 %v527
    %1094 = vmatpush1.xpose.msra.mxu0 %v526
    %1095 = vmatprep.subr.mxu0 %v525
    %1096 = vmatpush1.xpose.msra.mxu0 %v524
    %1097 = vmatprep.subr.mxu0 %v523
    %1098 = vmatpush1.xpose.msra.mxu0 %v522
    %1099 = vmatprep.subr.mxu0 %v521
    %1100 = vmatpush1.xpose.msra.mxu0 %v520
    %1101 = vmatprep.subr.mxu0 %v519
    %1102 = vmatpush1.xpose.msra.mxu0 %v518
    %1103 = vmatprep.subr.mxu0 %v517
    %1104 = vmatpush1.xpose.msra.mxu0 %v516
    %1105 = vmatprep.subr.mxu0 %v515
    %1106 = vmatpush1.xpose.msra.mxu0 %v514
    %1107 = vmatprep.subr.mxu0 %v513
    %1108 = vmatpush1.xpose.msra.mxu0 %v512
    %1109 = vmatprep.subr.mxu0 %v511
    %1110 = vmatpush1.xpose.msra.mxu0 %v510
    %1111 = vmatprep.subr.mxu0 %v509
    %1112 = vmatpush1.xpose.msra.mxu0 %v508
    %1113 = vmatprep.subr.mxu0 %v507
    %1114 = vmatpush1.xpose.msra.mxu0 %v506
    %1115 = vmatprep.subr.mxu0 %v569
    %1116 = vmatpush2.xpose.msra.mxu0 %v568
    %1117 = vmatprep.subr.mxu0 %v567
    %1118 = vmatpush2.xpose.msra.mxu0 %v566
    %1119 = vmatprep.subr.mxu0 %v565
    %1120 = vmatpush2.xpose.msra.mxu0 %v564
    %1121 = vmatprep.subr.mxu0 %v563
    %1122 = vmatpush2.xpose.msra.mxu0 %v562
    %1123 = vmatprep.subr.mxu0 %v561
    %1124 = vmatpush2.xpose.msra.mxu0 %v560
    %1125 = vmatprep.subr.mxu0 %v559
    %1126 = vmatpush2.xpose.msra.mxu0 %v558
    %1127 = vmatprep.subr.mxu0 %v557
    %1128 = vmatpush2.xpose.msra.mxu0 %v556
    %1129 = vmatprep.subr.mxu0 %v555
    %1130 = vmatpush2.xpose.msra.mxu0 %v554
    %1131 = vmatprep.subr.mxu0 %v553
    %1132 = vmatpush2.xpose.msra.mxu0 %v552
    %1133 = vmatprep.subr.mxu0 %v551
    %1134 = vmatpush2.xpose.msra.mxu0 %v550
    %1135 = vmatprep.subr.mxu0 %v549
    %1136 = vmatpush2.xpose.msra.mxu0 %v548
    %1137 = vmatprep.subr.mxu0 %v547
    %1138 = vmatpush2.xpose.msra.mxu0 %v546
    %1139 = vmatprep.subr.mxu0 %v545
    %1140 = vmatpush2.xpose.msra.mxu0 %v544
    %1141 = vmatprep.subr.mxu0 %v543
    %1142 = vmatpush2.xpose.msra.mxu0 %v542
    %1143 = vmatprep.subr.mxu0 %v541
    %1144 = vmatpush2.xpose.msra.mxu0 %v540
    %1145 = vmatprep.subr.mxu0 %v539
    %1146 = vmatpush2.xpose.msra.mxu0 %v538
    %1147 = vmatprep.mubr.f32.mxu0 %v315
    %1148 = vmatmul.mubr.f32.gmra.mxu0 %v314
    %v1149 = vpop.f32.mrf.mxu0
    %v1150 = vadd.f32 0.0, %v1149
    %v1151 = vpop.f32.mrf.mxu0
    %v1152 = vadd.f32 0.0, %v1151
    %1153 = vmatprep.mubr.f32.mxu0 %v317
    %1154 = vmatmul.mubr.f32.gmra.mxu0 %v316
    %v1155 = vpop.f32.mrf.mxu0
    %v1156 = vadd.f32 0.0, %v1155
    %v1157 = vpop.f32.mrf.mxu0
    %v1158 = vadd.f32 0.0, %v1157
    %1159 = vmatprep.mubr.f32.mxu0 %v319
    %1160 = vmatmul.mubr.f32.gmra.mxu0 %v318
    %v1161 = vpop.f32.mrf.mxu0
    %v1162 = vadd.f32 0.0, %v1161
    %v1163 = vpop.f32.mrf.mxu0
    %v1164 = vadd.f32 0.0, %v1163
    %1165 = vmatprep.mubr.f32.mxu0 %v321
    %1166 = vmatmul.mubr.f32.gmra.mxu0 %v320
    %v1167 = vpop.f32.mrf.mxu0
    %v1168 = vadd.f32 0.0, %v1167
    %v1169 = vpop.f32.mrf.mxu0
    %v1170 = vadd.f32 0.0, %v1169
    %1171 = vmatprep.mubr.f32.mxu0 %v323
    %1172 = vmatmul.mubr.f32.gmra.mxu0 %v322
    %v1173 = vpop.f32.mrf.mxu0
    %v1174 = vadd.f32 0.0, %v1173
    %v1175 = vpop.f32.mrf.mxu0
    %v1176 = vadd.f32 0.0, %v1175
    %1177 = vmatprep.mubr.f32.mxu0 %v325
    %1178 = vmatmul.mubr.f32.gmra.mxu0 %v324
    %v1179 = vpop.f32.mrf.mxu0
    %v1180 = vadd.f32 0.0, %v1179
    %v1181 = vpop.f32.mrf.mxu0
    %v1182 = vadd.f32 0.0, %v1181
    %1183 = vmatprep.mubr.f32.mxu0 %v327
    %1184 = vmatmul.mubr.f32.gmra.mxu0 %v326
    %v1185 = vpop.f32.mrf.mxu0
    %v1186 = vadd.f32 0.0, %v1185
    %v1187 = vpop.f32.mrf.mxu0
    %v1188 = vadd.f32 0.0, %v1187
    %1189 = vmatprep.mubr.f32.mxu0 %v329
    %1190 = vmatmul.mubr.f32.gmra.mxu0 %v328
    %v1191 = vpop.f32.mrf.mxu0
    %v1192 = vadd.f32 0.0, %v1191
    %v1193 = vpop.f32.mrf.mxu0
    %v1194 = vadd.f32 0.0, %v1193
    %1195 = vmatprep.mubr.f32.mxu0 %v331
    %1196 = vmatmul.mubr.f32.gmra.mxu0 %v330
    %v1197 = vpop.f32.mrf.mxu0
    %v1198 = vadd.f32 0.0, %v1197
    %v1199 = vpop.f32.mrf.mxu0
    %v1200 = vadd.f32 0.0, %v1199
    %1201 = vmatprep.mubr.f32.mxu0 %v333
    %1202 = vmatmul.mubr.f32.gmra.mxu0 %v332
    %v1203 = vpop.f32.mrf.mxu0
    %v1204 = vadd.f32 0.0, %v1203
    %v1205 = vpop.f32.mrf.mxu0
    %v1206 = vadd.f32 0.0, %v1205
    %1207 = vmatprep.mubr.f32.mxu0 %v335
    %1208 = vmatmul.mubr.f32.gmra.mxu0 %v334
    %v1209 = vpop.f32.mrf.mxu0
    %v1210 = vadd.f32 0.0, %v1209
    %v1211 = vpop.f32.mrf.mxu0
    %v1212 = vadd.f32 0.0, %v1211
    %1213 = vmatprep.mubr.f32.mxu0 %v337
    %1214 = vmatmul.mubr.f32.gmra.mxu0 %v336
    %v1215 = vpop.f32.mrf.mxu0
    %v1216 = vadd.f32 0.0, %v1215
    %v1217 = vpop.f32.mrf.mxu0
    %v1218 = vadd.f32 0.0, %v1217
    %1219 = vmatprep.mubr.f32.mxu0 %v339
    %1220 = vmatmul.mubr.f32.gmra.mxu0 %v338
    %v1221 = vpop.f32.mrf.mxu0
    %v1222 = vadd.f32 0.0, %v1221
    %v1223 = vpop.f32.mrf.mxu0
    %v1224 = vadd.f32 0.0, %v1223
    %1225 = vmatprep.mubr.f32.mxu0 %v341
    %1226 = vmatmul.mubr.f32.gmra.mxu0 %v340
    %v1227 = vpop.f32.mrf.mxu0
    %v1228 = vadd.f32 0.0, %v1227
    %v1229 = vpop.f32.mrf.mxu0
    %v1230 = vadd.f32 0.0, %v1229
    %1231 = vmatprep.mubr.f32.mxu0 %v343
    %1232 = vmatmul.mubr.f32.gmra.mxu0 %v342
    %v1233 = vpop.f32.mrf.mxu0
    %v1234 = vadd.f32 0.0, %v1233
    %v1235 = vpop.f32.mrf.mxu0
    %v1236 = vadd.f32 0.0, %v1235
    %1237 = vmatprep.mubr.f32.mxu0 %v345
    %1238 = vmatmul.mubr.f32.gmra.mxu0 %v344
    %v1239 = vpop.f32.mrf.mxu0
    %v1240 = vadd.f32 0.0, %v1239
    %v1241 = vpop.f32.mrf.mxu0
    %v1242 = vadd.f32 0.0, %v1241
    %1243 = vmatprep.mubr.f32.mxu0 %v347
    %1244 = vmatmul.mubr.f32.gmra.mxu0 %v346
    %v1245 = vpop.f32.mrf.mxu0
    %v1246 = vadd.f32 0.0, %v1245
    %v1247 = vpop.f32.mrf.mxu0
    %v1248 = vadd.f32 0.0, %v1247
    %1249 = vmatprep.mubr.f32.mxu0 %v349
    %1250 = vmatmul.mubr.f32.gmra.mxu0 %v348
    %v1251 = vpop.f32.mrf.mxu0
    %v1252 = vadd.f32 0.0, %v1251
    %v1253 = vpop.f32.mrf.mxu0
    %v1254 = vadd.f32 0.0, %v1253
    %1255 = vmatprep.mubr.f32.mxu0 %v351
    %1256 = vmatmul.mubr.f32.gmra.mxu0 %v350
    %v1257 = vpop.f32.mrf.mxu0
    %v1258 = vadd.f32 0.0, %v1257
    %v1259 = vpop.f32.mrf.mxu0
    %v1260 = vadd.f32 0.0, %v1259
    %1261 = vmatprep.mubr.f32.mxu0 %v353
    %1262 = vmatmul.mubr.f32.gmra.mxu0 %v352
    %v1263 = vpop.f32.mrf.mxu0
    %v1264 = vadd.f32 0.0, %v1263
    %v1265 = vpop.f32.mrf.mxu0
    %v1266 = vadd.f32 0.0, %v1265
    %1267 = vmatprep.mubr.f32.mxu0 %v355
    %1268 = vmatmul.mubr.f32.gmra.mxu0 %v354
    %v1269 = vpop.f32.mrf.mxu0
    %v1270 = vadd.f32 0.0, %v1269
    %v1271 = vpop.f32.mrf.mxu0
    %v1272 = vadd.f32 0.0, %v1271
    %1273 = vmatprep.mubr.f32.mxu0 %v357
    %1274 = vmatmul.mubr.f32.gmra.mxu0 %v356
    %v1275 = vpop.f32.mrf.mxu0
    %v1276 = vadd.f32 0.0, %v1275
    %v1277 = vpop.f32.mrf.mxu0
    %v1278 = vadd.f32 0.0, %v1277
    %1279 = vmatprep.mubr.f32.mxu0 %v359
    %1280 = vmatmul.mubr.f32.gmra.mxu0 %v358
    %v1281 = vpop.f32.mrf.mxu0
    %v1282 = vadd.f32 0.0, %v1281
    %v1283 = vpop.f32.mrf.mxu0
    %v1284 = vadd.f32 0.0, %v1283
    %1285 = vmatprep.mubr.f32.mxu0 %v361
    %1286 = vmatmul.mubr.f32.gmra.mxu0 %v360
    %v1287 = vpop.f32.mrf.mxu0
    %v1288 = vadd.f32 0.0, %v1287
    %v1289 = vpop.f32.mrf.mxu0
    %v1290 = vadd.f32 0.0, %v1289
    %1291 = vmatprep.mubr.f32.mxu0 %v363
    %1292 = vmatmul.mubr.f32.gmra.mxu0 %v362
    %v1293 = vpop.f32.mrf.mxu0
    %v1294 = vadd.f32 0.0, %v1293
    %v1295 = vpop.f32.mrf.mxu0
    %v1296 = vadd.f32 0.0, %v1295
    %1297 = vmatprep.mubr.f32.mxu0 %v365
    %1298 = vmatmul.mubr.f32.gmra.mxu0 %v364
    %v1299 = vpop.f32.mrf.mxu0
    %v1300 = vadd.f32 0.0, %v1299
    %v1301 = vpop.f32.mrf.mxu0
    %v1302 = vadd.f32 0.0, %v1301
    %1303 = vmatprep.mubr.f32.mxu0 %v367
    %1304 = vmatmul.mubr.f32.gmra.mxu0 %v366
    %v1305 = vpop.f32.mrf.mxu0
    %v1306 = vadd.f32 0.0, %v1305
    %v1307 = vpop.f32.mrf.mxu0
    %v1308 = vadd.f32 0.0, %v1307
    %1309 = vmatprep.mubr.f32.mxu0 %v369
    %1310 = vmatmul.mubr.f32.gmra.mxu0 %v368
    %v1311 = vpop.f32.mrf.mxu0
    %v1312 = vadd.f32 0.0, %v1311
    %v1313 = vpop.f32.mrf.mxu0
    %v1314 = vadd.f32 0.0, %v1313
    %1315 = vmatprep.mubr.f32.mxu0 %v371
    %1316 = vmatmul.mubr.f32.gmra.mxu0 %v370
    %v1317 = vpop.f32.mrf.mxu0
    %v1318 = vadd.f32 0.0, %v1317
    %v1319 = vpop.f32.mrf.mxu0
    %v1320 = vadd.f32 0.0, %v1319
    %1321 = vmatprep.mubr.f32.mxu0 %v373
    %1322 = vmatmul.mubr.f32.gmra.mxu0 %v372
    %v1323 = vpop.f32.mrf.mxu0
    %v1324 = vadd.f32 0.0, %v1323
    %v1325 = vpop.f32.mrf.mxu0
    %v1326 = vadd.f32 0.0, %v1325
    %1327 = vmatprep.mubr.f32.mxu0 %v375
    %1328 = vmatmul.mubr.f32.gmra.mxu0 %v374
    %v1329 = vpop.f32.mrf.mxu0
    %v1330 = vadd.f32 0.0, %v1329
    %v1331 = vpop.f32.mrf.mxu0
    %v1332 = vadd.f32 0.0, %v1331
    %1333 = vmatprep.mubr.f32.mxu0 %v377
    %1334 = vmatmul.mubr.f32.gmra.mxu0 %v376
    %v1335 = vpop.f32.mrf.mxu0
    %v1336 = vadd.f32 0.0, %v1335
    %v1337 = vpop.f32.mrf.mxu0
    %v1338 = vadd.f32 0.0, %v1337
    %1339 = vdwg.mxu0
    %1340 = vmatprep.subr.mxu0 %v601
    %1341 = vmatpush1.xpose.msra.mxu0 %v600
    %1342 = vmatprep.subr.mxu0 %v599
    %1343 = vmatpush1.xpose.msra.mxu0 %v598
    %1344 = vmatprep.subr.mxu0 %v597
    %1345 = vmatpush1.xpose.msra.mxu0 %v596
    %1346 = vmatprep.subr.mxu0 %v595
    %1347 = vmatpush1.xpose.msra.mxu0 %v594
    %1348 = vmatprep.subr.mxu0 %v593
    %1349 = vmatpush1.xpose.msra.mxu0 %v592
    %1350 = vmatprep.subr.mxu0 %v591
    %1351 = vmatpush1.xpose.msra.mxu0 %v590
    %1352 = vmatprep.subr.mxu0 %v589
    %1353 = vmatpush1.xpose.msra.mxu0 %v588
    %1354 = vmatprep.subr.mxu0 %v587
    %1355 = vmatpush1.xpose.msra.mxu0 %v586
    %1356 = vmatprep.subr.mxu0 %v585
    %1357 = vmatpush1.xpose.msra.mxu0 %v584
    %1358 = vmatprep.subr.mxu0 %v583
    %1359 = vmatpush1.xpose.msra.mxu0 %v582
    %1360 = vmatprep.subr.mxu0 %v581
    %1361 = vmatpush1.xpose.msra.mxu0 %v580
    %1362 = vmatprep.subr.mxu0 %v579
    %1363 = vmatpush1.xpose.msra.mxu0 %v578
    %1364 = vmatprep.subr.mxu0 %v577
    %1365 = vmatpush1.xpose.msra.mxu0 %v576
    %1366 = vmatprep.subr.mxu0 %v575
    %1367 = vmatpush1.xpose.msra.mxu0 %v574
    %1368 = vmatprep.subr.mxu0 %v573
    %1369 = vmatpush1.xpose.msra.mxu0 %v572
    %1370 = vmatprep.subr.mxu0 %v571
    %1371 = vmatpush1.xpose.msra.mxu0 %v570
    %1372 = vmatprep.subr.mxu0 %v633
    %1373 = vmatpush2.xpose.msra.mxu0 %v632
    %1374 = vmatprep.subr.mxu0 %v631
    %1375 = vmatpush2.xpose.msra.mxu0 %v630
    %1376 = vmatprep.subr.mxu0 %v629
    %1377 = vmatpush2.xpose.msra.mxu0 %v628
    %1378 = vmatprep.subr.mxu0 %v627
    %1379 = vmatpush2.xpose.msra.mxu0 %v626
    %1380 = vmatprep.subr.mxu0 %v625
    %1381 = vmatpush2.xpose.msra.mxu0 %v624
    %1382 = vmatprep.subr.mxu0 %v623
    %1383 = vmatpush2.xpose.msra.mxu0 %v622
    %1384 = vmatprep.subr.mxu0 %v621
    %1385 = vmatpush2.xpose.msra.mxu0 %v620
    %1386 = vmatprep.subr.mxu0 %v619
    %1387 = vmatpush2.xpose.msra.mxu0 %v618
    %1388 = vmatprep.subr.mxu0 %v617
    %1389 = vmatpush2.xpose.msra.mxu0 %v616
    %1390 = vmatprep.subr.mxu0 %v615
    %1391 = vmatpush2.xpose.msra.mxu0 %v614
    %1392 = vmatprep.subr.mxu0 %v613
    %1393 = vmatpush2.xpose.msra.mxu0 %v612
    %1394 = vmatprep.subr.mxu0 %v611
    %1395 = vmatpush2.xpose.msra.mxu0 %v610
    %1396 = vmatprep.subr.mxu0 %v609
    %1397 = vmatpush2.xpose.msra.mxu0 %v608
    %1398 = vmatprep.subr.mxu0 %v607
    %1399 = vmatpush2.xpose.msra.mxu0 %v606
    %1400 = vmatprep.subr.mxu0 %v605
    %1401 = vmatpush2.xpose.msra.mxu0 %v604
    %1402 = vmatprep.subr.mxu0 %v603
    %1403 = vmatpush2.xpose.msra.mxu0 %v602
    %1404 = vmatprep.mubr.f32.mxu0 %v379
    %1405 = vmatmul.mubr.f32.gmra.mxu0 %v378
    %v1406 = vpop.f32.mrf.mxu0
    %v1407 = vadd.f32 0.0, %v1406
    %v1408 = vpop.f32.mrf.mxu0
    %v1409 = vadd.f32 0.0, %v1408
    %1410 = vmatprep.mubr.f32.mxu0 %v381
    %1411 = vmatmul.mubr.f32.gmra.mxu0 %v380
    %v1412 = vpop.f32.mrf.mxu0
    %v1413 = vadd.f32 0.0, %v1412
    %v1414 = vpop.f32.mrf.mxu0
    %v1415 = vadd.f32 0.0, %v1414
    %1416 = vmatprep.mubr.f32.mxu0 %v383
    %1417 = vmatmul.mubr.f32.gmra.mxu0 %v382
    %v1418 = vpop.f32.mrf.mxu0
    %v1419 = vadd.f32 0.0, %v1418
    %v1420 = vpop.f32.mrf.mxu0
    %v1421 = vadd.f32 0.0, %v1420
    %1422 = vmatprep.mubr.f32.mxu0 %v385
    %1423 = vmatmul.mubr.f32.gmra.mxu0 %v384
    %v1424 = vpop.f32.mrf.mxu0
    %v1425 = vadd.f32 0.0, %v1424
    %v1426 = vpop.f32.mrf.mxu0
    %v1427 = vadd.f32 0.0, %v1426
    %1428 = vmatprep.mubr.f32.mxu0 %v387
    %1429 = vmatmul.mubr.f32.gmra.mxu0 %v386
    %v1430 = vpop.f32.mrf.mxu0
    %v1431 = vadd.f32 0.0, %v1430
    %v1432 = vpop.f32.mrf.mxu0
    %v1433 = vadd.f32 0.0, %v1432
    %1434 = vmatprep.mubr.f32.mxu0 %v389
    %1435 = vmatmul.mubr.f32.gmra.mxu0 %v388
    %v1436 = vpop.f32.mrf.mxu0
    %v1437 = vadd.f32 0.0, %v1436
    %v1438 = vpop.f32.mrf.mxu0
    %v1439 = vadd.f32 0.0, %v1438
    %1440 = vmatprep.mubr.f32.mxu0 %v391
    %1441 = vmatmul.mubr.f32.gmra.mxu0 %v390
    %v1442 = vpop.f32.mrf.mxu0
    %v1443 = vadd.f32 0.0, %v1442
    %v1444 = vpop.f32.mrf.mxu0
    %v1445 = vadd.f32 0.0, %v1444
    %1446 = vmatprep.mubr.f32.mxu0 %v393
    %1447 = vmatmul.mubr.f32.gmra.mxu0 %v392
    %v1448 = vpop.f32.mrf.mxu0
    %v1449 = vadd.f32 0.0, %v1448
    %v1450 = vpop.f32.mrf.mxu0
    %v1451 = vadd.f32 0.0, %v1450
    %1452 = vmatprep.mubr.f32.mxu0 %v395
    %1453 = vmatmul.mubr.f32.gmra.mxu0 %v394
    %v1454 = vpop.f32.mrf.mxu0
    %v1455 = vadd.f32 0.0, %v1454
    %v1456 = vpop.f32.mrf.mxu0
    %v1457 = vadd.f32 0.0, %v1456
    %1458 = vmatprep.mubr.f32.mxu0 %v397
    %1459 = vmatmul.mubr.f32.gmra.mxu0 %v396
    %v1460 = vpop.f32.mrf.mxu0
    %v1461 = vadd.f32 0.0, %v1460
    %v1462 = vpop.f32.mrf.mxu0
    %v1463 = vadd.f32 0.0, %v1462
    %1464 = vmatprep.mubr.f32.mxu0 %v399
    %1465 = vmatmul.mubr.f32.gmra.mxu0 %v398
    %v1466 = vpop.f32.mrf.mxu0
    %v1467 = vadd.f32 0.0, %v1466
    %v1468 = vpop.f32.mrf.mxu0
    %v1469 = vadd.f32 0.0, %v1468
    %1470 = vmatprep.mubr.f32.mxu0 %v401
    %1471 = vmatmul.mubr.f32.gmra.mxu0 %v400
    %v1472 = vpop.f32.mrf.mxu0
    %v1473 = vadd.f32 0.0, %v1472
    %v1474 = vpop.f32.mrf.mxu0
    %v1475 = vadd.f32 0.0, %v1474
    %1476 = vmatprep.mubr.f32.mxu0 %v403
    %1477 = vmatmul.mubr.f32.gmra.mxu0 %v402
    %v1478 = vpop.f32.mrf.mxu0
    %v1479 = vadd.f32 0.0, %v1478
    %v1480 = vpop.f32.mrf.mxu0
    %v1481 = vadd.f32 0.0, %v1480
    %1482 = vmatprep.mubr.f32.mxu0 %v405
    %1483 = vmatmul.mubr.f32.gmra.mxu0 %v404
    %v1484 = vpop.f32.mrf.mxu0
    %v1485 = vadd.f32 0.0, %v1484
    %v1486 = vpop.f32.mrf.mxu0
    %v1487 = vadd.f32 0.0, %v1486
    %1488 = vmatprep.mubr.f32.mxu0 %v407
    %1489 = vmatmul.mubr.f32.gmra.mxu0 %v406
    %v1490 = vpop.f32.mrf.mxu0
    %v1491 = vadd.f32 0.0, %v1490
    %v1492 = vpop.f32.mrf.mxu0
    %v1493 = vadd.f32 0.0, %v1492
    %1494 = vmatprep.mubr.f32.mxu0 %v409
    %1495 = vmatmul.mubr.f32.gmra.mxu0 %v408
    %v1496 = vpop.f32.mrf.mxu0
    %v1497 = vadd.f32 0.0, %v1496
    %v1498 = vpop.f32.mrf.mxu0
    %v1499 = vadd.f32 0.0, %v1498
    %1500 = vmatprep.mubr.f32.mxu0 %v411
    %1501 = vmatmul.mubr.f32.gmra.mxu0 %v410
    %v1502 = vpop.f32.mrf.mxu0
    %v1503 = vadd.f32 0.0, %v1502
    %v1504 = vpop.f32.mrf.mxu0
    %v1505 = vadd.f32 0.0, %v1504
    %1506 = vmatprep.mubr.f32.mxu0 %v413
    %1507 = vmatmul.mubr.f32.gmra.mxu0 %v412
    %v1508 = vpop.f32.mrf.mxu0
    %v1509 = vadd.f32 0.0, %v1508
    %v1510 = vpop.f32.mrf.mxu0
    %v1511 = vadd.f32 0.0, %v1510
    %1512 = vmatprep.mubr.f32.mxu0 %v415
    %1513 = vmatmul.mubr.f32.gmra.mxu0 %v414
    %v1514 = vpop.f32.mrf.mxu0
    %v1515 = vadd.f32 0.0, %v1514
    %v1516 = vpop.f32.mrf.mxu0
    %v1517 = vadd.f32 0.0, %v1516
    %1518 = vmatprep.mubr.f32.mxu0 %v417
    %1519 = vmatmul.mubr.f32.gmra.mxu0 %v416
    %v1520 = vpop.f32.mrf.mxu0
    %v1521 = vadd.f32 0.0, %v1520
    %v1522 = vpop.f32.mrf.mxu0
    %v1523 = vadd.f32 0.0, %v1522
    %1524 = vmatprep.mubr.f32.mxu0 %v419
    %1525 = vmatmul.mubr.f32.gmra.mxu0 %v418
    %v1526 = vpop.f32.mrf.mxu0
    %v1527 = vadd.f32 0.0, %v1526
    %v1528 = vpop.f32.mrf.mxu0
    %v1529 = vadd.f32 0.0, %v1528
    %1530 = vmatprep.mubr.f32.mxu0 %v421
    %1531 = vmatmul.mubr.f32.gmra.mxu0 %v420
    %v1532 = vpop.f32.mrf.mxu0
    %v1533 = vadd.f32 0.0, %v1532
    %v1534 = vpop.f32.mrf.mxu0
    %v1535 = vadd.f32 0.0, %v1534
    %1536 = vmatprep.mubr.f32.mxu0 %v423
    %1537 = vmatmul.mubr.f32.gmra.mxu0 %v422
    %v1538 = vpop.f32.mrf.mxu0
    %v1539 = vadd.f32 0.0, %v1538
    %v1540 = vpop.f32.mrf.mxu0
    %v1541 = vadd.f32 0.0, %v1540
    %1542 = vmatprep.mubr.f32.mxu0 %v425
    %1543 = vmatmul.mubr.f32.gmra.mxu0 %v424
    %v1544 = vpop.f32.mrf.mxu0
    %v1545 = vadd.f32 0.0, %v1544
    %v1546 = vpop.f32.mrf.mxu0
    %v1547 = vadd.f32 0.0, %v1546
    %1548 = vmatprep.mubr.f32.mxu0 %v427
    %1549 = vmatmul.mubr.f32.gmra.mxu0 %v426
    %v1550 = vpop.f32.mrf.mxu0
    %v1551 = vadd.f32 0.0, %v1550
    %v1552 = vpop.f32.mrf.mxu0
    %v1553 = vadd.f32 0.0, %v1552
    %1554 = vmatprep.mubr.f32.mxu0 %v429
    %1555 = vmatmul.mubr.f32.gmra.mxu0 %v428
    %v1556 = vpop.f32.mrf.mxu0
    %v1557 = vadd.f32 0.0, %v1556
    %v1558 = vpop.f32.mrf.mxu0
    %v1559 = vadd.f32 0.0, %v1558
    %1560 = vmatprep.mubr.f32.mxu0 %v431
    %1561 = vmatmul.mubr.f32.gmra.mxu0 %v430
    %v1562 = vpop.f32.mrf.mxu0
    %v1563 = vadd.f32 0.0, %v1562
    %v1564 = vpop.f32.mrf.mxu0
    %v1565 = vadd.f32 0.0, %v1564
    %1566 = vmatprep.mubr.f32.mxu0 %v433
    %1567 = vmatmul.mubr.f32.gmra.mxu0 %v432
    %v1568 = vpop.f32.mrf.mxu0
    %v1569 = vadd.f32 0.0, %v1568
    %v1570 = vpop.f32.mrf.mxu0
    %v1571 = vadd.f32 0.0, %v1570
    %1572 = vmatprep.mubr.f32.mxu0 %v435
    %1573 = vmatmul.mubr.f32.gmra.mxu0 %v434
    %v1574 = vpop.f32.mrf.mxu0
    %v1575 = vadd.f32 0.0, %v1574
    %v1576 = vpop.f32.mrf.mxu0
    %v1577 = vadd.f32 0.0, %v1576
    %1578 = vmatprep.mubr.f32.mxu0 %v437
    %1579 = vmatmul.mubr.f32.gmra.mxu0 %v436
    %v1580 = vpop.f32.mrf.mxu0
    %v1581 = vadd.f32 0.0, %v1580
    %v1582 = vpop.f32.mrf.mxu0
    %v1583 = vadd.f32 0.0, %v1582
    %1584 = vmatprep.mubr.f32.mxu0 %v439
    %1585 = vmatmul.mubr.f32.gmra.mxu0 %v438
    %v1586 = vpop.f32.mrf.mxu0
    %v1587 = vadd.f32 0.0, %v1586
    %v1588 = vpop.f32.mrf.mxu0
    %v1589 = vadd.f32 0.0, %v1588
    %1590 = vmatprep.mubr.f32.mxu0 %v441
    %1591 = vmatmul.mubr.f32.gmra.mxu0 %v440
    %v1592 = vpop.f32.mrf.mxu0
    %v1593 = vadd.f32 0.0, %v1592
    %v1594 = vpop.f32.mrf.mxu0
    %v1595 = vadd.f32 0.0, %v1594
    %1596 = vdwg.mxu0
    %v1597 = vmax.f32 %v893, %v895
    %1598 = vmax.xlane.f32.xlu0 %v1597
    %v1599 = vpop.xlane.xlu0 %1598
    %v1600 = vmax.f32 %v899, %v901
    %1601 = vmax.xlane.f32.xlu0 %v1600
    %v1602 = vpop.xlane.xlu0 %1601
    %v1603 = vmax.f32 %v905, %v907
    %1604 = vmax.xlane.f32.xlu0 %v1603
    %v1605 = vpop.xlane.xlu0 %1604
    %v1606 = vmax.f32 %v911, %v913
    %1607 = vmax.xlane.f32.xlu0 %v1606
    %v1608 = vpop.xlane.xlu0 %1607
    %v1609 = vmax.f32 %v917, %v919
    %1610 = vmax.xlane.f32.xlu0 %v1609
    %v1611 = vpop.xlane.xlu0 %1610
    %v1612 = vmax.f32 %v923, %v925
    %1613 = vmax.xlane.f32.xlu0 %v1612
    %v1614 = vpop.xlane.xlu0 %1613
    %v1615 = vmax.f32 %v929, %v931
    %1616 = vmax.xlane.f32.xlu0 %v1615
    %v1617 = vpop.xlane.xlu0 %1616
    %v1618 = vmax.f32 %v935, %v937
    %1619 = vmax.xlane.f32.xlu0 %v1618
    %v1620 = vpop.xlane.xlu0 %1619
    %v1621 = vmax.f32 %v941, %v943
    %1622 = vmax.xlane.f32.xlu0 %v1621
    %v1623 = vpop.xlane.xlu0 %1622
    %v1624 = vmax.f32 %v947, %v949
    %1625 = vmax.xlane.f32.xlu0 %v1624
    %v1626 = vpop.xlane.xlu0 %1625
    %v1627 = vmax.f32 %v953, %v955
    %1628 = vmax.xlane.f32.xlu0 %v1627
    %v1629 = vpop.xlane.xlu0 %1628
    %v1630 = vmax.f32 %v959, %v961
    %1631 = vmax.xlane.f32.xlu0 %v1630
    %v1632 = vpop.xlane.xlu0 %1631
    %v1633 = vmax.f32 %v965, %v967
    %1634 = vmax.xlane.f32.xlu0 %v1633
    %v1635 = vpop.xlane.xlu0 %1634
    %v1636 = vmax.f32 %v971, %v973
    %1637 = vmax.xlane.f32.xlu0 %v1636
    %v1638 = vpop.xlane.xlu0 %1637
    %v1639 = vmax.f32 %v977, %v979
    %1640 = vmax.xlane.f32.xlu0 %v1639
    %v1641 = vpop.xlane.xlu0 %1640
    %v1642 = vmax.f32 %v983, %v985
    %1643 = vmax.xlane.f32.xlu0 %v1642
    %v1644 = vpop.xlane.xlu0 %1643
    %v1645 = vmax.f32 %v989, %v991
    %1646 = vmax.xlane.f32.xlu0 %v1645
    %v1647 = vpop.xlane.xlu0 %1646
    %v1648 = vmax.f32 %v995, %v997
    %1649 = vmax.xlane.f32.xlu0 %v1648
    %v1650 = vpop.xlane.xlu0 %1649
    %v1651 = vmax.f32 %v1001, %v1003
    %1652 = vmax.xlane.f32.xlu0 %v1651
    %v1653 = vpop.xlane.xlu0 %1652
    %v1654 = vmax.f32 %v1007, %v1009
    %1655 = vmax.xlane.f32.xlu0 %v1654
    %v1656 = vpop.xlane.xlu0 %1655
    %v1657 = vmax.f32 %v1013, %v1015
    %1658 = vmax.xlane.f32.xlu0 %v1657
    %v1659 = vpop.xlane.xlu0 %1658
    %v1660 = vmax.f32 %v1019, %v1021
    %1661 = vmax.xlane.f32.xlu0 %v1660
    %v1662 = vpop.xlane.xlu0 %1661
    %v1663 = vmax.f32 %v1025, %v1027
    %1664 = vmax.xlane.f32.xlu0 %v1663
    %v1665 = vpop.xlane.xlu0 %1664
    %v1666 = vmax.f32 %v1031, %v1033
    %1667 = vmax.xlane.f32.xlu0 %v1666
    %v1668 = vpop.xlane.xlu0 %1667
    %v1669 = vmax.f32 %v1037, %v1039
    %1670 = vmax.xlane.f32.xlu0 %v1669
    %v1671 = vpop.xlane.xlu0 %1670
    %v1672 = vmax.f32 %v1043, %v1045
    %1673 = vmax.xlane.f32.xlu0 %v1672
    %v1674 = vpop.xlane.xlu0 %1673
    %v1675 = vmax.f32 %v1049, %v1051
    %1676 = vmax.xlane.f32.xlu0 %v1675
    %v1677 = vpop.xlane.xlu0 %1676
    %v1678 = vmax.f32 %v1055, %v1057
    %1679 = vmax.xlane.f32.xlu0 %v1678
    %v1680 = vpop.xlane.xlu0 %1679
    %v1681 = vmax.f32 %v1061, %v1063
    %1682 = vmax.xlane.f32.xlu0 %v1681
    %v1683 = vpop.xlane.xlu0 %1682
    %v1684 = vmax.f32 %v1067, %v1069
    %1685 = vmax.xlane.f32.xlu0 %v1684
    %v1686 = vpop.xlane.xlu0 %1685
    %v1687 = vmax.f32 %v1073, %v1075
    %1688 = vmax.xlane.f32.xlu0 %v1687
    %v1689 = vpop.xlane.xlu0 %1688
    %v1690 = vmax.f32 %v1079, %v1081
    %1691 = vmax.xlane.f32.xlu0 %v1690
    %v1692 = vpop.xlane.xlu0 %1691
    %v1693 = vmax.f32 %v1150, %v1152
    %1694 = vmax.xlane.f32.xlu0 %v1693
    %v1695 = vpop.xlane.xlu0 %1694
    %v1696 = vmax.f32 %v1156, %v1158
    %1697 = vmax.xlane.f32.xlu0 %v1696
    %v1698 = vpop.xlane.xlu0 %1697
    %v1699 = vmax.f32 %v1162, %v1164
    %1700 = vmax.xlane.f32.xlu0 %v1699
    %v1701 = vpop.xlane.xlu0 %1700
    %v1702 = vmax.f32 %v1168, %v1170
    %1703 = vmax.xlane.f32.xlu0 %v1702
    %v1704 = vpop.xlane.xlu0 %1703
    %v1705 = vmax.f32 %v1174, %v1176
    %1706 = vmax.xlane.f32.xlu0 %v1705
    %v1707 = vpop.xlane.xlu0 %1706
    %v1708 = vmax.f32 %v1180, %v1182
    %1709 = vmax.xlane.f32.xlu0 %v1708
    %v1710 = vpop.xlane.xlu0 %1709
    %v1711 = vmax.f32 %v1186, %v1188
    %1712 = vmax.xlane.f32.xlu0 %v1711
    %v1713 = vpop.xlane.xlu0 %1712
    %v1714 = vmax.f32 %v1192, %v1194
    %1715 = vmax.xlane.f32.xlu0 %v1714
    %v1716 = vpop.xlane.xlu0 %1715
    %v1717 = vmax.f32 %v1198, %v1200
    %1718 = vmax.xlane.f32.xlu0 %v1717
    %v1719 = vpop.xlane.xlu0 %1718
    %v1720 = vmax.f32 %v1204, %v1206
    %1721 = vmax.xlane.f32.xlu0 %v1720
    %v1722 = vpop.xlane.xlu0 %1721
    %v1723 = vmax.f32 %v1210, %v1212
    %1724 = vmax.xlane.f32.xlu0 %v1723
    %v1725 = vpop.xlane.xlu0 %1724
    %v1726 = vmax.f32 %v1216, %v1218
    %1727 = vmax.xlane.f32.xlu0 %v1726
    %v1728 = vpop.xlane.xlu0 %1727
    %v1729 = vmax.f32 %v1222, %v1224
    %1730 = vmax.xlane.f32.xlu0 %v1729
    %v1731 = vpop.xlane.xlu0 %1730
    %v1732 = vmax.f32 %v1228, %v1230
    %1733 = vmax.xlane.f32.xlu0 %v1732
    %v1734 = vpop.xlane.xlu0 %1733
    %v1735 = vmax.f32 %v1234, %v1236
    %1736 = vmax.xlane.f32.xlu0 %v1735
    %v1737 = vpop.xlane.xlu0 %1736
    %v1738 = vmax.f32 %v1240, %v1242
    %1739 = vmax.xlane.f32.xlu0 %v1738
    %v1740 = vpop.xlane.xlu0 %1739
    %v1741 = vmax.f32 %v1246, %v1248
    %1742 = vmax.xlane.f32.xlu0 %v1741
    %v1743 = vpop.xlane.xlu0 %1742
    %v1744 = vmax.f32 %v1252, %v1254
    %1745 = vmax.xlane.f32.xlu0 %v1744
    %v1746 = vpop.xlane.xlu0 %1745
    %v1747 = vmax.f32 %v1258, %v1260
    %1748 = vmax.xlane.f32.xlu0 %v1747
    %v1749 = vpop.xlane.xlu0 %1748
    %v1750 = vmax.f32 %v1264, %v1266
    %1751 = vmax.xlane.f32.xlu0 %v1750
    %v1752 = vpop.xlane.xlu0 %1751
    %v1753 = vmax.f32 %v1270, %v1272
    %1754 = vmax.xlane.f32.xlu0 %v1753
    %v1755 = vpop.xlane.xlu0 %1754
    %v1756 = vmax.f32 %v1276, %v1278
    %1757 = vmax.xlane.f32.xlu0 %v1756
    %v1758 = vpop.xlane.xlu0 %1757
    %v1759 = vmax.f32 %v1282, %v1284
    %1760 = vmax.xlane.f32.xlu0 %v1759
    %v1761 = vpop.xlane.xlu0 %1760
    %v1762 = vmax.f32 %v1288, %v1290
    %1763 = vmax.xlane.f32.xlu0 %v1762
    %v1764 = vpop.xlane.xlu0 %1763
    %v1765 = vmax.f32 %v1294, %v1296
    %1766 = vmax.xlane.f32.xlu0 %v1765
    %v1767 = vpop.xlane.xlu0 %1766
    %v1768 = vmax.f32 %v1300, %v1302
    %1769 = vmax.xlane.f32.xlu0 %v1768
    %v1770 = vpop.xlane.xlu0 %1769
    %v1771 = vmax.f32 %v1306, %v1308
    %1772 = vmax.xlane.f32.xlu0 %v1771
    %v1773 = vpop.xlane.xlu0 %1772
    %v1774 = vmax.f32 %v1312, %v1314
    %1775 = vmax.xlane.f32.xlu0 %v1774
    %v1776 = vpop.xlane.xlu0 %1775
    %v1777 = vmax.f32 %v1318, %v1320
    %1778 = vmax.xlane.f32.xlu0 %v1777
    %v1779 = vpop.xlane.xlu0 %1778
    %v1780 = vmax.f32 %v1324, %v1326
    %1781 = vmax.xlane.f32.xlu0 %v1780
    %v1782 = vpop.xlane.xlu0 %1781
    %v1783 = vmax.f32 %v1330, %v1332
    %1784 = vmax.xlane.f32.xlu0 %v1783
    %v1785 = vpop.xlane.xlu0 %1784
    %v1786 = vmax.f32 %v1336, %v1338
    %1787 = vmax.xlane.f32.xlu0 %v1786
    %v1788 = vpop.xlane.xlu0 %1787
    %v1789 = vmax.f32 %v1407, %v1409
    %1790 = vmax.xlane.f32.xlu0 %v1789
    %v1791 = vpop.xlane.xlu0 %1790
    %v1792 = vmax.f32 %v1413, %v1415
    %1793 = vmax.xlane.f32.xlu0 %v1792
    %v1794 = vpop.xlane.xlu0 %1793
    %v1795 = vmax.f32 %v1419, %v1421
    %1796 = vmax.xlane.f32.xlu0 %v1795
    %v1797 = vpop.xlane.xlu0 %1796
    %v1798 = vmax.f32 %v1425, %v1427
    %1799 = vmax.xlane.f32.xlu0 %v1798
    %v1800 = vpop.xlane.xlu0 %1799
    %v1801 = vmax.f32 %v1431, %v1433
    %1802 = vmax.xlane.f32.xlu0 %v1801
    %v1803 = vpop.xlane.xlu0 %1802
    %v1804 = vmax.f32 %v1437, %v1439
    %1805 = vmax.xlane.f32.xlu0 %v1804
    %v1806 = vpop.xlane.xlu0 %1805
    %v1807 = vmax.f32 %v1443, %v1445
    %1808 = vmax.xlane.f32.xlu0 %v1807
    %v1809 = vpop.xlane.xlu0 %1808
    %v1810 = vmax.f32 %v1449, %v1451
    %1811 = vmax.xlane.f32.xlu0 %v1810
    %v1812 = vpop.xlane.xlu0 %1811
    %v1813 = vmax.f32 %v1455, %v1457
    %1814 = vmax.xlane.f32.xlu0 %v1813
    %v1815 = vpop.xlane.xlu0 %1814
    %v1816 = vmax.f32 %v1461, %v1463
    %1817 = vmax.xlane.f32.xlu0 %v1816
    %v1818 = vpop.xlane.xlu0 %1817
    %v1819 = vmax.f32 %v1467, %v1469
    %1820 = vmax.xlane.f32.xlu0 %v1819
    %v1821 = vpop.xlane.xlu0 %1820
    %v1822 = vmax.f32 %v1473, %v1475
    %1823 = vmax.xlane.f32.xlu0 %v1822
    %v1824 = vpop.xlane.xlu0 %1823
    %v1825 = vmax.f32 %v1479, %v1481
    %1826 = vmax.xlane.f32.xlu0 %v1825
    %v1827 = vpop.xlane.xlu0 %1826
    %v1828 = vmax.f32 %v1485, %v1487
    %1829 = vmax.xlane.f32.xlu0 %v1828
    %v1830 = vpop.xlane.xlu0 %1829
    %v1831 = vmax.f32 %v1491, %v1493
    %1832 = vmax.xlane.f32.xlu0 %v1831
    %v1833 = vpop.xlane.xlu0 %1832
    %v1834 = vmax.f32 %v1497, %v1499
    %1835 = vmax.xlane.f32.xlu0 %v1834
    %v1836 = vpop.xlane.xlu0 %1835
    %v1837 = vmax.f32 %v1503, %v1505
    %1838 = vmax.xlane.f32.xlu0 %v1837
    %v1839 = vpop.xlane.xlu0 %1838
    %v1840 = vmax.f32 %v1509, %v1511
    %1841 = vmax.xlane.f32.xlu0 %v1840
    %v1842 = vpop.xlane.xlu0 %1841
    %v1843 = vmax.f32 %v1515, %v1517
    %1844 = vmax.xlane.f32.xlu0 %v1843
    %v1845 = vpop.xlane.xlu0 %1844
    %v1846 = vmax.f32 %v1521, %v1523
    %1847 = vmax.xlane.f32.xlu0 %v1846
    %v1848 = vpop.xlane.xlu0 %1847
    %v1849 = vmax.f32 %v1527, %v1529
    %1850 = vmax.xlane.f32.xlu0 %v1849
    %v1851 = vpop.xlane.xlu0 %1850
    %v1852 = vmax.f32 %v1533, %v1535
    %1853 = vmax.xlane.f32.xlu0 %v1852
    %v1854 = vpop.xlane.xlu0 %1853
    %v1855 = vmax.f32 %v1539, %v1541
    %1856 = vmax.xlane.f32.xlu0 %v1855
    %v1857 = vpop.xlane.xlu0 %1856
    %v1858 = vmax.f32 %v1545, %v1547
    %1859 = vmax.xlane.f32.xlu0 %v1858
    %v1860 = vpop.xlane.xlu0 %1859
    %v1861 = vmax.f32 %v1551, %v1553
    %1862 = vmax.xlane.f32.xlu0 %v1861
    %v1863 = vpop.xlane.xlu0 %1862
    %v1864 = vmax.f32 %v1557, %v1559
    %1865 = vmax.xlane.f32.xlu0 %v1864
    %v1866 = vpop.xlane.xlu0 %1865
    %v1867 = vmax.f32 %v1563, %v1565
    %1868 = vmax.xlane.f32.xlu0 %v1867
    %v1869 = vpop.xlane.xlu0 %1868
    %v1870 = vmax.f32 %v1569, %v1571
    %1871 = vmax.xlane.f32.xlu0 %v1870
    %v1872 = vpop.xlane.xlu0 %1871
    %v1873 = vmax.f32 %v1575, %v1577
    %1874 = vmax.xlane.f32.xlu0 %v1873
    %v1875 = vpop.xlane.xlu0 %1874
    %v1876 = vmax.f32 %v1581, %v1583
    %1877 = vmax.xlane.f32.xlu0 %v1876
    %v1878 = vpop.xlane.xlu0 %1877
    %v1879 = vmax.f32 %v1587, %v1589
    %1880 = vmax.xlane.f32.xlu0 %v1879
    %v1881 = vpop.xlane.xlu0 %1880
    %v1882 = vmax.f32 %v1593, %v1595
    %1883 = vmax.xlane.f32.xlu0 %v1882
    %v1884 = vpop.xlane.xlu0 %1883
    %v1885 = vsub.f32 %v893, %v1599
    %v1886 = vsub.f32 %v895, %v1599
    %v1887 = vsub.f32 %v899, %v1602
    %v1888 = vsub.f32 %v901, %v1602
    %v1889 = vsub.f32 %v905, %v1605
    %v1890 = vsub.f32 %v907, %v1605
    %v1891 = vsub.f32 %v911, %v1608
    %v1892 = vsub.f32 %v913, %v1608
    %v1893 = vsub.f32 %v917, %v1611
    %v1894 = vsub.f32 %v919, %v1611
    %v1895 = vsub.f32 %v923, %v1614
    %v1896 = vsub.f32 %v925, %v1614
    %v1897 = vsub.f32 %v929, %v1617
    %v1898 = vsub.f32 %v931, %v1617
    %v1899 = vsub.f32 %v935, %v1620
    %v1900 = vsub.f32 %v937, %v1620
    %v1901 = vsub.f32 %v941, %v1623
    %v1902 = vsub.f32 %v943, %v1623
    %v1903 = vsub.f32 %v947, %v1626
    %v1904 = vsub.f32 %v949, %v1626
    %v1905 = vsub.f32 %v953, %v1629
    %v1906 = vsub.f32 %v955, %v1629
    %v1907 = vsub.f32 %v959, %v1632
    %v1908 = vsub.f32 %v961, %v1632
    %v1909 = vsub.f32 %v965, %v1635
    %v1910 = vsub.f32 %v967, %v1635
    %v1911 = vsub.f32 %v971, %v1638
    %v1912 = vsub.f32 %v973, %v1638
    %v1913 = vsub.f32 %v977, %v1641
    %v1914 = vsub.f32 %v979, %v1641
    %v1915 = vsub.f32 %v983, %v1644
    %v1916 = vsub.f32 %v985, %v1644
    %v1917 = vsub.f32 %v989, %v1647
    %v1918 = vsub.f32 %v991, %v1647
    %v1919 = vsub.f32 %v995, %v1650
    %v1920 = vsub.f32 %v997, %v1650
    %v1921 = vsub.f32 %v1001, %v1653
    %v1922 = vsub.f32 %v1003, %v1653
    %v1923 = vsub.f32 %v1007, %v1656
    %v1924 = vsub.f32 %v1009, %v1656
    %v1925 = vsub.f32 %v1013, %v1659
    %v1926 = vsub.f32 %v1015, %v1659
    %v1927 = vsub.f32 %v1019, %v1662
    %v1928 = vsub.f32 %v1021, %v1662
    %v1929 = vsub.f32 %v1025, %v1665
    %v1930 = vsub.f32 %v1027, %v1665
    %v1931 = vsub.f32 %v1031, %v1668
    %v1932 = vsub.f32 %v1033, %v1668
    %v1933 = vsub.f32 %v1037, %v1671
    %v1934 = vsub.f32 %v1039, %v1671
    %v1935 = vsub.f32 %v1043, %v1674
    %v1936 = vsub.f32 %v1045, %v1674
    %v1937 = vsub.f32 %v1049, %v1677
    %v1938 = vsub.f32 %v1051, %v1677
    %v1939 = vsub.f32 %v1055, %v1680
    %v1940 = vsub.f32 %v1057, %v1680
    %v1941 = vsub.f32 %v1061, %v1683
    %v1942 = vsub.f32 %v1063, %v1683
    %v1943 = vsub.f32 %v1067, %v1686
    %v1944 = vsub.f32 %v1069, %v1686
    %v1945 = vsub.f32 %v1073, %v1689
    %v1946 = vsub.f32 %v1075, %v1689
    %v1947 = vsub.f32 %v1079, %v1692
    %v1948 = vsub.f32 %v1081, %v1692
    %v1949 = vsub.f32 %v1150, %v1695
    %v1950 = vsub.f32 %v1152, %v1695
    %v1951 = vsub.f32 %v1156, %v1698
    %v1952 = vsub.f32 %v1158, %v1698
    %v1953 = vsub.f32 %v1162, %v1701
    %v1954 = vsub.f32 %v1164, %v1701
    %v1955 = vsub.f32 %v1168, %v1704
    %v1956 = vsub.f32 %v1170, %v1704
    %v1957 = vsub.f32 %v1174, %v1707
    %v1958 = vsub.f32 %v1176, %v1707
    %v1959 = vsub.f32 %v1180, %v1710
    %v1960 = vsub.f32 %v1182, %v1710
    %v1961 = vsub.f32 %v1186, %v1713
    %v1962 = vsub.f32 %v1188, %v1713
    %v1963 = vsub.f32 %v1192, %v1716
    %v1964 = vsub.f32 %v1194, %v1716
    %v1965 = vsub.f32 %v1198, %v1719
    %v1966 = vsub.f32 %v1200, %v1719
    %v1967 = vsub.f32 %v1204, %v1722
    %v1968 = vsub.f32 %v1206, %v1722
    %v1969 = vsub.f32 %v1210, %v1725
    %v1970 = vsub.f32 %v1212, %v1725
    %v1971 = vsub.f32 %v1216, %v1728
    %v1972 = vsub.f32 %v1218, %v1728
    %v1973 = vsub.f32 %v1222, %v1731
    %v1974 = vsub.f32 %v1224, %v1731
    %v1975 = vsub.f32 %v1228, %v1734
    %v1976 = vsub.f32 %v1230, %v1734
    %v1977 = vsub.f32 %v1234, %v1737
    %v1978 = vsub.f32 %v1236, %v1737
    %v1979 = vsub.f32 %v1240, %v1740
    %v1980 = vsub.f32 %v1242, %v1740
    %v1981 = vsub.f32 %v1246, %v1743
    %v1982 = vsub.f32 %v1248, %v1743
    %v1983 = vsub.f32 %v1252, %v1746
    %v1984 = vsub.f32 %v1254, %v1746
    %v1985 = vsub.f32 %v1258, %v1749
    %v1986 = vsub.f32 %v1260, %v1749
    %v1987 = vsub.f32 %v1264, %v1752
    %v1988 = vsub.f32 %v1266, %v1752
    %v1989 = vsub.f32 %v1270, %v1755
    %v1990 = vsub.f32 %v1272, %v1755
    %v1991 = vsub.f32 %v1276, %v1758
    %v1992 = vsub.f32 %v1278, %v1758
    %v1993 = vsub.f32 %v1282, %v1761
    %v1994 = vsub.f32 %v1284, %v1761
    %v1995 = vsub.f32 %v1288, %v1764
    %v1996 = vsub.f32 %v1290, %v1764
    %v1997 = vsub.f32 %v1294, %v1767
    %v1998 = vsub.f32 %v1296, %v1767
    %v1999 = vsub.f32 %v1300, %v1770
    %v2000 = vsub.f32 %v1302, %v1770
    %v2001 = vsub.f32 %v1306, %v1773
    %v2002 = vsub.f32 %v1308, %v1773
    %v2003 = vsub.f32 %v1312, %v1776
    %v2004 = vsub.f32 %v1314, %v1776
    %v2005 = vsub.f32 %v1318, %v1779
    %v2006 = vsub.f32 %v1320, %v1779
    %v2007 = vsub.f32 %v1324, %v1782
    %v2008 = vsub.f32 %v1326, %v1782
    %v2009 = vsub.f32 %v1330, %v1785
    %v2010 = vsub.f32 %v1332, %v1785
    %v2011 = vsub.f32 %v1336, %v1788
    %v2012 = vsub.f32 %v1338, %v1788
    %v2013 = vsub.f32 %v1407, %v1791
    %v2014 = vsub.f32 %v1409, %v1791
    %v2015 = vsub.f32 %v1413, %v1794
    %v2016 = vsub.f32 %v1415, %v1794
    %v2017 = vsub.f32 %v1419, %v1797
    %v2018 = vsub.f32 %v1421, %v1797
    %v2019 = vsub.f32 %v1425, %v1800
    %v2020 = vsub.f32 %v1427, %v1800
    %v2021 = vsub.f32 %v1431, %v1803
    %v2022 = vsub.f32 %v1433, %v1803
    %v2023 = vsub.f32 %v1437, %v1806
    %v2024 = vsub.f32 %v1439, %v1806
    %v2025 = vsub.f32 %v1443, %v1809
    %v2026 = vsub.f32 %v1445, %v1809
    %v2027 = vsub.f32 %v1449, %v1812
    %v2028 = vsub.f32 %v1451, %v1812
    %v2029 = vsub.f32 %v1455, %v1815
    %v2030 = vsub.f32 %v1457, %v1815
    %v2031 = vsub.f32 %v1461, %v1818
    %v2032 = vsub.f32 %v1463, %v1818
    %v2033 = vsub.f32 %v1467, %v1821
    %v2034 = vsub.f32 %v1469, %v1821
    %v2035 = vsub.f32 %v1473, %v1824
    %v2036 = vsub.f32 %v1475, %v1824
    %v2037 = vsub.f32 %v1479, %v1827
    %v2038 = vsub.f32 %v1481, %v1827
    %v2039 = vsub.f32 %v1485, %v1830
    %v2040 = vsub.f32 %v1487, %v1830
    %v2041 = vsub.f32 %v1491, %v1833
    %v2042 = vsub.f32 %v1493, %v1833
    %v2043 = vsub.f32 %v1497, %v1836
    %v2044 = vsub.f32 %v1499, %v1836
    %v2045 = vsub.f32 %v1503, %v1839
    %v2046 = vsub.f32 %v1505, %v1839
    %v2047 = vsub.f32 %v1509, %v1842
    %v2048 = vsub.f32 %v1511, %v1842
    %v2049 = vsub.f32 %v1515, %v1845
    %v2050 = vsub.f32 %v1517, %v1845
    %v2051 = vsub.f32 %v1521, %v1848
    %v2052 = vsub.f32 %v1523, %v1848
    %v2053 = vsub.f32 %v1527, %v1851
    %v2054 = vsub.f32 %v1529, %v1851
    %v2055 = vsub.f32 %v1533, %v1854
    %v2056 = vsub.f32 %v1535, %v1854
    %v2057 = vsub.f32 %v1539, %v1857
    %v2058 = vsub.f32 %v1541, %v1857
    %v2059 = vsub.f32 %v1545, %v1860
    %v2060 = vsub.f32 %v1547, %v1860
    %v2061 = vsub.f32 %v1551, %v1863
    %v2062 = vsub.f32 %v1553, %v1863
    %v2063 = vsub.f32 %v1557, %v1866
    %v2064 = vsub.f32 %v1559, %v1866
    %v2065 = vsub.f32 %v1563, %v1869
    %v2066 = vsub.f32 %v1565, %v1869
    %v2067 = vsub.f32 %v1569, %v1872
    %v2068 = vsub.f32 %v1571, %v1872
    %v2069 = vsub.f32 %v1575, %v1875
    %v2070 = vsub.f32 %v1577, %v1875
    %v2071 = vsub.f32 %v1581, %v1878
    %v2072 = vsub.f32 %v1583, %v1878
    %v2073 = vsub.f32 %v1587, %v1881
    %v2074 = vsub.f32 %v1589, %v1881
    %v2075 = vsub.f32 %v1593, %v1884
    %v2076 = vsub.f32 %v1595, %v1884
    %v2077 = vmul.f32 %v1885, 1.442695
    %v2078 = vpow.pop %v2077
    %v2079 = vmul.f32 %v1886, 1.442695
    %v2080 = vpow.pop %v2079
    %v2081 = vmul.f32 %v1887, 1.442695
    %v2082 = vpow.pop %v2081
    %v2083 = vmul.f32 %v1888, 1.442695
    %v2084 = vpow.pop %v2083
    %v2085 = vmul.f32 %v1889, 1.442695
    %v2086 = vpow.pop %v2085
    %v2087 = vmul.f32 %v1890, 1.442695
    %v2088 = vpow.pop %v2087
    %v2089 = vmul.f32 %v1891, 1.442695
    %v2090 = vpow.pop %v2089
    %v2091 = vmul.f32 %v1892, 1.442695
    %v2092 = vpow.pop %v2091
    %v2093 = vmul.f32 %v1893, 1.442695
    %v2094 = vpow.pop %v2093
    %v2095 = vmul.f32 %v1894, 1.442695
    %v2096 = vpow.pop %v2095
    %v2097 = vmul.f32 %v1895, 1.442695
    %v2098 = vpow.pop %v2097
    %v2099 = vmul.f32 %v1896, 1.442695
    %v2100 = vpow.pop %v2099
    %v2101 = vmul.f32 %v1897, 1.442695
    %v2102 = vpow.pop %v2101
    %v2103 = vmul.f32 %v1898, 1.442695
    %v2104 = vpow.pop %v2103
    %v2105 = vmul.f32 %v1899, 1.442695
    %v2106 = vpow.pop %v2105
    %v2107 = vmul.f32 %v1900, 1.442695
    %v2108 = vpow.pop %v2107
    %v2109 = vmul.f32 %v1901, 1.442695
    %v2110 = vpow.pop %v2109
    %v2111 = vmul.f32 %v1902, 1.442695
    %v2112 = vpow.pop %v2111
    %v2113 = vmul.f32 %v1903, 1.442695
    %v2114 = vpow.pop %v2113
    %v2115 = vmul.f32 %v1904, 1.442695
    %v2116 = vpow.pop %v2115
    %v2117 = vmul.f32 %v1905, 1.442695
    %v2118 = vpow.pop %v2117
    %v2119 = vmul.f32 %v1906, 1.442695
    %v2120 = vpow.pop %v2119
    %v2121 = vmul.f32 %v1907, 1.442695
    %v2122 = vpow.pop %v2121
    %v2123 = vmul.f32 %v1908, 1.442695
    %v2124 = vpow.pop %v2123
    %v2125 = vmul.f32 %v1909, 1.442695
    %v2126 = vpow.pop %v2125
    %v2127 = vmul.f32 %v1910, 1.442695
    %v2128 = vpow.pop %v2127
    %v2129 = vmul.f32 %v1911, 1.442695
    %v2130 = vpow.pop %v2129
    %v2131 = vmul.f32 %v1912, 1.442695
    %v2132 = vpow.pop %v2131
    %v2133 = vmul.f32 %v1913, 1.442695
    %v2134 = vpow.pop %v2133
    %v2135 = vmul.f32 %v1914, 1.442695
    %v2136 = vpow.pop %v2135
    %v2137 = vmul.f32 %v1915, 1.442695
    %v2138 = vpow.pop %v2137
    %v2139 = vmul.f32 %v1916, 1.442695
    %v2140 = vpow.pop %v2139
    %v2141 = vmul.f32 %v1917, 1.442695
    %v2142 = vpow.pop %v2141
    %v2143 = vmul.f32 %v1918, 1.442695
    %v2144 = vpow.pop %v2143
    %v2145 = vmul.f32 %v1919, 1.442695
    %v2146 = vpow.pop %v2145
    %v2147 = vmul.f32 %v1920, 1.442695
    %v2148 = vpow.pop %v2147
    %v2149 = vmul.f32 %v1921, 1.442695
    %v2150 = vpow.pop %v2149
    %v2151 = vmul.f32 %v1922, 1.442695
    %v2152 = vpow.pop %v2151
    %v2153 = vmul.f32 %v1923, 1.442695
    %v2154 = vpow.pop %v2153
    %v2155 = vmul.f32 %v1924, 1.442695
    %v2156 = vpow.pop %v2155
    %v2157 = vmul.f32 %v1925, 1.442695
    %v2158 = vpow.pop %v2157
    %v2159 = vmul.f32 %v1926, 1.442695
    %v2160 = vpow.pop %v2159
    %v2161 = vmul.f32 %v1927, 1.442695
    %v2162 = vpow.pop %v2161
    %v2163 = vmul.f32 %v1928, 1.442695
    %v2164 = vpow.pop %v2163
    %v2165 = vmul.f32 %v1929, 1.442695
    %v2166 = vpow.pop %v2165
    %v2167 = vmul.f32 %v1930, 1.442695
    %v2168 = vpow.pop %v2167
    %v2169 = vmul.f32 %v1931, 1.442695
    %v2170 = vpow.pop %v2169
    %v2171 = vmul.f32 %v1932, 1.442695
    %v2172 = vpow.pop %v2171
    %v2173 = vmul.f32 %v1933, 1.442695
    %v2174 = vpow.pop %v2173
    %v2175 = vmul.f32 %v1934, 1.442695
    %v2176 = vpow.pop %v2175
    %v2177 = vmul.f32 %v1935, 1.442695
    %v2178 = vpow.pop %v2177
    %v2179 = vmul.f32 %v1936, 1.442695
    %v2180 = vpow.pop %v2179
    %v2181 = vmul.f32 %v1937, 1.442695
    %v2182 = vpow.pop %v2181
    %v2183 = vmul.f32 %v1938, 1.442695
    %v2184 = vpow.pop %v2183
    %v2185 = vmul.f32 %v1939, 1.442695
    %v2186 = vpow.pop %v2185
    %v2187 = vmul.f32 %v1940, 1.442695
    %v2188 = vpow.pop %v2187
    %v2189 = vmul.f32 %v1941, 1.442695
    %v2190 = vpow.pop %v2189
    %v2191 = vmul.f32 %v1942, 1.442695
    %v2192 = vpow.pop %v2191
    %v2193 = vmul.f32 %v1943, 1.442695
    %v2194 = vpow.pop %v2193
    %v2195 = vmul.f32 %v1944, 1.442695
    %v2196 = vpow.pop %v2195
    %v2197 = vmul.f32 %v1945, 1.442695
    %v2198 = vpow.pop %v2197
    %v2199 = vmul.f32 %v1946, 1.442695
    %v2200 = vpow.pop %v2199
    %v2201 = vmul.f32 %v1947, 1.442695
    %v2202 = vpow.pop %v2201
    %v2203 = vmul.f32 %v1948, 1.442695
    %v2204 = vpow.pop %v2203
    %v2205 = vmul.f32 %v1949, 1.442695
    %v2206 = vpow.pop %v2205
    %v2207 = vmul.f32 %v1950, 1.442695
    %v2208 = vpow.pop %v2207
    %v2209 = vmul.f32 %v1951, 1.442695
    %v2210 = vpow.pop %v2209
    %v2211 = vmul.f32 %v1952, 1.442695
    %v2212 = vpow.pop %v2211
    %v2213 = vmul.f32 %v1953, 1.442695
    %v2214 = vpow.pop %v2213
    %v2215 = vmul.f32 %v1954, 1.442695
    %v2216 = vpow.pop %v2215
    %v2217 = vmul.f32 %v1955, 1.442695
    %v2218 = vpow.pop %v2217
    %v2219 = vmul.f32 %v1956, 1.442695
    %v2220 = vpow.pop %v2219
    %v2221 = vmul.f32 %v1957, 1.442695
    %v2222 = vpow.pop %v2221
    %v2223 = vmul.f32 %v1958, 1.442695
    %v2224 = vpow.pop %v2223
    %v2225 = vmul.f32 %v1959, 1.442695
    %v2226 = vpow.pop %v2225
    %v2227 = vmul.f32 %v1960, 1.442695
    %v2228 = vpow.pop %v2227
    %v2229 = vmul.f32 %v1961, 1.442695
    %v2230 = vpow.pop %v2229
    %v2231 = vmul.f32 %v1962, 1.442695
    %v2232 = vpow.pop %v2231
    %v2233 = vmul.f32 %v1963, 1.442695
    %v2234 = vpow.pop %v2233
    %v2235 = vmul.f32 %v1964, 1.442695
    %v2236 = vpow.pop %v2235
    %v2237 = vmul.f32 %v1965, 1.442695
    %v2238 = vpow.pop %v2237
    %v2239 = vmul.f32 %v1966, 1.442695
    %v2240 = vpow.pop %v2239
    %v2241 = vmul.f32 %v1967, 1.442695
    %v2242 = vpow.pop %v2241
    %v2243 = vmul.f32 %v1968, 1.442695
    %v2244 = vpow.pop %v2243
    %v2245 = vmul.f32 %v1969, 1.442695
    %v2246 = vpow.pop %v2245
    %v2247 = vmul.f32 %v1970, 1.442695
    %v2248 = vpow.pop %v2247
    %v2249 = vmul.f32 %v1971, 1.442695
    %v2250 = vpow.pop %v2249
    %v2251 = vmul.f32 %v1972, 1.442695
    %v2252 = vpow.pop %v2251
    %v2253 = vmul.f32 %v1973, 1.442695
    %v2254 = vpow.pop %v2253
    %v2255 = vmul.f32 %v1974, 1.442695
    %v2256 = vpow.pop %v2255
    %v2257 = vmul.f32 %v1975, 1.442695
    %v2258 = vpow.pop %v2257
    %v2259 = vmul.f32 %v1976, 1.442695
    %v2260 = vpow.pop %v2259
    %v2261 = vmul.f32 %v1977, 1.442695
    %v2262 = vpow.pop %v2261
    %v2263 = vmul.f32 %v1978, 1.442695
    %v2264 = vpow.pop %v2263
    %v2265 = vmul.f32 %v1979, 1.442695
    %v2266 = vpow.pop %v2265
    %v2267 = vmul.f32 %v1980, 1.442695
    %v2268 = vpow.pop %v2267
    %v2269 = vmul.f32 %v1981, 1.442695
    %v2270 = vpow.pop %v2269
    %v2271 = vmul.f32 %v1982, 1.442695
    %v2272 = vpow.pop %v2271
    %v2273 = vmul.f32 %v1983, 1.442695
    %v2274 = vpow.pop %v2273
    %v2275 = vmul.f32 %v1984, 1.442695
    %v2276 = vpow.pop %v2275
    %v2277 = vmul.f32 %v1985, 1.442695
    %v2278 = vpow.pop %v2277
    %v2279 = vmul.f32 %v1986, 1.442695
    %v2280 = vpow.pop %v2279
    %v2281 = vmul.f32 %v1987, 1.442695
    %v2282 = vpow.pop %v2281
    %v2283 = vmul.f32 %v1988, 1.442695
    %v2284 = vpow.pop %v2283
    %v2285 = vmul.f32 %v1989, 1.442695
    %v2286 = vpow.pop %v2285
    %v2287 = vmul.f32 %v1990, 1.442695
    %v2288 = vpow.pop %v2287
    %v2289 = vmul.f32 %v1991, 1.442695
    %v2290 = vpow.pop %v2289
    %v2291 = vmul.f32 %v1992, 1.442695
    %v2292 = vpow.pop %v2291
    %v2293 = vmul.f32 %v1993, 1.442695
    %v2294 = vpow.pop %v2293
    %v2295 = vmul.f32 %v1994, 1.442695
    %v2296 = vpow.pop %v2295
    %v2297 = vmul.f32 %v1995, 1.442695
    %v2298 = vpow.pop %v2297
    %v2299 = vmul.f32 %v1996, 1.442695
    %v2300 = vpow.pop %v2299
    %v2301 = vmul.f32 %v1997, 1.442695
    %v2302 = vpow.pop %v2301
    %v2303 = vmul.f32 %v1998, 1.442695
    %v2304 = vpow.pop %v2303
    %v2305 = vmul.f32 %v1999, 1.442695
    %v2306 = vpow.pop %v2305
    %v2307 = vmul.f32 %v2000, 1.442695
    %v2308 = vpow.pop %v2307
    %v2309 = vmul.f32 %v2001, 1.442695
    %v2310 = vpow.pop %v2309
    %v2311 = vmul.f32 %v2002, 1.442695
    %v2312 = vpow.pop %v2311
    %v2313 = vmul.f32 %v2003, 1.442695
    %v2314 = vpow.pop %v2313
    %v2315 = vmul.f32 %v2004, 1.442695
    %v2316 = vpow.pop %v2315
    %v2317 = vmul.f32 %v2005, 1.442695
    %v2318 = vpow.pop %v2317
    %v2319 = vmul.f32 %v2006, 1.442695
    %v2320 = vpow.pop %v2319
    %v2321 = vmul.f32 %v2007, 1.442695
    %v2322 = vpow.pop %v2321
    %v2323 = vmul.f32 %v2008, 1.442695
    %v2324 = vpow.pop %v2323
    %v2325 = vmul.f32 %v2009, 1.442695
    %v2326 = vpow.pop %v2325
    %v2327 = vmul.f32 %v2010, 1.442695
    %v2328 = vpow.pop %v2327
    %v2329 = vmul.f32 %v2011, 1.442695
    %v2330 = vpow.pop %v2329
    %v2331 = vmul.f32 %v2012, 1.442695
    %v2332 = vpow.pop %v2331
    %v2333 = vmul.f32 %v2013, 1.442695
    %v2334 = vpow.pop %v2333
    %v2335 = vmul.f32 %v2014, 1.442695
    %v2336 = vpow.pop %v2335
    %v2337 = vmul.f32 %v2015, 1.442695
    %v2338 = vpow.pop %v2337
    %v2339 = vmul.f32 %v2016, 1.442695
    %v2340 = vpow.pop %v2339
    %v2341 = vmul.f32 %v2017, 1.442695
    %v2342 = vpow.pop %v2341
    %v2343 = vmul.f32 %v2018, 1.442695
    %v2344 = vpow.pop %v2343
    %v2345 = vmul.f32 %v2019, 1.442695
    %v2346 = vpow.pop %v2345
    %v2347 = vmul.f32 %v2020, 1.442695
    %v2348 = vpow.pop %v2347
    %v2349 = vmul.f32 %v2021, 1.442695
    %v2350 = vpow.pop %v2349
    %v2351 = vmul.f32 %v2022, 1.442695
    %v2352 = vpow.pop %v2351
    %v2353 = vmul.f32 %v2023, 1.442695
    %v2354 = vpow.pop %v2353
    %v2355 = vmul.f32 %v2024, 1.442695
    %v2356 = vpow.pop %v2355
    %v2357 = vmul.f32 %v2025, 1.442695
    %v2358 = vpow.pop %v2357
    %v2359 = vmul.f32 %v2026, 1.442695
    %v2360 = vpow.pop %v2359
    %v2361 = vmul.f32 %v2027, 1.442695
    %v2362 = vpow.pop %v2361
    %v2363 = vmul.f32 %v2028, 1.442695
    %v2364 = vpow.pop %v2363
    %v2365 = vmul.f32 %v2029, 1.442695
    %v2366 = vpow.pop %v2365
    %v2367 = vmul.f32 %v2030, 1.442695
    %v2368 = vpow.pop %v2367
    %v2369 = vmul.f32 %v2031, 1.442695
    %v2370 = vpow.pop %v2369
    %v2371 = vmul.f32 %v2032, 1.442695
    %v2372 = vpow.pop %v2371
    %v2373 = vmul.f32 %v2033, 1.442695
    %v2374 = vpow.pop %v2373
    %v2375 = vmul.f32 %v2034, 1.442695
    %v2376 = vpow.pop %v2375
    %v2377 = vmul.f32 %v2035, 1.442695
    %v2378 = vpow.pop %v2377
    %v2379 = vmul.f32 %v2036, 1.442695
    %v2380 = vpow.pop %v2379
    %v2381 = vmul.f32 %v2037, 1.442695
    %v2382 = vpow.pop %v2381
    %v2383 = vmul.f32 %v2038, 1.442695
    %v2384 = vpow.pop %v2383
    %v2385 = vmul.f32 %v2039, 1.442695
    %v2386 = vpow.pop %v2385
    %v2387 = vmul.f32 %v2040, 1.442695
    %v2388 = vpow.pop %v2387
    %v2389 = vmul.f32 %v2041, 1.442695
    %v2390 = vpow.pop %v2389
    %v2391 = vmul.f32 %v2042, 1.442695
    %v2392 = vpow.pop %v2391
    %v2393 = vmul.f32 %v2043, 1.442695
    %v2394 = vpow.pop %v2393
    %v2395 = vmul.f32 %v2044, 1.442695
    %v2396 = vpow.pop %v2395
    %v2397 = vmul.f32 %v2045, 1.442695
    %v2398 = vpow.pop %v2397
    %v2399 = vmul.f32 %v2046, 1.442695
    %v2400 = vpow.pop %v2399
    %v2401 = vmul.f32 %v2047, 1.442695
    %v2402 = vpow.pop %v2401
    %v2403 = vmul.f32 %v2048, 1.442695
    %v2404 = vpow.pop %v2403
    %v2405 = vmul.f32 %v2049, 1.442695
    %v2406 = vpow.pop %v2405
    %v2407 = vmul.f32 %v2050, 1.442695
    %v2408 = vpow.pop %v2407
    %v2409 = vmul.f32 %v2051, 1.442695
    %v2410 = vpow.pop %v2409
    %v2411 = vmul.f32 %v2052, 1.442695
    %v2412 = vpow.pop %v2411
    %v2413 = vmul.f32 %v2053, 1.442695
    %v2414 = vpow.pop %v2413
    %v2415 = vmul.f32 %v2054, 1.442695
    %v2416 = vpow.pop %v2415
    %v2417 = vmul.f32 %v2055, 1.442695
    %v2418 = vpow.pop %v2417
    %v2419 = vmul.f32 %v2056, 1.442695
    %v2420 = vpow.pop %v2419
    %v2421 = vmul.f32 %v2057, 1.442695
    %v2422 = vpow.pop %v2421
    %v2423 = vmul.f32 %v2058, 1.442695
    %v2424 = vpow.pop %v2423
    %v2425 = vmul.f32 %v2059, 1.442695
    %v2426 = vpow.pop %v2425
    %v2427 = vmul.f32 %v2060, 1.442695
    %v2428 = vpow.pop %v2427
    %v2429 = vmul.f32 %v2061, 1.442695
    %v2430 = vpow.pop %v2429
    %v2431 = vmul.f32 %v2062, 1.442695
    %v2432 = vpow.pop %v2431
    %v2433 = vmul.f32 %v2063, 1.442695
    %v2434 = vpow.pop %v2433
    %v2435 = vmul.f32 %v2064, 1.442695
    %v2436 = vpow.pop %v2435
    %v2437 = vmul.f32 %v2065, 1.442695
    %v2438 = vpow.pop %v2437
    %v2439 = vmul.f32 %v2066, 1.442695
    %v2440 = vpow.pop %v2439
    %v2441 = vmul.f32 %v2067, 1.442695
    %v2442 = vpow.pop %v2441
    %v2443 = vmul.f32 %v2068, 1.442695
    %v2444 = vpow.pop %v2443
    %v2445 = vmul.f32 %v2069, 1.442695
    %v2446 = vpow.pop %v2445
    %v2447 = vmul.f32 %v2070, 1.442695
    %v2448 = vpow.pop %v2447
    %v2449 = vmul.f32 %v2071, 1.442695
    %v2450 = vpow.pop %v2449
    %v2451 = vmul.f32 %v2072, 1.442695
    %v2452 = vpow.pop %v2451
    %v2453 = vmul.f32 %v2073, 1.442695
    %v2454 = vpow.pop %v2453
    %v2455 = vmul.f32 %v2074, 1.442695
    %v2456 = vpow.pop %v2455
    %v2457 = vmul.f32 %v2075, 1.442695
    %v2458 = vpow.pop %v2457
    %v2459 = vmul.f32 %v2076, 1.442695
    %v2460 = vpow.pop %v2459
    %v2461 = vadd.f32 %v2078, %v2080
    %2462 = vadd.xlane.f32.xlu0 %v2461
    %v2463 = vpop.xlane.xlu0 %2462
    %v2464 = vadd.f32 %v2082, %v2084
    %2465 = vadd.xlane.f32.xlu0 %v2464
    %v2466 = vpop.xlane.xlu0 %2465
    %v2467 = vadd.f32 %v2086, %v2088
    %2468 = vadd.xlane.f32.xlu0 %v2467
    %v2469 = vpop.xlane.xlu0 %2468
    %v2470 = vadd.f32 %v2090, %v2092
    %2471 = vadd.xlane.f32.xlu0 %v2470
    %v2472 = vpop.xlane.xlu0 %2471
    %v2473 = vadd.f32 %v2094, %v2096
    %2474 = vadd.xlane.f32.xlu0 %v2473
    %v2475 = vpop.xlane.xlu0 %2474
    %v2476 = vadd.f32 %v2098, %v2100
    %2477 = vadd.xlane.f32.xlu0 %v2476
    %v2478 = vpop.xlane.xlu0 %2477
    %v2479 = vadd.f32 %v2102, %v2104
    %2480 = vadd.xlane.f32.xlu0 %v2479
    %v2481 = vpop.xlane.xlu0 %2480
    %v2482 = vadd.f32 %v2106, %v2108
    %2483 = vadd.xlane.f32.xlu0 %v2482
    %v2484 = vpop.xlane.xlu0 %2483
    %v2485 = vadd.f32 %v2110, %v2112
    %2486 = vadd.xlane.f32.xlu0 %v2485
    %v2487 = vpop.xlane.xlu0 %2486
    %v2488 = vadd.f32 %v2114, %v2116
    %2489 = vadd.xlane.f32.xlu0 %v2488
    %v2490 = vpop.xlane.xlu0 %2489
    %v2491 = vadd.f32 %v2118, %v2120
    %2492 = vadd.xlane.f32.xlu0 %v2491
    %v2493 = vpop.xlane.xlu0 %2492
    %v2494 = vadd.f32 %v2122, %v2124
    %2495 = vadd.xlane.f32.xlu0 %v2494
    %v2496 = vpop.xlane.xlu0 %2495
    %v2497 = vadd.f32 %v2126, %v2128
    %2498 = vadd.xlane.f32.xlu0 %v2497
    %v2499 = vpop.xlane.xlu0 %2498
    %v2500 = vadd.f32 %v2130, %v2132
    %2501 = vadd.xlane.f32.xlu0 %v2500
    %v2502 = vpop.xlane.xlu0 %2501
    %v2503 = vadd.f32 %v2134, %v2136
    %2504 = vadd.xlane.f32.xlu0 %v2503
    %v2505 = vpop.xlane.xlu0 %2504
    %v2506 = vadd.f32 %v2138, %v2140
    %2507 = vadd.xlane.f32.xlu0 %v2506
    %v2508 = vpop.xlane.xlu0 %2507
    %v2509 = vadd.f32 %v2142, %v2144
    %2510 = vadd.xlane.f32.xlu0 %v2509
    %v2511 = vpop.xlane.xlu0 %2510
    %v2512 = vadd.f32 %v2146, %v2148
    %2513 = vadd.xlane.f32.xlu0 %v2512
    %v2514 = vpop.xlane.xlu0 %2513
    %v2515 = vadd.f32 %v2150, %v2152
    %2516 = vadd.xlane.f32.xlu0 %v2515
    %v2517 = vpop.xlane.xlu0 %2516
    %v2518 = vadd.f32 %v2154, %v2156
    %2519 = vadd.xlane.f32.xlu0 %v2518
    %v2520 = vpop.xlane.xlu0 %2519
    %v2521 = vadd.f32 %v2158, %v2160
    %2522 = vadd.xlane.f32.xlu0 %v2521
    %v2523 = vpop.xlane.xlu0 %2522
    %v2524 = vadd.f32 %v2162, %v2164
    %2525 = vadd.xlane.f32.xlu0 %v2524
    %v2526 = vpop.xlane.xlu0 %2525
    %v2527 = vadd.f32 %v2166, %v2168
    %2528 = vadd.xlane.f32.xlu0 %v2527
    %v2529 = vpop.xlane.xlu0 %2528
    %v2530 = vadd.f32 %v2170, %v2172
    %2531 = vadd.xlane.f32.xlu0 %v2530
    %v2532 = vpop.xlane.xlu0 %2531
    %v2533 = vadd.f32 %v2174, %v2176
    %2534 = vadd.xlane.f32.xlu0 %v2533
    %v2535 = vpop.xlane.xlu0 %2534
    %v2536 = vadd.f32 %v2178, %v2180
    %2537 = vadd.xlane.f32.xlu0 %v2536
    %v2538 = vpop.xlane.xlu0 %2537
    %v2539 = vadd.f32 %v2182, %v2184
    %2540 = vadd.xlane.f32.xlu0 %v2539
    %v2541 = vpop.xlane.xlu0 %2540
    %v2542 = vadd.f32 %v2186, %v2188
    %2543 = vadd.xlane.f32.xlu0 %v2542
    %v2544 = vpop.xlane.xlu0 %2543
    %v2545 = vadd.f32 %v2190, %v2192
    %2546 = vadd.xlane.f32.xlu0 %v2545
    %v2547 = vpop.xlane.xlu0 %2546
    %v2548 = vadd.f32 %v2194, %v2196
    %2549 = vadd.xlane.f32.xlu0 %v2548
    %v2550 = vpop.xlane.xlu0 %2549
    %v2551 = vadd.f32 %v2198, %v2200
    %2552 = vadd.xlane.f32.xlu0 %v2551
    %v2553 = vpop.xlane.xlu0 %2552
    %v2554 = vadd.f32 %v2202, %v2204
    %2555 = vadd.xlane.f32.xlu0 %v2554
    %v2556 = vpop.xlane.xlu0 %2555
    %v2557 = vadd.f32 %v2206, %v2208
    %2558 = vadd.xlane.f32.xlu0 %v2557
    %v2559 = vpop.xlane.xlu0 %2558
    %v2560 = vadd.f32 %v2210, %v2212
    %2561 = vadd.xlane.f32.xlu0 %v2560
    %v2562 = vpop.xlane.xlu0 %2561
    %v2563 = vadd.f32 %v2214, %v2216
    %2564 = vadd.xlane.f32.xlu0 %v2563
    %v2565 = vpop.xlane.xlu0 %2564
    %v2566 = vadd.f32 %v2218, %v2220
    %2567 = vadd.xlane.f32.xlu0 %v2566
    %v2568 = vpop.xlane.xlu0 %2567
    %v2569 = vadd.f32 %v2222, %v2224
    %2570 = vadd.xlane.f32.xlu0 %v2569
    %v2571 = vpop.xlane.xlu0 %2570
    %v2572 = vadd.f32 %v2226, %v2228
    %2573 = vadd.xlane.f32.xlu0 %v2572
    %v2574 = vpop.xlane.xlu0 %2573
    %v2575 = vadd.f32 %v2230, %v2232
    %2576 = vadd.xlane.f32.xlu0 %v2575
    %v2577 = vpop.xlane.xlu0 %2576
    %v2578 = vadd.f32 %v2234, %v2236
    %2579 = vadd.xlane.f32.xlu0 %v2578
    %v2580 = vpop.xlane.xlu0 %2579
    %v2581 = vadd.f32 %v2238, %v2240
    %2582 = vadd.xlane.f32.xlu0 %v2581
    %v2583 = vpop.xlane.xlu0 %2582
    %v2584 = vadd.f32 %v2242, %v2244
    %2585 = vadd.xlane.f32.xlu0 %v2584
    %v2586 = vpop.xlane.xlu0 %2585
    %v2587 = vadd.f32 %v2246, %v2248
    %2588 = vadd.xlane.f32.xlu0 %v2587
    %v2589 = vpop.xlane.xlu0 %2588
    %v2590 = vadd.f32 %v2250, %v2252
    %2591 = vadd.xlane.f32.xlu0 %v2590
    %v2592 = vpop.xlane.xlu0 %2591
    %v2593 = vadd.f32 %v2254, %v2256
    %2594 = vadd.xlane.f32.xlu0 %v2593
    %v2595 = vpop.xlane.xlu0 %2594
    %v2596 = vadd.f32 %v2258, %v2260
    %2597 = vadd.xlane.f32.xlu0 %v2596
    %v2598 = vpop.xlane.xlu0 %2597
    %v2599 = vadd.f32 %v2262, %v2264
    %2600 = vadd.xlane.f32.xlu0 %v2599
    %v2601 = vpop.xlane.xlu0 %2600
    %v2602 = vadd.f32 %v2266, %v2268
    %2603 = vadd.xlane.f32.xlu0 %v2602
    %v2604 = vpop.xlane.xlu0 %2603
    %v2605 = vadd.f32 %v2270, %v2272
    %2606 = vadd.xlane.f32.xlu0 %v2605
    %v2607 = vpop.xlane.xlu0 %2606
    %v2608 = vadd.f32 %v2274, %v2276
    %2609 = vadd.xlane.f32.xlu0 %v2608
    %v2610 = vpop.xlane.xlu0 %2609
    %v2611 = vadd.f32 %v2278, %v2280
    %2612 = vadd.xlane.f32.xlu0 %v2611
    %v2613 = vpop.xlane.xlu0 %2612
    %v2614 = vadd.f32 %v2282, %v2284
    %2615 = vadd.xlane.f32.xlu0 %v2614
    %v2616 = vpop.xlane.xlu0 %2615
    %v2617 = vadd.f32 %v2286, %v2288
    %2618 = vadd.xlane.f32.xlu0 %v2617
    %v2619 = vpop.xlane.xlu0 %2618
    %v2620 = vadd.f32 %v2290, %v2292
    %2621 = vadd.xlane.f32.xlu0 %v2620
    %v2622 = vpop.xlane.xlu0 %2621
    %v2623 = vadd.f32 %v2294, %v2296
    %2624 = vadd.xlane.f32.xlu0 %v2623
    %v2625 = vpop.xlane.xlu0 %2624
    %v2626 = vadd.f32 %v2298, %v2300
    %2627 = vadd.xlane.f32.xlu0 %v2626
    %v2628 = vpop.xlane.xlu0 %2627
    %v2629 = vadd.f32 %v2302, %v2304
    %2630 = vadd.xlane.f32.xlu0 %v2629
    %v2631 = vpop.xlane.xlu0 %2630
    %v2632 = vadd.f32 %v2306, %v2308
    %2633 = vadd.xlane.f32.xlu0 %v2632
    %v2634 = vpop.xlane.xlu0 %2633
    %v2635 = vadd.f32 %v2310, %v2312
    %2636 = vadd.xlane.f32.xlu0 %v2635
    %v2637 = vpop.xlane.xlu0 %2636
    %v2638 = vadd.f32 %v2314, %v2316
    %2639 = vadd.xlane.f32.xlu0 %v2638
    %v2640 = vpop.xlane.xlu0 %2639
    %v2641 = vadd.f32 %v2318, %v2320
    %2642 = vadd.xlane.f32.xlu0 %v2641
    %v2643 = vpop.xlane.xlu0 %2642
    %v2644 = vadd.f32 %v2322, %v2324
    %2645 = vadd.xlane.f32.xlu0 %v2644
    %v2646 = vpop.xlane.xlu0 %2645
    %v2647 = vadd.f32 %v2326, %v2328
    %2648 = vadd.xlane.f32.xlu0 %v2647
    %v2649 = vpop.xlane.xlu0 %2648
    %v2650 = vadd.f32 %v2330, %v2332
    %2651 = vadd.xlane.f32.xlu0 %v2650
    %v2652 = vpop.xlane.xlu0 %2651
    %v2653 = vadd.f32 %v2334, %v2336
    %2654 = vadd.xlane.f32.xlu0 %v2653
    %v2655 = vpop.xlane.xlu0 %2654
    %v2656 = vadd.f32 %v2338, %v2340
    %2657 = vadd.xlane.f32.xlu0 %v2656
    %v2658 = vpop.xlane.xlu0 %2657
    %v2659 = vadd.f32 %v2342, %v2344
    %2660 = vadd.xlane.f32.xlu0 %v2659
    %v2661 = vpop.xlane.xlu0 %2660
    %v2662 = vadd.f32 %v2346, %v2348
    %2663 = vadd.xlane.f32.xlu0 %v2662
    %v2664 = vpop.xlane.xlu0 %2663
    %v2665 = vadd.f32 %v2350, %v2352
    %2666 = vadd.xlane.f32.xlu0 %v2665
    %v2667 = vpop.xlane.xlu0 %2666
    %v2668 = vadd.f32 %v2354, %v2356
    %2669 = vadd.xlane.f32.xlu0 %v2668
    %v2670 = vpop.xlane.xlu0 %2669
    %v2671 = vadd.f32 %v2358, %v2360
    %2672 = vadd.xlane.f32.xlu0 %v2671
    %v2673 = vpop.xlane.xlu0 %2672
    %v2674 = vadd.f32 %v2362, %v2364
    %2675 = vadd.xlane.f32.xlu0 %v2674
    %v2676 = vpop.xlane.xlu0 %2675
    %v2677 = vadd.f32 %v2366, %v2368
    %2678 = vadd.xlane.f32.xlu0 %v2677
    %v2679 = vpop.xlane.xlu0 %2678
    %v2680 = vadd.f32 %v2370, %v2372
    %2681 = vadd.xlane.f32.xlu0 %v2680
    %v2682 = vpop.xlane.xlu0 %2681
    %v2683 = vadd.f32 %v2374, %v2376
    %2684 = vadd.xlane.f32.xlu0 %v2683
    %v2685 = vpop.xlane.xlu0 %2684
    %v2686 = vadd.f32 %v2378, %v2380
    %2687 = vadd.xlane.f32.xlu0 %v2686
    %v2688 = vpop.xlane.xlu0 %2687
    %v2689 = vadd.f32 %v2382, %v2384
    %2690 = vadd.xlane.f32.xlu0 %v2689
    %v2691 = vpop.xlane.xlu0 %2690
    %v2692 = vadd.f32 %v2386, %v2388
    %2693 = vadd.xlane.f32.xlu0 %v2692
    %v2694 = vpop.xlane.xlu0 %2693
    %v2695 = vadd.f32 %v2390, %v2392
    %2696 = vadd.xlane.f32.xlu0 %v2695
    %v2697 = vpop.xlane.xlu0 %2696
    %v2698 = vadd.f32 %v2394, %v2396
    %2699 = vadd.xlane.f32.xlu0 %v2698
    %v2700 = vpop.xlane.xlu0 %2699
    %v2701 = vadd.f32 %v2398, %v2400
    %2702 = vadd.xlane.f32.xlu0 %v2701
    %v2703 = vpop.xlane.xlu0 %2702
    %v2704 = vadd.f32 %v2402, %v2404
    %2705 = vadd.xlane.f32.xlu0 %v2704
    %v2706 = vpop.xlane.xlu0 %2705
    %v2707 = vadd.f32 %v2406, %v2408
    %2708 = vadd.xlane.f32.xlu0 %v2707
    %v2709 = vpop.xlane.xlu0 %2708
    %v2710 = vadd.f32 %v2410, %v2412
    %2711 = vadd.xlane.f32.xlu0 %v2710
    %v2712 = vpop.xlane.xlu0 %2711
    %v2713 = vadd.f32 %v2414, %v2416
    %2714 = vadd.xlane.f32.xlu0 %v2713
    %v2715 = vpop.xlane.xlu0 %2714
    %v2716 = vadd.f32 %v2418, %v2420
    %2717 = vadd.xlane.f32.xlu0 %v2716
    %v2718 = vpop.xlane.xlu0 %2717
    %v2719 = vadd.f32 %v2422, %v2424
    %2720 = vadd.xlane.f32.xlu0 %v2719
    %v2721 = vpop.xlane.xlu0 %2720
    %v2722 = vadd.f32 %v2426, %v2428
    %2723 = vadd.xlane.f32.xlu0 %v2722
    %v2724 = vpop.xlane.xlu0 %2723
    %v2725 = vadd.f32 %v2430, %v2432
    %2726 = vadd.xlane.f32.xlu0 %v2725
    %v2727 = vpop.xlane.xlu0 %2726
    %v2728 = vadd.f32 %v2434, %v2436
    %2729 = vadd.xlane.f32.xlu0 %v2728
    %v2730 = vpop.xlane.xlu0 %2729
    %v2731 = vadd.f32 %v2438, %v2440
    %2732 = vadd.xlane.f32.xlu0 %v2731
    %v2733 = vpop.xlane.xlu0 %2732
    %v2734 = vadd.f32 %v2442, %v2444
    %2735 = vadd.xlane.f32.xlu0 %v2734
    %v2736 = vpop.xlane.xlu0 %2735
    %v2737 = vadd.f32 %v2446, %v2448
    %2738 = vadd.xlane.f32.xlu0 %v2737
    %v2739 = vpop.xlane.xlu0 %2738
    %v2740 = vadd.f32 %v2450, %v2452
    %2741 = vadd.xlane.f32.xlu0 %v2740
    %v2742 = vpop.xlane.xlu0 %2741
    %v2743 = vadd.f32 %v2454, %v2456
    %2744 = vadd.xlane.f32.xlu0 %v2743
    %v2745 = vpop.xlane.xlu0 %2744
    %v2746 = vadd.f32 %v2458, %v2460
    %2747 = vadd.xlane.f32.xlu0 %v2746
    %v2748 = vpop.xlane.xlu0 %2747
    %v2749 = vrcp.pop %v2463
    %v2750 = vmul.f32 1.0, %v2749
    %v2751 = vrcp.pop %v2466
    %v2752 = vmul.f32 1.0, %v2751
    %v2753 = vrcp.pop %v2469
    %v2754 = vmul.f32 1.0, %v2753
    %v2755 = vrcp.pop %v2472
    %v2756 = vmul.f32 1.0, %v2755
    %v2757 = vrcp.pop %v2475
    %v2758 = vmul.f32 1.0, %v2757
    %v2759 = vrcp.pop %v2478
    %v2760 = vmul.f32 1.0, %v2759
    %v2761 = vrcp.pop %v2481
    %v2762 = vmul.f32 1.0, %v2761
    %v2763 = vrcp.pop %v2484
    %v2764 = vmul.f32 1.0, %v2763
    %v2765 = vrcp.pop %v2487
    %v2766 = vmul.f32 1.0, %v2765
    %v2767 = vrcp.pop %v2490
    %v2768 = vmul.f32 1.0, %v2767
    %v2769 = vrcp.pop %v2493
    %v2770 = vmul.f32 1.0, %v2769
    %v2771 = vrcp.pop %v2496
    %v2772 = vmul.f32 1.0, %v2771
    %v2773 = vrcp.pop %v2499
    %v2774 = vmul.f32 1.0, %v2773
    %v2775 = vrcp.pop %v2502
    %v2776 = vmul.f32 1.0, %v2775
    %v2777 = vrcp.pop %v2505
    %v2778 = vmul.f32 1.0, %v2777
    %v2779 = vrcp.pop %v2508
    %v2780 = vmul.f32 1.0, %v2779
    %v2781 = vrcp.pop %v2511
    %v2782 = vmul.f32 1.0, %v2781
    %v2783 = vrcp.pop %v2514
    %v2784 = vmul.f32 1.0, %v2783
    %v2785 = vrcp.pop %v2517
    %v2786 = vmul.f32 1.0, %v2785
    %v2787 = vrcp.pop %v2520
    %v2788 = vmul.f32 1.0, %v2787
    %v2789 = vrcp.pop %v2523
    %v2790 = vmul.f32 1.0, %v2789
    %v2791 = vrcp.pop %v2526
    %v2792 = vmul.f32 1.0, %v2791
    %v2793 = vrcp.pop %v2529
    %v2794 = vmul.f32 1.0, %v2793
    %v2795 = vrcp.pop %v2532
    %v2796 = vmul.f32 1.0, %v2795
    %v2797 = vrcp.pop %v2535
    %v2798 = vmul.f32 1.0, %v2797
    %v2799 = vrcp.pop %v2538
    %v2800 = vmul.f32 1.0, %v2799
    %v2801 = vrcp.pop %v2541
    %v2802 = vmul.f32 1.0, %v2801
    %v2803 = vrcp.pop %v2544
    %v2804 = vmul.f32 1.0, %v2803
    %v2805 = vrcp.pop %v2547
    %v2806 = vmul.f32 1.0, %v2805
    %v2807 = vrcp.pop %v2550
    %v2808 = vmul.f32 1.0, %v2807
    %v2809 = vrcp.pop %v2553
    %v2810 = vmul.f32 1.0, %v2809
    %v2811 = vrcp.pop %v2556
    %v2812 = vmul.f32 1.0, %v2811
    %v2813 = vrcp.pop %v2559
    %v2814 = vmul.f32 1.0, %v2813
    %v2815 = vrcp.pop %v2562
    %v2816 = vmul.f32 1.0, %v2815
    %v2817 = vrcp.pop %v2565
    %v2818 = vmul.f32 1.0, %v2817
    %v2819 = vrcp.pop %v2568
    %v2820 = vmul.f32 1.0, %v2819
    %v2821 = vrcp.pop %v2571
    %v2822 = vmul.f32 1.0, %v2821
    %v2823 = vrcp.pop %v2574
    %v2824 = vmul.f32 1.0, %v2823
    %v2825 = vrcp.pop %v2577
    %v2826 = vmul.f32 1.0, %v2825
    %v2827 = vrcp.pop %v2580
    %v2828 = vmul.f32 1.0, %v2827
    %v2829 = vrcp.pop %v2583
    %v2830 = vmul.f32 1.0, %v2829
    %v2831 = vrcp.pop %v2586
    %v2832 = vmul.f32 1.0, %v2831
    %v2833 = vrcp.pop %v2589
    %v2834 = vmul.f32 1.0, %v2833
    %v2835 = vrcp.pop %v2592
    %v2836 = vmul.f32 1.0, %v2835
    %v2837 = vrcp.pop %v2595
    %v2838 = vmul.f32 1.0, %v2837
    %v2839 = vrcp.pop %v2598
    %v2840 = vmul.f32 1.0, %v2839
    %v2841 = vrcp.pop %v2601
    %v2842 = vmul.f32 1.0, %v2841
    %v2843 = vrcp.pop %v2604
    %v2844 = vmul.f32 1.0, %v2843
    %v2845 = vrcp.pop %v2607
    %v2846 = vmul.f32 1.0, %v2845
    %v2847 = vrcp.pop %v2610
    %v2848 = vmul.f32 1.0, %v2847
    %v2849 = vrcp.pop %v2613
    %v2850 = vmul.f32 1.0, %v2849
    %v2851 = vrcp.pop %v2616
    %v2852 = vmul.f32 1.0, %v2851
    %v2853 = vrcp.pop %v2619
    %v2854 = vmul.f32 1.0, %v2853
    %v2855 = vrcp.pop %v2622
    %v2856 = vmul.f32 1.0, %v2855
    %v2857 = vrcp.pop %v2625
    %v2858 = vmul.f32 1.0, %v2857
    %v2859 = vrcp.pop %v2628
    %v2860 = vmul.f32 1.0, %v2859
    %v2861 = vrcp.pop %v2631
    %v2862 = vmul.f32 1.0, %v2861
    %v2863 = vrcp.pop %v2634
    %v2864 = vmul.f32 1.0, %v2863
    %v2865 = vrcp.pop %v2637
    %v2866 = vmul.f32 1.0, %v2865
    %v2867 = vrcp.pop %v2640
    %v2868 = vmul.f32 1.0, %v2867
    %v2869 = vrcp.pop %v2643
    %v2870 = vmul.f32 1.0, %v2869
    %v2871 = vrcp.pop %v2646
    %v2872 = vmul.f32 1.0, %v2871
    %v2873 = vrcp.pop %v2649
    %v2874 = vmul.f32 1.0, %v2873
    %v2875 = vrcp.pop %v2652
    %v2876 = vmul.f32 1.0, %v2875
    %v2877 = vrcp.pop %v2655
    %v2878 = vmul.f32 1.0, %v2877
    %v2879 = vrcp.pop %v2658
    %v2880 = vmul.f32 1.0, %v2879
    %v2881 = vrcp.pop %v2661
    %v2882 = vmul.f32 1.0, %v2881
    %v2883 = vrcp.pop %v2664
    %v2884 = vmul.f32 1.0, %v2883
    %v2885 = vrcp.pop %v2667
    %v2886 = vmul.f32 1.0, %v2885
    %v2887 = vrcp.pop %v2670
    %v2888 = vmul.f32 1.0, %v2887
    %v2889 = vrcp.pop %v2673
    %v2890 = vmul.f32 1.0, %v2889
    %v2891 = vrcp.pop %v2676
    %v2892 = vmul.f32 1.0, %v2891
    %v2893 = vrcp.pop %v2679
    %v2894 = vmul.f32 1.0, %v2893
    %v2895 = vrcp.pop %v2682
    %v2896 = vmul.f32 1.0, %v2895
    %v2897 = vrcp.pop %v2685
    %v2898 = vmul.f32 1.0, %v2897
    %v2899 = vrcp.pop %v2688
    %v2900 = vmul.f32 1.0, %v2899
    %v2901 = vrcp.pop %v2691
    %v2902 = vmul.f32 1.0, %v2901
    %v2903 = vrcp.pop %v2694
    %v2904 = vmul.f32 1.0, %v2903
    %v2905 = vrcp.pop %v2697
    %v2906 = vmul.f32 1.0, %v2905
    %v2907 = vrcp.pop %v2700
    %v2908 = vmul.f32 1.0, %v2907
    %v2909 = vrcp.pop %v2703
    %v2910 = vmul.f32 1.0, %v2909
    %v2911 = vrcp.pop %v2706
    %v2912 = vmul.f32 1.0, %v2911
    %v2913 = vrcp.pop %v2709
    %v2914 = vmul.f32 1.0, %v2913
    %v2915 = vrcp.pop %v2712
    %v2916 = vmul.f32 1.0, %v2915
    %v2917 = vrcp.pop %v2715
    %v2918 = vmul.f32 1.0, %v2917
    %v2919 = vrcp.pop %v2718
    %v2920 = vmul.f32 1.0, %v2919
    %v2921 = vrcp.pop %v2721
    %v2922 = vmul.f32 1.0, %v2921
    %v2923 = vrcp.pop %v2724
    %v2924 = vmul.f32 1.0, %v2923
    %v2925 = vrcp.pop %v2727
    %v2926 = vmul.f32 1.0, %v2925
    %v2927 = vrcp.pop %v2730
    %v2928 = vmul.f32 1.0, %v2927
    %v2929 = vrcp.pop %v2733
    %v2930 = vmul.f32 1.0, %v2929
    %v2931 = vrcp.pop %v2736
    %v2932 = vmul.f32 1.0, %v2931
    %v2933 = vrcp.pop %v2739
    %v2934 = vmul.f32 1.0, %v2933
    %v2935 = vrcp.pop %v2742
    %v2936 = vmul.f32 1.0, %v2935
    %v2937 = vrcp.pop %v2745
    %v2938 = vmul.f32 1.0, %v2937
    %v2939 = vrcp.pop %v2748
    %v2940 = vmul.f32 1.0, %v2939
    %v2941 = vmul.f32 %v2078, %v2750
    %v2942 = vmul.f32 %v2080, %v2750
    %v2943 = vmul.f32 %v2082, %v2752
    %v2944 = vmul.f32 %v2084, %v2752
    %v2945 = vmul.f32 %v2086, %v2754
    %v2946 = vmul.f32 %v2088, %v2754
    %v2947 = vmul.f32 %v2090, %v2756
    %v2948 = vmul.f32 %v2092, %v2756
    %v2949 = vmul.f32 %v2094, %v2758
    %v2950 = vmul.f32 %v2096, %v2758
    %v2951 = vmul.f32 %v2098, %v2760
    %v2952 = vmul.f32 %v2100, %v2760
    %v2953 = vmul.f32 %v2102, %v2762
    %v2954 = vmul.f32 %v2104, %v2762
    %v2955 = vmul.f32 %v2106, %v2764
    %v2956 = vmul.f32 %v2108, %v2764
    %v2957 = vmul.f32 %v2110, %v2766
    %v2958 = vmul.f32 %v2112, %v2766
    %v2959 = vmul.f32 %v2114, %v2768
    %v2960 = vmul.f32 %v2116, %v2768
    %v2961 = vmul.f32 %v2118, %v2770
    %v2962 = vmul.f32 %v2120, %v2770
    %v2963 = vmul.f32 %v2122, %v2772
    %v2964 = vmul.f32 %v2124, %v2772
    %v2965 = vmul.f32 %v2126, %v2774
    %v2966 = vmul.f32 %v2128, %v2774
    %v2967 = vmul.f32 %v2130, %v2776
    %v2968 = vmul.f32 %v2132, %v2776
    %v2969 = vmul.f32 %v2134, %v2778
    %v2970 = vmul.f32 %v2136, %v2778
    %v2971 = vmul.f32 %v2138, %v2780
    %v2972 = vmul.f32 %v2140, %v2780
    %v2973 = vmul.f32 %v2142, %v2782
    %v2974 = vmul.f32 %v2144, %v2782
    %v2975 = vmul.f32 %v2146, %v2784
    %v2976 = vmul.f32 %v2148, %v2784
    %v2977 = vmul.f32 %v2150, %v2786
    %v2978 = vmul.f32 %v2152, %v2786
    %v2979 = vmul.f32 %v2154, %v2788
    %v2980 = vmul.f32 %v2156, %v2788
    %v2981 = vmul.f32 %v2158, %v2790
    %v2982 = vmul.f32 %v2160, %v2790
    %v2983 = vmul.f32 %v2162, %v2792
    %v2984 = vmul.f32 %v2164, %v2792
    %v2985 = vmul.f32 %v2166, %v2794
    %v2986 = vmul.f32 %v2168, %v2794
    %v2987 = vmul.f32 %v2170, %v2796
    %v2988 = vmul.f32 %v2172, %v2796
    %v2989 = vmul.f32 %v2174, %v2798
    %v2990 = vmul.f32 %v2176, %v2798
    %v2991 = vmul.f32 %v2178, %v2800
    %v2992 = vmul.f32 %v2180, %v2800
    %v2993 = vmul.f32 %v2182, %v2802
    %v2994 = vmul.f32 %v2184, %v2802
    %v2995 = vmul.f32 %v2186, %v2804
    %v2996 = vmul.f32 %v2188, %v2804
    %v2997 = vmul.f32 %v2190, %v2806
    %v2998 = vmul.f32 %v2192, %v2806
    %v2999 = vmul.f32 %v2194, %v2808
    %v3000 = vmul.f32 %v2196, %v2808
    %v3001 = vmul.f32 %v2198, %v2810
    %v3002 = vmul.f32 %v2200, %v2810
    %v3003 = vmul.f32 %v2202, %v2812
    %v3004 = vmul.f32 %v2204, %v2812
    %v3005 = vmul.f32 %v2206, %v2814
    %v3006 = vmul.f32 %v2208, %v2814
    %v3007 = vmul.f32 %v2210, %v2816
    %v3008 = vmul.f32 %v2212, %v2816
    %v3009 = vmul.f32 %v2214, %v2818
    %v3010 = vmul.f32 %v2216, %v2818
    %v3011 = vmul.f32 %v2218, %v2820
    %v3012 = vmul.f32 %v2220, %v2820
    %v3013 = vmul.f32 %v2222, %v2822
    %v3014 = vmul.f32 %v2224, %v2822
    %v3015 = vmul.f32 %v2226, %v2824
    %v3016 = vmul.f32 %v2228, %v2824
    %v3017 = vmul.f32 %v2230, %v2826
    %v3018 = vmul.f32 %v2232, %v2826
    %v3019 = vmul.f32 %v2234, %v2828
    %v3020 = vmul.f32 %v2236, %v2828
    %v3021 = vmul.f32 %v2238, %v2830
    %v3022 = vmul.f32 %v2240, %v2830
    %v3023 = vmul.f32 %v2242, %v2832
    %v3024 = vmul.f32 %v2244, %v2832
    %v3025 = vmul.f32 %v2246, %v2834
    %v3026 = vmul.f32 %v2248, %v2834
    %v3027 = vmul.f32 %v2250, %v2836
    %v3028 = vmul.f32 %v2252, %v2836
    %v3029 = vmul.f32 %v2254, %v2838
    %v3030 = vmul.f32 %v2256, %v2838
    %v3031 = vmul.f32 %v2258, %v2840
    %v3032 = vmul.f32 %v2260, %v2840
    %v3033 = vmul.f32 %v2262, %v2842
    %v3034 = vmul.f32 %v2264, %v2842
    %v3035 = vmul.f32 %v2266, %v2844
    %v3036 = vmul.f32 %v2268, %v2844
    %v3037 = vmul.f32 %v2270, %v2846
    %v3038 = vmul.f32 %v2272, %v2846
    %v3039 = vmul.f32 %v2274, %v2848
    %v3040 = vmul.f32 %v2276, %v2848
    %v3041 = vmul.f32 %v2278, %v2850
    %v3042 = vmul.f32 %v2280, %v2850
    %v3043 = vmul.f32 %v2282, %v2852
    %v3044 = vmul.f32 %v2284, %v2852
    %v3045 = vmul.f32 %v2286, %v2854
    %v3046 = vmul.f32 %v2288, %v2854
    %v3047 = vmul.f32 %v2290, %v2856
    %v3048 = vmul.f32 %v2292, %v2856
    %v3049 = vmul.f32 %v2294, %v2858
    %v3050 = vmul.f32 %v2296, %v2858
    %v3051 = vmul.f32 %v2298, %v2860
    %v3052 = vmul.f32 %v2300, %v2860
    %v3053 = vmul.f32 %v2302, %v2862
    %v3054 = vmul.f32 %v2304, %v2862
    %v3055 = vmul.f32 %v2306, %v2864
    %v3056 = vmul.f32 %v2308, %v2864
    %v3057 = vmul.f32 %v2310, %v2866
    %v3058 = vmul.f32 %v2312, %v2866
    %v3059 = vmul.f32 %v2314, %v2868
    %v3060 = vmul.f32 %v2316, %v2868
    %v3061 = vmul.f32 %v2318, %v2870
    %v3062 = vmul.f32 %v2320, %v2870
    %v3063 = vmul.f32 %v2322, %v2872
    %v3064 = vmul.f32 %v2324, %v2872
    %v3065 = vmul.f32 %v2326, %v2874
    %v3066 = vmul.f32 %v2328, %v2874
    %v3067 = vmul.f32 %v2330, %v2876
    %v3068 = vmul.f32 %v2332, %v2876
    %v3069 = vmul.f32 %v2334, %v2878
    %v3070 = vmul.f32 %v2336, %v2878
    %v3071 = vmul.f32 %v2338, %v2880
    %v3072 = vmul.f32 %v2340, %v2880
    %v3073 = vmul.f32 %v2342, %v2882
    %v3074 = vmul.f32 %v2344, %v2882
    %v3075 = vmul.f32 %v2346, %v2884
    %v3076 = vmul.f32 %v2348, %v2884
    %v3077 = vmul.f32 %v2350, %v2886
    %v3078 = vmul.f32 %v2352, %v2886
    %v3079 = vmul.f32 %v2354, %v2888
    %v3080 = vmul.f32 %v2356, %v2888
    %v3081 = vmul.f32 %v2358, %v2890
    %v3082 = vmul.f32 %v2360, %v2890
    %v3083 = vmul.f32 %v2362, %v2892
    %v3084 = vmul.f32 %v2364, %v2892
    %v3085 = vmul.f32 %v2366, %v2894
    %v3086 = vmul.f32 %v2368, %v2894
    %v3087 = vmul.f32 %v2370, %v2896
    %v3088 = vmul.f32 %v2372, %v2896
    %v3089 = vmul.f32 %v2374, %v2898
    %v3090 = vmul.f32 %v2376, %v2898
    %v3091 = vmul.f32 %v2378, %v2900
    %v3092 = vmul.f32 %v2380, %v2900
    %v3093 = vmul.f32 %v2382, %v2902
    %v3094 = vmul.f32 %v2384, %v2902
    %v3095 = vmul.f32 %v2386, %v2904
    %v3096 = vmul.f32 %v2388, %v2904
    %v3097 = vmul.f32 %v2390, %v2906
    %v3098 = vmul.f32 %v2392, %v2906
    %v3099 = vmul.f32 %v2394, %v2908
    %v3100 = vmul.f32 %v2396, %v2908
    %v3101 = vmul.f32 %v2398, %v2910
    %v3102 = vmul.f32 %v2400, %v2910
    %v3103 = vmul.f32 %v2402, %v2912
    %v3104 = vmul.f32 %v2404, %v2912
    %v3105 = vmul.f32 %v2406, %v2914
    %v3106 = vmul.f32 %v2408, %v2914
    %v3107 = vmul.f32 %v2410, %v2916
    %v3108 = vmul.f32 %v2412, %v2916
    %v3109 = vmul.f32 %v2414, %v2918
    %v3110 = vmul.f32 %v2416, %v2918
    %v3111 = vmul.f32 %v2418, %v2920
    %v3112 = vmul.f32 %v2420, %v2920
    %v3113 = vmul.f32 %v2422, %v2922
    %v3114 = vmul.f32 %v2424, %v2922
    %v3115 = vmul.f32 %v2426, %v2924
    %v3116 = vmul.f32 %v2428, %v2924
    %v3117 = vmul.f32 %v2430, %v2926
    %v3118 = vmul.f32 %v2432, %v2926
    %v3119 = vmul.f32 %v2434, %v2928
    %v3120 = vmul.f32 %v2436, %v2928
    %v3121 = vmul.f32 %v2438, %v2930
    %v3122 = vmul.f32 %v2440, %v2930
    %v3123 = vmul.f32 %v2442, %v2932
    %v3124 = vmul.f32 %v2444, %v2932
    %v3125 = vmul.f32 %v2446, %v2934
    %v3126 = vmul.f32 %v2448, %v2934
    %v3127 = vmul.f32 %v2450, %v2936
    %v3128 = vmul.f32 %v2452, %v2936
    %v3129 = vmul.f32 %v2454, %v2938
    %v3130 = vmul.f32 %v2456, %v2938
    %v3131 = vmul.f32 %v2458, %v2940
    %v3132 = vmul.f32 %v2460, %v2940
    %3133 = vmatprep.subr.mxu0 %v665
    %3134 = vmatpush1.msra.mxu0 %v664
    %3135 = vmatprep.subr.mxu0 %v663
    %3136 = vmatpush1.msra.mxu0 %v662
    %3137 = vmatprep.subr.mxu0 %v661
    %3138 = vmatpush1.msra.mxu0 %v660
    %3139 = vmatprep.subr.mxu0 %v659
    %3140 = vmatpush1.msra.mxu0 %v658
    %3141 = vmatprep.subr.mxu0 %v657
    %3142 = vmatpush1.msra.mxu0 %v656
    %3143 = vmatprep.subr.mxu0 %v655
    %3144 = vmatpush1.msra.mxu0 %v654
    %3145 = vmatprep.subr.mxu0 %v653
    %3146 = vmatpush1.msra.mxu0 %v652
    %3147 = vmatprep.subr.mxu0 %v651
    %3148 = vmatpush1.msra.mxu0 %v650
    %3149 = vmatprep.subr.mxu0 %v649
    %3150 = vmatpush1.msra.mxu0 %v648
    %3151 = vmatprep.subr.mxu0 %v647
    %3152 = vmatpush1.msra.mxu0 %v646
    %3153 = vmatprep.subr.mxu0 %v645
    %3154 = vmatpush1.msra.mxu0 %v644
    %3155 = vmatprep.subr.mxu0 %v643
    %3156 = vmatpush1.msra.mxu0 %v642
    %3157 = vmatprep.subr.mxu0 %v641
    %3158 = vmatpush1.msra.mxu0 %v640
    %3159 = vmatprep.subr.mxu0 %v639
    %3160 = vmatpush1.msra.mxu0 %v638
    %3161 = vmatprep.subr.mxu0 %v637
    %3162 = vmatpush1.msra.mxu0 %v636
    %3163 = vmatprep.subr.mxu0 %v635
    %3164 = vmatpush1.msra.mxu0 %v634
    %3165 = vmatprep.subr.mxu0 %v697
    %3166 = vmatpush2.msra.mxu0 %v696
    %3167 = vmatprep.subr.mxu0 %v695
    %3168 = vmatpush2.msra.mxu0 %v694
    %3169 = vmatprep.subr.mxu0 %v693
    %3170 = vmatpush2.msra.mxu0 %v692
    %3171 = vmatprep.subr.mxu0 %v691
    %3172 = vmatpush2.msra.mxu0 %v690
    %3173 = vmatprep.subr.mxu0 %v689
    %3174 = vmatpush2.msra.mxu0 %v688
    %3175 = vmatprep.subr.mxu0 %v687
    %3176 = vmatpush2.msra.mxu0 %v686
    %3177 = vmatprep.subr.mxu0 %v685
    %3178 = vmatpush2.msra.mxu0 %v684
    %3179 = vmatprep.subr.mxu0 %v683
    %3180 = vmatpush2.msra.mxu0 %v682
    %3181 = vmatprep.subr.mxu0 %v681
    %3182 = vmatpush2.msra.mxu0 %v680
    %3183 = vmatprep.subr.mxu0 %v679
    %3184 = vmatpush2.msra.mxu0 %v678
    %3185 = vmatprep.subr.mxu0 %v677
    %3186 = vmatpush2.msra.mxu0 %v676
    %3187 = vmatprep.subr.mxu0 %v675
    %3188 = vmatpush2.msra.mxu0 %v674
    %3189 = vmatprep.subr.mxu0 %v673
    %3190 = vmatpush2.msra.mxu0 %v672
    %3191 = vmatprep.subr.mxu0 %v671
    %3192 = vmatpush2.msra.mxu0 %v670
    %3193 = vmatprep.subr.mxu0 %v669
    %3194 = vmatpush2.msra.mxu0 %v668
    %3195 = vmatprep.subr.mxu0 %v667
    %3196 = vmatpush2.msra.mxu0 %v666
    %3197 = vmatprep.mubr.f32.mxu0 %v2942
    %3198 = vmatmul.mubr.f32.gmra.mxu0 %v2941
    %v3199 = vpop.f32.mrf.mxu0
    %v3200 = vadd.f32 0.0, %v3199
    %v3201 = vpop.f32.mrf.mxu0
    %v3202 = vadd.f32 0.0, %v3201
    %3203 = vmatprep.mubr.f32.mxu0 %v2944
    %3204 = vmatmul.mubr.f32.gmra.mxu0 %v2943
    %v3205 = vpop.f32.mrf.mxu0
    %v3206 = vadd.f32 0.0, %v3205
    %v3207 = vpop.f32.mrf.mxu0
    %v3208 = vadd.f32 0.0, %v3207
    %3209 = vmatprep.mubr.f32.mxu0 %v2946
    %3210 = vmatmul.mubr.f32.gmra.mxu0 %v2945
    %v3211 = vpop.f32.mrf.mxu0
    %v3212 = vadd.f32 0.0, %v3211
    %v3213 = vpop.f32.mrf.mxu0
    %v3214 = vadd.f32 0.0, %v3213
    %3215 = vmatprep.mubr.f32.mxu0 %v2948
    %3216 = vmatmul.mubr.f32.gmra.mxu0 %v2947
    %v3217 = vpop.f32.mrf.mxu0
    %v3218 = vadd.f32 0.0, %v3217
    %v3219 = vpop.f32.mrf.mxu0
    %v3220 = vadd.f32 0.0, %v3219
    %3221 = vmatprep.mubr.f32.mxu0 %v2950
    %3222 = vmatmul.mubr.f32.gmra.mxu0 %v2949
    %v3223 = vpop.f32.mrf.mxu0
    %v3224 = vadd.f32 0.0, %v3223
    %v3225 = vpop.f32.mrf.mxu0
    %v3226 = vadd.f32 0.0, %v3225
    %3227 = vmatprep.mubr.f32.mxu0 %v2952
    %3228 = vmatmul.mubr.f32.gmra.mxu0 %v2951
    %v3229 = vpop.f32.mrf.mxu0
    %v3230 = vadd.f32 0.0, %v3229
    %v3231 = vpop.f32.mrf.mxu0
    %v3232 = vadd.f32 0.0, %v3231
    %3233 = vmatprep.mubr.f32.mxu0 %v2954
    %3234 = vmatmul.mubr.f32.gmra.mxu0 %v2953
    %v3235 = vpop.f32.mrf.mxu0
    %v3236 = vadd.f32 0.0, %v3235
    %v3237 = vpop.f32.mrf.mxu0
    %v3238 = vadd.f32 0.0, %v3237
    %3239 = vmatprep.mubr.f32.mxu0 %v2956
    %3240 = vmatmul.mubr.f32.gmra.mxu0 %v2955
    %v3241 = vpop.f32.mrf.mxu0
    %v3242 = vadd.f32 0.0, %v3241
    %v3243 = vpop.f32.mrf.mxu0
    %v3244 = vadd.f32 0.0, %v3243
    %3245 = vmatprep.mubr.f32.mxu0 %v2958
    %3246 = vmatmul.mubr.f32.gmra.mxu0 %v2957
    %v3247 = vpop.f32.mrf.mxu0
    %v3248 = vadd.f32 0.0, %v3247
    %v3249 = vpop.f32.mrf.mxu0
    %v3250 = vadd.f32 0.0, %v3249
    %3251 = vmatprep.mubr.f32.mxu0 %v2960
    %3252 = vmatmul.mubr.f32.gmra.mxu0 %v2959
    %v3253 = vpop.f32.mrf.mxu0
    %v3254 = vadd.f32 0.0, %v3253
    %v3255 = vpop.f32.mrf.mxu0
    %v3256 = vadd.f32 0.0, %v3255
    %3257 = vmatprep.mubr.f32.mxu0 %v2962
    %3258 = vmatmul.mubr.f32.gmra.mxu0 %v2961
    %v3259 = vpop.f32.mrf.mxu0
    %v3260 = vadd.f32 0.0, %v3259
    %v3261 = vpop.f32.mrf.mxu0
    %v3262 = vadd.f32 0.0, %v3261
    %3263 = vmatprep.mubr.f32.mxu0 %v2964
    %3264 = vmatmul.mubr.f32.gmra.mxu0 %v2963
    %v3265 = vpop.f32.mrf.mxu0
    %v3266 = vadd.f32 0.0, %v3265
    %v3267 = vpop.f32.mrf.mxu0
    %v3268 = vadd.f32 0.0, %v3267
    %3269 = vmatprep.mubr.f32.mxu0 %v2966
    %3270 = vmatmul.mubr.f32.gmra.mxu0 %v2965
    %v3271 = vpop.f32.mrf.mxu0
    %v3272 = vadd.f32 0.0, %v3271
    %v3273 = vpop.f32.mrf.mxu0
    %v3274 = vadd.f32 0.0, %v3273
    %3275 = vmatprep.mubr.f32.mxu0 %v2968
    %3276 = vmatmul.mubr.f32.gmra.mxu0 %v2967
    %v3277 = vpop.f32.mrf.mxu0
    %v3278 = vadd.f32 0.0, %v3277
    %v3279 = vpop.f32.mrf.mxu0
    %v3280 = vadd.f32 0.0, %v3279
    %3281 = vmatprep.mubr.f32.mxu0 %v2970
    %3282 = vmatmul.mubr.f32.gmra.mxu0 %v2969
    %v3283 = vpop.f32.mrf.mxu0
    %v3284 = vadd.f32 0.0, %v3283
    %v3285 = vpop.f32.mrf.mxu0
    %v3286 = vadd.f32 0.0, %v3285
    %3287 = vmatprep.mubr.f32.mxu0 %v2972
    %3288 = vmatmul.mubr.f32.gmra.mxu0 %v2971
    %v3289 = vpop.f32.mrf.mxu0
    %v3290 = vadd.f32 0.0, %v3289
    %v3291 = vpop.f32.mrf.mxu0
    %v3292 = vadd.f32 0.0, %v3291
    %3293 = vmatprep.mubr.f32.mxu0 %v2974
    %3294 = vmatmul.mubr.f32.gmra.mxu0 %v2973
    %v3295 = vpop.f32.mrf.mxu0
    %v3296 = vadd.f32 0.0, %v3295
    %v3297 = vpop.f32.mrf.mxu0
    %v3298 = vadd.f32 0.0, %v3297
    %3299 = vmatprep.mubr.f32.mxu0 %v2976
    %3300 = vmatmul.mubr.f32.gmra.mxu0 %v2975
    %v3301 = vpop.f32.mrf.mxu0
    %v3302 = vadd.f32 0.0, %v3301
    %v3303 = vpop.f32.mrf.mxu0
    %v3304 = vadd.f32 0.0, %v3303
    %3305 = vmatprep.mubr.f32.mxu0 %v2978
    %3306 = vmatmul.mubr.f32.gmra.mxu0 %v2977
    %v3307 = vpop.f32.mrf.mxu0
    %v3308 = vadd.f32 0.0, %v3307
    %v3309 = vpop.f32.mrf.mxu0
    %v3310 = vadd.f32 0.0, %v3309
    %3311 = vmatprep.mubr.f32.mxu0 %v2980
    %3312 = vmatmul.mubr.f32.gmra.mxu0 %v2979
    %v3313 = vpop.f32.mrf.mxu0
    %v3314 = vadd.f32 0.0, %v3313
    %v3315 = vpop.f32.mrf.mxu0
    %v3316 = vadd.f32 0.0, %v3315
    %3317 = vmatprep.mubr.f32.mxu0 %v2982
    %3318 = vmatmul.mubr.f32.gmra.mxu0 %v2981
    %v3319 = vpop.f32.mrf.mxu0
    %v3320 = vadd.f32 0.0, %v3319
    %v3321 = vpop.f32.mrf.mxu0
    %v3322 = vadd.f32 0.0, %v3321
    %3323 = vmatprep.mubr.f32.mxu0 %v2984
    %3324 = vmatmul.mubr.f32.gmra.mxu0 %v2983
    %v3325 = vpop.f32.mrf.mxu0
    %v3326 = vadd.f32 0.0, %v3325
    %v3327 = vpop.f32.mrf.mxu0
    %v3328 = vadd.f32 0.0, %v3327
    %3329 = vmatprep.mubr.f32.mxu0 %v2986
    %3330 = vmatmul.mubr.f32.gmra.mxu0 %v2985
    %v3331 = vpop.f32.mrf.mxu0
    %v3332 = vadd.f32 0.0, %v3331
    %v3333 = vpop.f32.mrf.mxu0
    %v3334 = vadd.f32 0.0, %v3333
    %3335 = vmatprep.mubr.f32.mxu0 %v2988
    %3336 = vmatmul.mubr.f32.gmra.mxu0 %v2987
    %v3337 = vpop.f32.mrf.mxu0
    %v3338 = vadd.f32 0.0, %v3337
    %v3339 = vpop.f32.mrf.mxu0
    %v3340 = vadd.f32 0.0, %v3339
    %3341 = vmatprep.mubr.f32.mxu0 %v2990
    %3342 = vmatmul.mubr.f32.gmra.mxu0 %v2989
    %v3343 = vpop.f32.mrf.mxu0
    %v3344 = vadd.f32 0.0, %v3343
    %v3345 = vpop.f32.mrf.mxu0
    %v3346 = vadd.f32 0.0, %v3345
    %3347 = vmatprep.mubr.f32.mxu0 %v2992
    %3348 = vmatmul.mubr.f32.gmra.mxu0 %v2991
    %v3349 = vpop.f32.mrf.mxu0
    %v3350 = vadd.f32 0.0, %v3349
    %v3351 = vpop.f32.mrf.mxu0
    %v3352 = vadd.f32 0.0, %v3351
    %3353 = vmatprep.mubr.f32.mxu0 %v2994
    %3354 = vmatmul.mubr.f32.gmra.mxu0 %v2993
    %v3355 = vpop.f32.mrf.mxu0
    %v3356 = vadd.f32 0.0, %v3355
    %v3357 = vpop.f32.mrf.mxu0
    %v3358 = vadd.f32 0.0, %v3357
    %3359 = vmatprep.mubr.f32.mxu0 %v2996
    %3360 = vmatmul.mubr.f32.gmra.mxu0 %v2995
    %v3361 = vpop.f32.mrf.mxu0
    %v3362 = vadd.f32 0.0, %v3361
    %v3363 = vpop.f32.mrf.mxu0
    %v3364 = vadd.f32 0.0, %v3363
    %3365 = vmatprep.mubr.f32.mxu0 %v2998
    %3366 = vmatmul.mubr.f32.gmra.mxu0 %v2997
    %v3367 = vpop.f32.mrf.mxu0
    %v3368 = vadd.f32 0.0, %v3367
    %v3369 = vpop.f32.mrf.mxu0
    %v3370 = vadd.f32 0.0, %v3369
    %3371 = vmatprep.mubr.f32.mxu0 %v3000
    %3372 = vmatmul.mubr.f32.gmra.mxu0 %v2999
    %v3373 = vpop.f32.mrf.mxu0
    %v3374 = vadd.f32 0.0, %v3373
    %v3375 = vpop.f32.mrf.mxu0
    %v3376 = vadd.f32 0.0, %v3375
    %3377 = vmatprep.mubr.f32.mxu0 %v3002
    %3378 = vmatmul.mubr.f32.gmra.mxu0 %v3001
    %v3379 = vpop.f32.mrf.mxu0
    %v3380 = vadd.f32 0.0, %v3379
    %v3381 = vpop.f32.mrf.mxu0
    %v3382 = vadd.f32 0.0, %v3381
    %3383 = vmatprep.mubr.f32.mxu0 %v3004
    %3384 = vmatmul.mubr.f32.gmra.mxu0 %v3003
    %v3385 = vpop.f32.mrf.mxu0
    %v3386 = vadd.f32 0.0, %v3385
    %v3387 = vpop.f32.mrf.mxu0
    %v3388 = vadd.f32 0.0, %v3387
    %3389 = vdwg.mxu0
    %3390 = vmatprep.subr.mxu0 %v729
    %3391 = vmatpush1.msra.mxu0 %v728
    %3392 = vmatprep.subr.mxu0 %v727
    %3393 = vmatpush1.msra.mxu0 %v726
    %3394 = vmatprep.subr.mxu0 %v725
    %3395 = vmatpush1.msra.mxu0 %v724
    %3396 = vmatprep.subr.mxu0 %v723
    %3397 = vmatpush1.msra.mxu0 %v722
    %3398 = vmatprep.subr.mxu0 %v721
    %3399 = vmatpush1.msra.mxu0 %v720
    %3400 = vmatprep.subr.mxu0 %v719
    %3401 = vmatpush1.msra.mxu0 %v718
    %3402 = vmatprep.subr.mxu0 %v717
    %3403 = vmatpush1.msra.mxu0 %v716
    %3404 = vmatprep.subr.mxu0 %v715
    %3405 = vmatpush1.msra.mxu0 %v714
    %3406 = vmatprep.subr.mxu0 %v713
    %3407 = vmatpush1.msra.mxu0 %v712
    %3408 = vmatprep.subr.mxu0 %v711
    %3409 = vmatpush1.msra.mxu0 %v710
    %3410 = vmatprep.subr.mxu0 %v709
    %3411 = vmatpush1.msra.mxu0 %v708
    %3412 = vmatprep.subr.mxu0 %v707
    %3413 = vmatpush1.msra.mxu0 %v706
    %3414 = vmatprep.subr.mxu0 %v705
    %3415 = vmatpush1.msra.mxu0 %v704
    %3416 = vmatprep.subr.mxu0 %v703
    %3417 = vmatpush1.msra.mxu0 %v702
    %3418 = vmatprep.subr.mxu0 %v701
    %3419 = vmatpush1.msra.mxu0 %v700
    %3420 = vmatprep.subr.mxu0 %v699
    %3421 = vmatpush1.msra.mxu0 %v698
    %3422 = vmatprep.subr.mxu0 %v761
    %3423 = vmatpush2.msra.mxu0 %v760
    %3424 = vmatprep.subr.mxu0 %v759
    %3425 = vmatpush2.msra.mxu0 %v758
    %3426 = vmatprep.subr.mxu0 %v757
    %3427 = vmatpush2.msra.mxu0 %v756
    %3428 = vmatprep.subr.mxu0 %v755
    %3429 = vmatpush2.msra.mxu0 %v754
    %3430 = vmatprep.subr.mxu0 %v753
    %3431 = vmatpush2.msra.mxu0 %v752
    %3432 = vmatprep.subr.mxu0 %v751
    %3433 = vmatpush2.msra.mxu0 %v750
    %3434 = vmatprep.subr.mxu0 %v749
    %3435 = vmatpush2.msra.mxu0 %v748
    %3436 = vmatprep.subr.mxu0 %v747
    %3437 = vmatpush2.msra.mxu0 %v746
    %3438 = vmatprep.subr.mxu0 %v745
    %3439 = vmatpush2.msra.mxu0 %v744
    %3440 = vmatprep.subr.mxu0 %v743
    %3441 = vmatpush2.msra.mxu0 %v742
    %3442 = vmatprep.subr.mxu0 %v741
    %3443 = vmatpush2.msra.mxu0 %v740
    %3444 = vmatprep.subr.mxu0 %v739
    %3445 = vmatpush2.msra.mxu0 %v738
    %3446 = vmatprep.subr.mxu0 %v737
    %3447 = vmatpush2.msra.mxu0 %v736
    %3448 = vmatprep.subr.mxu0 %v735
    %3449 = vmatpush2.msra.mxu0 %v734
    %3450 = vmatprep.subr.mxu0 %v733
    %3451 = vmatpush2.msra.mxu0 %v732
    %3452 = vmatprep.subr.mxu0 %v731
    %3453 = vmatpush2.msra.mxu0 %v730
    %3454 = vmatprep.mubr.f32.mxu0 %v3006
    %3455 = vmatmul.mubr.f32.gmra.mxu0 %v3005
    %v3456 = vpop.f32.mrf.mxu0
    %v3457 = vadd.f32 0.0, %v3456
    %v3458 = vpop.f32.mrf.mxu0
    %v3459 = vadd.f32 0.0, %v3458
    %3460 = vmatprep.mubr.f32.mxu0 %v3008
    %3461 = vmatmul.mubr.f32.gmra.mxu0 %v3007
    %v3462 = vpop.f32.mrf.mxu0
    %v3463 = vadd.f32 0.0, %v3462
    %v3464 = vpop.f32.mrf.mxu0
    %v3465 = vadd.f32 0.0, %v3464
    %3466 = vmatprep.mubr.f32.mxu0 %v3010
    %3467 = vmatmul.mubr.f32.gmra.mxu0 %v3009
    %v3468 = vpop.f32.mrf.mxu0
    %v3469 = vadd.f32 0.0, %v3468
    %v3470 = vpop.f32.mrf.mxu0
    %v3471 = vadd.f32 0.0, %v3470
    %3472 = vmatprep.mubr.f32.mxu0 %v3012
    %3473 = vmatmul.mubr.f32.gmra.mxu0 %v3011
    %v3474 = vpop.f32.mrf.mxu0
    %v3475 = vadd.f32 0.0, %v3474
    %v3476 = vpop.f32.mrf.mxu0
    %v3477 = vadd.f32 0.0, %v3476
    %3478 = vmatprep.mubr.f32.mxu0 %v3014
    %3479 = vmatmul.mubr.f32.gmra.mxu0 %v3013
    %v3480 = vpop.f32.mrf.mxu0
    %v3481 = vadd.f32 0.0, %v3480
    %v3482 = vpop.f32.mrf.mxu0
    %v3483 = vadd.f32 0.0, %v3482
    %3484 = vmatprep.mubr.f32.mxu0 %v3016
    %3485 = vmatmul.mubr.f32.gmra.mxu0 %v3015
    %v3486 = vpop.f32.mrf.mxu0
    %v3487 = vadd.f32 0.0, %v3486
    %v3488 = vpop.f32.mrf.mxu0
    %v3489 = vadd.f32 0.0, %v3488
    %3490 = vmatprep.mubr.f32.mxu0 %v3018
    %3491 = vmatmul.mubr.f32.gmra.mxu0 %v3017
    %v3492 = vpop.f32.mrf.mxu0
    %v3493 = vadd.f32 0.0, %v3492
    %v3494 = vpop.f32.mrf.mxu0
    %v3495 = vadd.f32 0.0, %v3494
    %3496 = vmatprep.mubr.f32.mxu0 %v3020
    %3497 = vmatmul.mubr.f32.gmra.mxu0 %v3019
    %v3498 = vpop.f32.mrf.mxu0
    %v3499 = vadd.f32 0.0, %v3498
    %v3500 = vpop.f32.mrf.mxu0
    %v3501 = vadd.f32 0.0, %v3500
    %3502 = vmatprep.mubr.f32.mxu0 %v3022
    %3503 = vmatmul.mubr.f32.gmra.mxu0 %v3021
    %v3504 = vpop.f32.mrf.mxu0
    %v3505 = vadd.f32 0.0, %v3504
    %v3506 = vpop.f32.mrf.mxu0
    %v3507 = vadd.f32 0.0, %v3506
    %3508 = vmatprep.mubr.f32.mxu0 %v3024
    %3509 = vmatmul.mubr.f32.gmra.mxu0 %v3023
    %v3510 = vpop.f32.mrf.mxu0
    %v3511 = vadd.f32 0.0, %v3510
    %v3512 = vpop.f32.mrf.mxu0
    %v3513 = vadd.f32 0.0, %v3512
    %3514 = vmatprep.mubr.f32.mxu0 %v3026
    %3515 = vmatmul.mubr.f32.gmra.mxu0 %v3025
    %v3516 = vpop.f32.mrf.mxu0
    %v3517 = vadd.f32 0.0, %v3516
    %v3518 = vpop.f32.mrf.mxu0
    %v3519 = vadd.f32 0.0, %v3518
    %3520 = vmatprep.mubr.f32.mxu0 %v3028
    %3521 = vmatmul.mubr.f32.gmra.mxu0 %v3027
    %v3522 = vpop.f32.mrf.mxu0
    %v3523 = vadd.f32 0.0, %v3522
    %v3524 = vpop.f32.mrf.mxu0
    %v3525 = vadd.f32 0.0, %v3524
    %3526 = vmatprep.mubr.f32.mxu0 %v3030
    %3527 = vmatmul.mubr.f32.gmra.mxu0 %v3029
    %v3528 = vpop.f32.mrf.mxu0
    %v3529 = vadd.f32 0.0, %v3528
    %v3530 = vpop.f32.mrf.mxu0
    %v3531 = vadd.f32 0.0, %v3530
    %3532 = vmatprep.mubr.f32.mxu0 %v3032
    %3533 = vmatmul.mubr.f32.gmra.mxu0 %v3031
    %v3534 = vpop.f32.mrf.mxu0
    %v3535 = vadd.f32 0.0, %v3534
    %v3536 = vpop.f32.mrf.mxu0
    %v3537 = vadd.f32 0.0, %v3536
    %3538 = vmatprep.mubr.f32.mxu0 %v3034
    %3539 = vmatmul.mubr.f32.gmra.mxu0 %v3033
    %v3540 = vpop.f32.mrf.mxu0
    %v3541 = vadd.f32 0.0, %v3540
    %v3542 = vpop.f32.mrf.mxu0
    %v3543 = vadd.f32 0.0, %v3542
    %3544 = vmatprep.mubr.f32.mxu0 %v3036
    %3545 = vmatmul.mubr.f32.gmra.mxu0 %v3035
    %v3546 = vpop.f32.mrf.mxu0
    %v3547 = vadd.f32 0.0, %v3546
    %v3548 = vpop.f32.mrf.mxu0
    %v3549 = vadd.f32 0.0, %v3548
    %3550 = vmatprep.mubr.f32.mxu0 %v3038
    %3551 = vmatmul.mubr.f32.gmra.mxu0 %v3037
    %v3552 = vpop.f32.mrf.mxu0
    %v3553 = vadd.f32 0.0, %v3552
    %v3554 = vpop.f32.mrf.mxu0
    %v3555 = vadd.f32 0.0, %v3554
    %3556 = vmatprep.mubr.f32.mxu0 %v3040
    %3557 = vmatmul.mubr.f32.gmra.mxu0 %v3039
    %v3558 = vpop.f32.mrf.mxu0
    %v3559 = vadd.f32 0.0, %v3558
    %v3560 = vpop.f32.mrf.mxu0
    %v3561 = vadd.f32 0.0, %v3560
    %3562 = vmatprep.mubr.f32.mxu0 %v3042
    %3563 = vmatmul.mubr.f32.gmra.mxu0 %v3041
    %v3564 = vpop.f32.mrf.mxu0
    %v3565 = vadd.f32 0.0, %v3564
    %v3566 = vpop.f32.mrf.mxu0
    %v3567 = vadd.f32 0.0, %v3566
    %3568 = vmatprep.mubr.f32.mxu0 %v3044
    %3569 = vmatmul.mubr.f32.gmra.mxu0 %v3043
    %v3570 = vpop.f32.mrf.mxu0
    %v3571 = vadd.f32 0.0, %v3570
    %v3572 = vpop.f32.mrf.mxu0
    %v3573 = vadd.f32 0.0, %v3572
    %3574 = vmatprep.mubr.f32.mxu0 %v3046
    %3575 = vmatmul.mubr.f32.gmra.mxu0 %v3045
    %v3576 = vpop.f32.mrf.mxu0
    %v3577 = vadd.f32 0.0, %v3576
    %v3578 = vpop.f32.mrf.mxu0
    %v3579 = vadd.f32 0.0, %v3578
    %3580 = vmatprep.mubr.f32.mxu0 %v3048
    %3581 = vmatmul.mubr.f32.gmra.mxu0 %v3047
    %v3582 = vpop.f32.mrf.mxu0
    %v3583 = vadd.f32 0.0, %v3582
    %v3584 = vpop.f32.mrf.mxu0
    %v3585 = vadd.f32 0.0, %v3584
    %3586 = vmatprep.mubr.f32.mxu0 %v3050
    %3587 = vmatmul.mubr.f32.gmra.mxu0 %v3049
    %v3588 = vpop.f32.mrf.mxu0
    %v3589 = vadd.f32 0.0, %v3588
    %v3590 = vpop.f32.mrf.mxu0
    %v3591 = vadd.f32 0.0, %v3590
    %3592 = vmatprep.mubr.f32.mxu0 %v3052
    %3593 = vmatmul.mubr.f32.gmra.mxu0 %v3051
    %v3594 = vpop.f32.mrf.mxu0
    %v3595 = vadd.f32 0.0, %v3594
    %v3596 = vpop.f32.mrf.mxu0
    %v3597 = vadd.f32 0.0, %v3596
    %3598 = vmatprep.mubr.f32.mxu0 %v3054
    %3599 = vmatmul.mubr.f32.gmra.mxu0 %v3053
    %v3600 = vpop.f32.mrf.mxu0
    %v3601 = vadd.f32 0.0, %v3600
    %v3602 = vpop.f32.mrf.mxu0
    %v3603 = vadd.f32 0.0, %v3602
    %3604 = vmatprep.mubr.f32.mxu0 %v3056
    %3605 = vmatmul.mubr.f32.gmra.mxu0 %v3055
    %v3606 = vpop.f32.mrf.mxu0
    %v3607 = vadd.f32 0.0, %v3606
    %v3608 = vpop.f32.mrf.mxu0
    %v3609 = vadd.f32 0.0, %v3608
    %3610 = vmatprep.mubr.f32.mxu0 %v3058
    %3611 = vmatmul.mubr.f32.gmra.mxu0 %v3057
    %v3612 = vpop.f32.mrf.mxu0
    %v3613 = vadd.f32 0.0, %v3612
    %v3614 = vpop.f32.mrf.mxu0
    %v3615 = vadd.f32 0.0, %v3614
    %3616 = vmatprep.mubr.f32.mxu0 %v3060
    %3617 = vmatmul.mubr.f32.gmra.mxu0 %v3059
    %v3618 = vpop.f32.mrf.mxu0
    %v3619 = vadd.f32 0.0, %v3618
    %v3620 = vpop.f32.mrf.mxu0
    %v3621 = vadd.f32 0.0, %v3620
    %3622 = vmatprep.mubr.f32.mxu0 %v3062
    %3623 = vmatmul.mubr.f32.gmra.mxu0 %v3061
    %v3624 = vpop.f32.mrf.mxu0
    %v3625 = vadd.f32 0.0, %v3624
    %v3626 = vpop.f32.mrf.mxu0
    %v3627 = vadd.f32 0.0, %v3626
    %3628 = vmatprep.mubr.f32.mxu0 %v3064
    %3629 = vmatmul.mubr.f32.gmra.mxu0 %v3063
    %v3630 = vpop.f32.mrf.mxu0
    %v3631 = vadd.f32 0.0, %v3630
    %v3632 = vpop.f32.mrf.mxu0
    %v3633 = vadd.f32 0.0, %v3632
    %3634 = vmatprep.mubr.f32.mxu0 %v3066
    %3635 = vmatmul.mubr.f32.gmra.mxu0 %v3065
    %v3636 = vpop.f32.mrf.mxu0
    %v3637 = vadd.f32 0.0, %v3636
    %v3638 = vpop.f32.mrf.mxu0
    %v3639 = vadd.f32 0.0, %v3638
    %3640 = vmatprep.mubr.f32.mxu0 %v3068
    %3641 = vmatmul.mubr.f32.gmra.mxu0 %v3067
    %v3642 = vpop.f32.mrf.mxu0
    %v3643 = vadd.f32 0.0, %v3642
    %v3644 = vpop.f32.mrf.mxu0
    %v3645 = vadd.f32 0.0, %v3644
    %3646 = vdwg.mxu0
    %3647 = vmatprep.subr.mxu0 %v793
    %3648 = vmatpush1.msra.mxu0 %v792
    %3649 = vmatprep.subr.mxu0 %v791
    %3650 = vmatpush1.msra.mxu0 %v790
    %3651 = vmatprep.subr.mxu0 %v789
    %3652 = vmatpush1.msra.mxu0 %v788
    %3653 = vmatprep.subr.mxu0 %v787
    %3654 = vmatpush1.msra.mxu0 %v786
    %3655 = vmatprep.subr.mxu0 %v785
    %3656 = vmatpush1.msra.mxu0 %v784
    %3657 = vmatprep.subr.mxu0 %v783
    %3658 = vmatpush1.msra.mxu0 %v782
    %3659 = vmatprep.subr.mxu0 %v781
    %3660 = vmatpush1.msra.mxu0 %v780
    %3661 = vmatprep.subr.mxu0 %v779
    %3662 = vmatpush1.msra.mxu0 %v778
    %3663 = vmatprep.subr.mxu0 %v777
    %3664 = vmatpush1.msra.mxu0 %v776
    %3665 = vmatprep.subr.mxu0 %v775
    %3666 = vmatpush1.msra.mxu0 %v774
    %3667 = vmatprep.subr.mxu0 %v773
    %3668 = vmatpush1.msra.mxu0 %v772
    %3669 = vmatprep.subr.mxu0 %v771
    %3670 = vmatpush1.msra.mxu0 %v770
    %3671 = vmatprep.subr.mxu0 %v769
    %3672 = vmatpush1.msra.mxu0 %v768
    %3673 = vmatprep.subr.mxu0 %v767
    %3674 = vmatpush1.msra.mxu0 %v766
    %3675 = vmatprep.subr.mxu0 %v765
    %3676 = vmatpush1.msra.mxu0 %v764
    %3677 = vmatprep.subr.mxu0 %v763
    %3678 = vmatpush1.msra.mxu0 %v762
    %3679 = vmatprep.subr.mxu0 %v825
    %3680 = vmatpush2.msra.mxu0 %v824
    %3681 = vmatprep.subr.mxu0 %v823
    %3682 = vmatpush2.msra.mxu0 %v822
    %3683 = vmatprep.subr.mxu0 %v821
    %3684 = vmatpush2.msra.mxu0 %v820
    %3685 = vmatprep.subr.mxu0 %v819
    %3686 = vmatpush2.msra.mxu0 %v818
    %3687 = vmatprep.subr.mxu0 %v817
    %3688 = vmatpush2.msra.mxu0 %v816
    %3689 = vmatprep.subr.mxu0 %v815
    %3690 = vmatpush2.msra.mxu0 %v814
    %3691 = vmatprep.subr.mxu0 %v813
    %3692 = vmatpush2.msra.mxu0 %v812
    %3693 = vmatprep.subr.mxu0 %v811
    %3694 = vmatpush2.msra.mxu0 %v810
    %3695 = vmatprep.subr.mxu0 %v809
    %3696 = vmatpush2.msra.mxu0 %v808
    %3697 = vmatprep.subr.mxu0 %v807
    %3698 = vmatpush2.msra.mxu0 %v806
    %3699 = vmatprep.subr.mxu0 %v805
    %3700 = vmatpush2.msra.mxu0 %v804
    %3701 = vmatprep.subr.mxu0 %v803
    %3702 = vmatpush2.msra.mxu0 %v802
    %3703 = vmatprep.subr.mxu0 %v801
    %3704 = vmatpush2.msra.mxu0 %v800
    %3705 = vmatprep.subr.mxu0 %v799
    %3706 = vmatpush2.msra.mxu0 %v798
    %3707 = vmatprep.subr.mxu0 %v797
    %3708 = vmatpush2.msra.mxu0 %v796
    %3709 = vmatprep.subr.mxu0 %v795
    %3710 = vmatpush2.msra.mxu0 %v794
    %3711 = vmatprep.mubr.f32.mxu0 %v3070
    %3712 = vmatmul.mubr.f32.gmra.mxu0 %v3069
    %v3713 = vpop.f32.mrf.mxu0
    %v3714 = vadd.f32 0.0, %v3713
    %v3715 = vpop.f32.mrf.mxu0
    %v3716 = vadd.f32 0.0, %v3715
    %3717 = vmatprep.mubr.f32.mxu0 %v3072
    %3718 = vmatmul.mubr.f32.gmra.mxu0 %v3071
    %v3719 = vpop.f32.mrf.mxu0
    %v3720 = vadd.f32 0.0, %v3719
    %v3721 = vpop.f32.mrf.mxu0
    %v3722 = vadd.f32 0.0, %v3721
    %3723 = vmatprep.mubr.f32.mxu0 %v3074
    %3724 = vmatmul.mubr.f32.gmra.mxu0 %v3073
    %v3725 = vpop.f32.mrf.mxu0
    %v3726 = vadd.f32 0.0, %v3725
    %v3727 = vpop.f32.mrf.mxu0
    %v3728 = vadd.f32 0.0, %v3727
    %3729 = vmatprep.mubr.f32.mxu0 %v3076
    %3730 = vmatmul.mubr.f32.gmra.mxu0 %v3075
    %v3731 = vpop.f32.mrf.mxu0
    %v3732 = vadd.f32 0.0, %v3731
    %v3733 = vpop.f32.mrf.mxu0
    %v3734 = vadd.f32 0.0, %v3733
    %3735 = vmatprep.mubr.f32.mxu0 %v3078
    %3736 = vmatmul.mubr.f32.gmra.mxu0 %v3077
    %v3737 = vpop.f32.mrf.mxu0
    %v3738 = vadd.f32 0.0, %v3737
    %v3739 = vpop.f32.mrf.mxu0
    %v3740 = vadd.f32 0.0, %v3739
    %3741 = vmatprep.mubr.f32.mxu0 %v3080
    %3742 = vmatmul.mubr.f32.gmra.mxu0 %v3079
    %v3743 = vpop.f32.mrf.mxu0
    %v3744 = vadd.f32 0.0, %v3743
    %v3745 = vpop.f32.mrf.mxu0
    %v3746 = vadd.f32 0.0, %v3745
    %3747 = vmatprep.mubr.f32.mxu0 %v3082
    %3748 = vmatmul.mubr.f32.gmra.mxu0 %v3081
    %v3749 = vpop.f32.mrf.mxu0
    %v3750 = vadd.f32 0.0, %v3749
    %v3751 = vpop.f32.mrf.mxu0
    %v3752 = vadd.f32 0.0, %v3751
    %3753 = vmatprep.mubr.f32.mxu0 %v3084
    %3754 = vmatmul.mubr.f32.gmra.mxu0 %v3083
    %v3755 = vpop.f32.mrf.mxu0
    %v3756 = vadd.f32 0.0, %v3755
    %v3757 = vpop.f32.mrf.mxu0
    %v3758 = vadd.f32 0.0, %v3757
    %3759 = vmatprep.mubr.f32.mxu0 %v3086
    %3760 = vmatmul.mubr.f32.gmra.mxu0 %v3085
    %v3761 = vpop.f32.mrf.mxu0
    %v3762 = vadd.f32 0.0, %v3761
    %v3763 = vpop.f32.mrf.mxu0
    %v3764 = vadd.f32 0.0, %v3763
    %3765 = vmatprep.mubr.f32.mxu0 %v3088
    %3766 = vmatmul.mubr.f32.gmra.mxu0 %v3087
    %v3767 = vpop.f32.mrf.mxu0
    %v3768 = vadd.f32 0.0, %v3767
    %v3769 = vpop.f32.mrf.mxu0
    %v3770 = vadd.f32 0.0, %v3769
    %3771 = vmatprep.mubr.f32.mxu0 %v3090
    %3772 = vmatmul.mubr.f32.gmra.mxu0 %v3089
    %v3773 = vpop.f32.mrf.mxu0
    %v3774 = vadd.f32 0.0, %v3773
    %v3775 = vpop.f32.mrf.mxu0
    %v3776 = vadd.f32 0.0, %v3775
    %3777 = vmatprep.mubr.f32.mxu0 %v3092
    %3778 = vmatmul.mubr.f32.gmra.mxu0 %v3091
    %v3779 = vpop.f32.mrf.mxu0
    %v3780 = vadd.f32 0.0, %v3779
    %v3781 = vpop.f32.mrf.mxu0
    %v3782 = vadd.f32 0.0, %v3781
    %3783 = vmatprep.mubr.f32.mxu0 %v3094
    %3784 = vmatmul.mubr.f32.gmra.mxu0 %v3093
    %v3785 = vpop.f32.mrf.mxu0
    %v3786 = vadd.f32 0.0, %v3785
    %v3787 = vpop.f32.mrf.mxu0
    %v3788 = vadd.f32 0.0, %v3787
    %3789 = vmatprep.mubr.f32.mxu0 %v3096
    %3790 = vmatmul.mubr.f32.gmra.mxu0 %v3095
    %v3791 = vpop.f32.mrf.mxu0
    %v3792 = vadd.f32 0.0, %v3791
    %v3793 = vpop.f32.mrf.mxu0
    %v3794 = vadd.f32 0.0, %v3793
    %3795 = vmatprep.mubr.f32.mxu0 %v3098
    %3796 = vmatmul.mubr.f32.gmra.mxu0 %v3097
    %v3797 = vpop.f32.mrf.mxu0
    %v3798 = vadd.f32 0.0, %v3797
    %v3799 = vpop.f32.mrf.mxu0
    %v3800 = vadd.f32 0.0, %v3799
    %3801 = vmatprep.mubr.f32.mxu0 %v3100
    %3802 = vmatmul.mubr.f32.gmra.mxu0 %v3099
    %v3803 = vpop.f32.mrf.mxu0
    %v3804 = vadd.f32 0.0, %v3803
    %v3805 = vpop.f32.mrf.mxu0
    %v3806 = vadd.f32 0.0, %v3805
    %3807 = vmatprep.mubr.f32.mxu0 %v3102
    %3808 = vmatmul.mubr.f32.gmra.mxu0 %v3101
    %v3809 = vpop.f32.mrf.mxu0
    %v3810 = vadd.f32 0.0, %v3809
    %v3811 = vpop.f32.mrf.mxu0
    %v3812 = vadd.f32 0.0, %v3811
    %3813 = vmatprep.mubr.f32.mxu0 %v3104
    %3814 = vmatmul.mubr.f32.gmra.mxu0 %v3103
    %v3815 = vpop.f32.mrf.mxu0
    %v3816 = vadd.f32 0.0, %v3815
    %v3817 = vpop.f32.mrf.mxu0
    %v3818 = vadd.f32 0.0, %v3817
    %3819 = vmatprep.mubr.f32.mxu0 %v3106
    %3820 = vmatmul.mubr.f32.gmra.mxu0 %v3105
    %v3821 = vpop.f32.mrf.mxu0
    %v3822 = vadd.f32 0.0, %v3821
    %v3823 = vpop.f32.mrf.mxu0
    %v3824 = vadd.f32 0.0, %v3823
    %3825 = vmatprep.mubr.f32.mxu0 %v3108
    %3826 = vmatmul.mubr.f32.gmra.mxu0 %v3107
    %v3827 = vpop.f32.mrf.mxu0
    %v3828 = vadd.f32 0.0, %v3827
    %v3829 = vpop.f32.mrf.mxu0
    %v3830 = vadd.f32 0.0, %v3829
    %3831 = vmatprep.mubr.f32.mxu0 %v3110
    %3832 = vmatmul.mubr.f32.gmra.mxu0 %v3109
    %v3833 = vpop.f32.mrf.mxu0
    %v3834 = vadd.f32 0.0, %v3833
    %v3835 = vpop.f32.mrf.mxu0
    %v3836 = vadd.f32 0.0, %v3835
    %3837 = vmatprep.mubr.f32.mxu0 %v3112
    %3838 = vmatmul.mubr.f32.gmra.mxu0 %v3111
    %v3839 = vpop.f32.mrf.mxu0
    %v3840 = vadd.f32 0.0, %v3839
    %v3841 = vpop.f32.mrf.mxu0
    %v3842 = vadd.f32 0.0, %v3841
    %3843 = vmatprep.mubr.f32.mxu0 %v3114
    %3844 = vmatmul.mubr.f32.gmra.mxu0 %v3113
    %v3845 = vpop.f32.mrf.mxu0
    %v3846 = vadd.f32 0.0, %v3845
    %v3847 = vpop.f32.mrf.mxu0
    %v3848 = vadd.f32 0.0, %v3847
    %3849 = vmatprep.mubr.f32.mxu0 %v3116
    %3850 = vmatmul.mubr.f32.gmra.mxu0 %v3115
    %v3851 = vpop.f32.mrf.mxu0
    %v3852 = vadd.f32 0.0, %v3851
    %v3853 = vpop.f32.mrf.mxu0
    %v3854 = vadd.f32 0.0, %v3853
    %3855 = vmatprep.mubr.f32.mxu0 %v3118
    %3856 = vmatmul.mubr.f32.gmra.mxu0 %v3117
    %v3857 = vpop.f32.mrf.mxu0
    %v3858 = vadd.f32 0.0, %v3857
    %v3859 = vpop.f32.mrf.mxu0
    %v3860 = vadd.f32 0.0, %v3859
    %3861 = vmatprep.mubr.f32.mxu0 %v3120
    %3862 = vmatmul.mubr.f32.gmra.mxu0 %v3119
    %v3863 = vpop.f32.mrf.mxu0
    %v3864 = vadd.f32 0.0, %v3863
    %v3865 = vpop.f32.mrf.mxu0
    %v3866 = vadd.f32 0.0, %v3865
    %3867 = vmatprep.mubr.f32.mxu0 %v3122
    %3868 = vmatmul.mubr.f32.gmra.mxu0 %v3121
    %v3869 = vpop.f32.mrf.mxu0
    %v3870 = vadd.f32 0.0, %v3869
    %v3871 = vpop.f32.mrf.mxu0
    %v3872 = vadd.f32 0.0, %v3871
    %3873 = vmatprep.mubr.f32.mxu0 %v3124
    %3874 = vmatmul.mubr.f32.gmra.mxu0 %v3123
    %v3875 = vpop.f32.mrf.mxu0
    %v3876 = vadd.f32 0.0, %v3875
    %v3877 = vpop.f32.mrf.mxu0
    %v3878 = vadd.f32 0.0, %v3877
    %3879 = vmatprep.mubr.f32.mxu0 %v3126
    %3880 = vmatmul.mubr.f32.gmra.mxu0 %v3125
    %v3881 = vpop.f32.mrf.mxu0
    %v3882 = vadd.f32 0.0, %v3881
    %v3883 = vpop.f32.mrf.mxu0
    %v3884 = vadd.f32 0.0, %v3883
    %3885 = vmatprep.mubr.f32.mxu0 %v3128
    %3886 = vmatmul.mubr.f32.gmra.mxu0 %v3127
    %v3887 = vpop.f32.mrf.mxu0
    %v3888 = vadd.f32 0.0, %v3887
    %v3889 = vpop.f32.mrf.mxu0
    %v3890 = vadd.f32 0.0, %v3889
    %3891 = vmatprep.mubr.f32.mxu0 %v3130
    %3892 = vmatmul.mubr.f32.gmra.mxu0 %v3129
    %v3893 = vpop.f32.mrf.mxu0
    %v3894 = vadd.f32 0.0, %v3893
    %v3895 = vpop.f32.mrf.mxu0
    %v3896 = vadd.f32 0.0, %v3895
    %3897 = vmatprep.mubr.f32.mxu0 %v3132
    %3898 = vmatmul.mubr.f32.gmra.mxu0 %v3131
    %v3899 = vpop.f32.mrf.mxu0
    %v3900 = vadd.f32 0.0, %v3899
    %v3901 = vpop.f32.mrf.mxu0
    %v3902 = vadd.f32 0.0, %v3901
    %3903 = vdwg.mxu0
    %3904 = vst [vmem:[#allocation10] sm:$0xff] %v3200
    %3905 = vst [vmem:[#allocation10 + $0x8] sm:$0xff] %v3202
    %3906 = vst [vmem:[#allocation10 + $0x10] sm:$0xff] %v3206
    %3907 = vst [vmem:[#allocation10 + $0x18] sm:$0xff] %v3208
    %3908 = vst [vmem:[#allocation10 + $0x20] sm:$0xff] %v3212
    %3909 = vst [vmem:[#allocation10 + $0x28] sm:$0xff] %v3214
    %3910 = vst [vmem:[#allocation10 + $0x30] sm:$0xff] %v3218
    %3911 = vst [vmem:[#allocation10 + $0x38] sm:$0xff] %v3220
    %3912 = vst [vmem:[#allocation10 + $0x40] sm:$0xff] %v3224
    %3913 = vst [vmem:[#allocation10 + $0x48] sm:$0xff] %v3226
    %3914 = vst [vmem:[#allocation10 + $0x50] sm:$0xff] %v3230
    %3915 = vst [vmem:[#allocation10 + $0x58] sm:$0xff] %v3232
    %3916 = vst [vmem:[#allocation10 + $0x60] sm:$0xff] %v3236
    %3917 = vst [vmem:[#allocation10 + $0x68] sm:$0xff] %v3238
    %3918 = vst [vmem:[#allocation10 + $0x70] sm:$0xff] %v3242
    %3919 = vst [vmem:[#allocation10 + $0x78] sm:$0xff] %v3244
    %3920 = vst [vmem:[#allocation10 + $0x80] sm:$0xff] %v3248
    %3921 = vst [vmem:[#allocation10 + $0x88] sm:$0xff] %v3250
    %3922 = vst [vmem:[#allocation10 + $0x90] sm:$0xff] %v3254
    %3923 = vst [vmem:[#allocation10 + $0x98] sm:$0xff] %v3256
    %3924 = vst [vmem:[#allocation10 + $0xa0] sm:$0xff] %v3260
    %3925 = vst [vmem:[#allocation10 + $0xa8] sm:$0xff] %v3262
    %3926 = vst [vmem:[#allocation10 + $0xb0] sm:$0xff] %v3266
    %3927 = vst [vmem:[#allocation10 + $0xb8] sm:$0xff] %v3268
    %3928 = vst [vmem:[#allocation10 + $0xc0] sm:$0xff] %v3272
    %3929 = vst [vmem:[#allocation10 + $0xc8] sm:$0xff] %v3274
    %3930 = vst [vmem:[#allocation10 + $0xd0] sm:$0xff] %v3278
    %3931 = vst [vmem:[#allocation10 + $0xd8] sm:$0xff] %v3280
    %3932 = vst [vmem:[#allocation10 + $0xe0] sm:$0xff] %v3284
    %3933 = vst [vmem:[#allocation10 + $0xe8] sm:$0xff] %v3286
    %3934 = vst [vmem:[#allocation10 + $0xf0] sm:$0xff] %v3290
    %3935 = vst [vmem:[#allocation10 + $0xf8] sm:$0xff] %v3292
    %3936 = vst [vmem:[#allocation10 + $0x100] sm:$0xff] %v3296
    %3937 = vst [vmem:[#allocation10 + $0x108] sm:$0xff] %v3298
    %3938 = vst [vmem:[#allocation10 + $0x110] sm:$0xff] %v3302
    %3939 = vst [vmem:[#allocation10 + $0x118] sm:$0xff] %v3304
    %3940 = vst [vmem:[#allocation10 + $0x120] sm:$0xff] %v3308
    %3941 = vst [vmem:[#allocation10 + $0x128] sm:$0xff] %v3310
    %3942 = vst [vmem:[#allocation10 + $0x130] sm:$0xff] %v3314
    %3943 = vst [vmem:[#allocation10 + $0x138] sm:$0xff] %v3316
    %3944 = vst [vmem:[#allocation10 + $0x140] sm:$0xff] %v3320
    %3945 = vst [vmem:[#allocation10 + $0x148] sm:$0xff] %v3322
    %3946 = vst [vmem:[#allocation10 + $0x150] sm:$0xff] %v3326
    %3947 = vst [vmem:[#allocation10 + $0x158] sm:$0xff] %v3328
    %3948 = vst [vmem:[#allocation10 + $0x160] sm:$0xff] %v3332
    %3949 = vst [vmem:[#allocation10 + $0x168] sm:$0xff] %v3334
    %3950 = vst [vmem:[#allocation10 + $0x170] sm:$0xff] %v3338
    %3951 = vst [vmem:[#allocation10 + $0x178] sm:$0xff] %v3340
    %3952 = vst [vmem:[#allocation10 + $0x180] sm:$0xff] %v3344
    %3953 = vst [vmem:[#allocation10 + $0x188] sm:$0xff] %v3346
    %3954 = vst [vmem:[#allocation10 + $0x190] sm:$0xff] %v3350
    %3955 = vst [vmem:[#allocation10 + $0x198] sm:$0xff] %v3352
    %3956 = vst [vmem:[#allocation10 + $0x1a0] sm:$0xff] %v3356
    %3957 = vst [vmem:[#allocation10 + $0x1a8] sm:$0xff] %v3358
    %3958 = vst [vmem:[#allocation10 + $0x1b0] sm:$0xff] %v3362
    %3959 = vst [vmem:[#allocation10 + $0x1b8] sm:$0xff] %v3364
    %3960 = vst [vmem:[#allocation10 + $0x1c0] sm:$0xff] %v3368
    %3961 = vst [vmem:[#allocation10 + $0x1c8] sm:$0xff] %v3370
    %3962 = vst [vmem:[#allocation10 + $0x1d0] sm:$0xff] %v3374
    %3963 = vst [vmem:[#allocation10 + $0x1d8] sm:$0xff] %v3376
    %3964 = vst [vmem:[#allocation10 + $0x1e0] sm:$0xff] %v3380
    %3965 = vst [vmem:[#allocation10 + $0x1e8] sm:$0xff] %v3382
    %3966 = vst [vmem:[#allocation10 + $0x1f0] sm:$0xff] %v3386
    %3967 = vst [vmem:[#allocation10 + $0x1f8] sm:$0xff] %v3388
    %3968 = vst [vmem:[#allocation10 + $0x200] sm:$0xff] %v3457
    %3969 = vst [vmem:[#allocation10 + $0x208] sm:$0xff] %v3459
    %3970 = vst [vmem:[#allocation10 + $0x210] sm:$0xff] %v3463
    %3971 = vst [vmem:[#allocation10 + $0x218] sm:$0xff] %v3465
    %3972 = vst [vmem:[#allocation10 + $0x220] sm:$0xff] %v3469
    %3973 = vst [vmem:[#allocation10 + $0x228] sm:$0xff] %v3471
    %3974 = vst [vmem:[#allocation10 + $0x230] sm:$0xff] %v3475
    %3975 = vst [vmem:[#allocation10 + $0x238] sm:$0xff] %v3477
    %3976 = vst [vmem:[#allocation10 + $0x240] sm:$0xff] %v3481
    %3977 = vst [vmem:[#allocation10 + $0x248] sm:$0xff] %v3483
    %3978 = vst [vmem:[#allocation10 + $0x250] sm:$0xff] %v3487
    %3979 = vst [vmem:[#allocation10 + $0x258] sm:$0xff] %v3489
    %3980 = vst [vmem:[#allocation10 + $0x260] sm:$0xff] %v3493
    %3981 = vst [vmem:[#allocation10 + $0x268] sm:$0xff] %v3495
    %3982 = vst [vmem:[#allocation10 + $0x270] sm:$0xff] %v3499
    %3983 = vst [vmem:[#allocation10 + $0x278] sm:$0xff] %v3501
    %3984 = vst [vmem:[#allocation10 + $0x280] sm:$0xff] %v3505
    %3985 = vst [vmem:[#allocation10 + $0x288] sm:$0xff] %v3507
    %3986 = vst [vmem:[#allocation10 + $0x290] sm:$0xff] %v3511
    %3987 = vst [vmem:[#allocation10 + $0x298] sm:$0xff] %v3513
    %3988 = vst [vmem:[#allocation10 + $0x2a0] sm:$0xff] %v3517
    %3989 = vst [vmem:[#allocation10 + $0x2a8] sm:$0xff] %v3519
    %3990 = vst [vmem:[#allocation10 + $0x2b0] sm:$0xff] %v3523
    %3991 = vst [vmem:[#allocation10 + $0x2b8] sm:$0xff] %v3525
    %3992 = vst [vmem:[#allocation10 + $0x2c0] sm:$0xff] %v3529
    %3993 = vst [vmem:[#allocation10 + $0x2c8] sm:$0xff] %v3531
    %3994 = vst [vmem:[#allocation10 + $0x2d0] sm:$0xff] %v3535
    %3995 = vst [vmem:[#allocation10 + $0x2d8] sm:$0xff] %v3537
    %3996 = vst [vmem:[#allocation10 + $0x2e0] sm:$0xff] %v3541
    %3997 = vst [vmem:[#allocation10 + $0x2e8] sm:$0xff] %v3543
    %3998 = vst [vmem:[#allocation10 + $0x2f0] sm:$0xff] %v3547
    %3999 = vst [vmem:[#allocation10 + $0x2f8] sm:$0xff] %v3549
    %4000 = vst [vmem:[#allocation10 + $0x300] sm:$0xff] %v3553
    %4001 = vst [vmem:[#allocation10 + $0x308] sm:$0xff] %v3555
    %4002 = vst [vmem:[#allocation10 + $0x310] sm:$0xff] %v3559
    %4003 = vst [vmem:[#allocation10 + $0x318] sm:$0xff] %v3561
    %4004 = vst [vmem:[#allocation10 + $0x320] sm:$0xff] %v3565
    %4005 = vst [vmem:[#allocation10 + $0x328] sm:$0xff] %v3567
    %4006 = vst [vmem:[#allocation10 + $0x330] sm:$0xff] %v3571
    %4007 = vst [vmem:[#allocation10 + $0x338] sm:$0xff] %v3573
    %4008 = vst [vmem:[#allocation10 + $0x340] sm:$0xff] %v3577
    %4009 = vst [vmem:[#allocation10 + $0x348] sm:$0xff] %v3579
    %4010 = vst [vmem:[#allocation10 + $0x350] sm:$0xff] %v3583
    %4011 = vst [vmem:[#allocation10 + $0x358] sm:$0xff] %v3585
    %4012 = vst [vmem:[#allocation10 + $0x360] sm:$0xff] %v3589
    %4013 = vst [vmem:[#allocation10 + $0x368] sm:$0xff] %v3591
    %4014 = vst [vmem:[#allocation10 + $0x370] sm:$0xff] %v3595
    %4015 = vst [vmem:[#allocation10 + $0x378] sm:$0xff] %v3597
    %4016 = vst [vmem:[#allocation10 + $0x380] sm:$0xff] %v3601
    %4017 = vst [vmem:[#allocation10 + $0x388] sm:$0xff] %v3603
    %4018 = vst [vmem:[#allocation10 + $0x390] sm:$0xff] %v3607
    %4019 = vst [vmem:[#allocation10 + $0x398] sm:$0xff] %v3609
    %4020 = vst [vmem:[#allocation10 + $0x3a0] sm:$0xff] %v3613
    %4021 = vst [vmem:[#allocation10 + $0x3a8] sm:$0xff] %v3615
    %4022 = vst [vmem:[#allocation10 + $0x3b0] sm:$0xff] %v3619
    %4023 = vst [vmem:[#allocation10 + $0x3b8] sm:$0xff] %v3621
    %4024 = vst [vmem:[#allocation10 + $0x3c0] sm:$0xff] %v3625
    %4025 = vst [vmem:[#allocation10 + $0x3c8] sm:$0xff] %v3627
    %4026 = vst [vmem:[#allocation10 + $0x3d0] sm:$0xff] %v3631
    %4027 = vst [vmem:[#allocation10 + $0x3d8] sm:$0xff] %v3633
    %4028 = vst [vmem:[#allocation10 + $0x3e0] sm:$0xff] %v3637
    %4029 = vst [vmem:[#allocation10 + $0x3e8] sm:$0xff] %v3639
    %4030 = vst [vmem:[#allocation10 + $0x3f0] sm:$0xff] %v3643
    %4031 = vst [vmem:[#allocation10 + $0x3f8] sm:$0xff] %v3645
    %4032 = vst [vmem:[#allocation10 + $0x400] sm:$0xff] %v3714
    %4033 = vst [vmem:[#allocation10 + $0x408] sm:$0xff] %v3716
    %4034 = vst [vmem:[#allocation10 + $0x410] sm:$0xff] %v3720
    %4035 = vst [vmem:[#allocation10 + $0x418] sm:$0xff] %v3722
    %4036 = vst [vmem:[#allocation10 + $0x420] sm:$0xff] %v3726
    %4037 = vst [vmem:[#allocation10 + $0x428] sm:$0xff] %v3728
    %4038 = vst [vmem:[#allocation10 + $0x430] sm:$0xff] %v3732
    %4039 = vst [vmem:[#allocation10 + $0x438] sm:$0xff] %v3734
    %4040 = vst [vmem:[#allocation10 + $0x440] sm:$0xff] %v3738
    %4041 = vst [vmem:[#allocation10 + $0x448] sm:$0xff] %v3740
    %4042 = vst [vmem:[#allocation10 + $0x450] sm:$0xff] %v3744
    %4043 = vst [vmem:[#allocation10 + $0x458] sm:$0xff] %v3746
    %4044 = vst [vmem:[#allocation10 + $0x460] sm:$0xff] %v3750
    %4045 = vst [vmem:[#allocation10 + $0x468] sm:$0xff] %v3752
    %4046 = vst [vmem:[#allocation10 + $0x470] sm:$0xff] %v3756
    %4047 = vst [vmem:[#allocation10 + $0x478] sm:$0xff] %v3758
    %4048 = vst [vmem:[#allocation10 + $0x480] sm:$0xff] %v3762
    %4049 = vst [vmem:[#allocation10 + $0x488] sm:$0xff] %v3764
    %4050 = vst [vmem:[#allocation10 + $0x490] sm:$0xff] %v3768
    %4051 = vst [vmem:[#allocation10 + $0x498] sm:$0xff] %v3770
    %4052 = vst [vmem:[#allocation10 + $0x4a0] sm:$0xff] %v3774
    %4053 = vst [vmem:[#allocation10 + $0x4a8] sm:$0xff] %v3776
    %4054 = vst [vmem:[#allocation10 + $0x4b0] sm:$0xff] %v3780
    %4055 = vst [vmem:[#allocation10 + $0x4b8] sm:$0xff] %v3782
    %4056 = vst [vmem:[#allocation10 + $0x4c0] sm:$0xff] %v3786
    %4057 = vst [vmem:[#allocation10 + $0x4c8] sm:$0xff] %v3788
    %4058 = vst [vmem:[#allocation10 + $0x4d0] sm:$0xff] %v3792
    %4059 = vst [vmem:[#allocation10 + $0x4d8] sm:$0xff] %v3794
    %4060 = vst [vmem:[#allocation10 + $0x4e0] sm:$0xff] %v3798
    %4061 = vst [vmem:[#allocation10 + $0x4e8] sm:$0xff] %v3800
    %4062 = vst [vmem:[#allocation10 + $0x4f0] sm:$0xff] %v3804
    %4063 = vst [vmem:[#allocation10 + $0x4f8] sm:$0xff] %v3806
    %4064 = vst [vmem:[#allocation10 + $0x500] sm:$0xff] %v3810
    %4065 = vst [vmem:[#allocation10 + $0x508] sm:$0xff] %v3812
    %4066 = vst [vmem:[#allocation10 + $0x510] sm:$0xff] %v3816
    %4067 = vst [vmem:[#allocation10 + $0x518] sm:$0xff] %v3818
    %4068 = vst [vmem:[#allocation10 + $0x520] sm:$0xff] %v3822
    %4069 = vst [vmem:[#allocation10 + $0x528] sm:$0xff] %v3824
    %4070 = vst [vmem:[#allocation10 + $0x530] sm:$0xff] %v3828
    %4071 = vst [vmem:[#allocation10 + $0x538] sm:$0xff] %v3830
    %4072 = vst [vmem:[#allocation10 + $0x540] sm:$0xff] %v3834
    %4073 = vst [vmem:[#allocation10 + $0x548] sm:$0xff] %v3836
    %4074 = vst [vmem:[#allocation10 + $0x550] sm:$0xff] %v3840
    %4075 = vst [vmem:[#allocation10 + $0x558] sm:$0xff] %v3842
    %4076 = vst [vmem:[#allocation10 + $0x560] sm:$0xff] %v3846
    %4077 = vst [vmem:[#allocation10 + $0x568] sm:$0xff] %v3848
    %4078 = vst [vmem:[#allocation10 + $0x570] sm:$0xff] %v3852
    %4079 = vst [vmem:[#allocation10 + $0x578] sm:$0xff] %v3854
    %4080 = vst [vmem:[#allocation10 + $0x580] sm:$0xff] %v3858
    %4081 = vst [vmem:[#allocation10 + $0x588] sm:$0xff] %v3860
    %4082 = vst [vmem:[#allocation10 + $0x590] sm:$0xff] %v3864
    %4083 = vst [vmem:[#allocation10 + $0x598] sm:$0xff] %v3866
    %4084 = vst [vmem:[#allocation10 + $0x5a0] sm:$0xff] %v3870
    %4085 = vst [vmem:[#allocation10 + $0x5a8] sm:$0xff] %v3872
    %4086 = vst [vmem:[#allocation10 + $0x5b0] sm:$0xff] %v3876
    %4087 = vst [vmem:[#allocation10 + $0x5b8] sm:$0xff] %v3878
    %4088 = vst [vmem:[#allocation10 + $0x5c0] sm:$0xff] %v3882
    %4089 = vst [vmem:[#allocation10 + $0x5c8] sm:$0xff] %v3884
    %4090 = vst [vmem:[#allocation10 + $0x5d0] sm:$0xff] %v3888
    %4091 = vst [vmem:[#allocation10 + $0x5d8] sm:$0xff] %v3890
    %4092 = vst [vmem:[#allocation10 + $0x5e0] sm:$0xff] %v3894
    %4093 = vst [vmem:[#allocation10 + $0x5e8] sm:$0xff] %v3896
    %4094 = vst [vmem:[#allocation10 + $0x5f0] sm:$0xff] %v3900
    %4095 = vst [vmem:[#allocation10 + $0x5f8] sm:$0xff] %v3902
    // Predicated region
    $region26: #{attention_dropout.1} parent=1 // pred_check
      _
    $region27: #{attention_dropout.1} parent=1 // pred_check_branch
      %4097 = sbr.rel (0) target = $region29
    $region28: #{attention_dropout.1} parent=1 // pred_region
      %s4099 = ssub.s32 24576, 24576
      %4100 = vsyncadd [#allocation6], %s4099
      %s4101 = sshll.u32 [#allocation10], 4
      %s4102 = int_to_ptr.vmem [resolvable:$true] %s4101
      %4107 = dma.vmem_to_hbm [thread:$0]  %s4102, 24576, %s4, [#allocation6], 256, 256, 16
    $region29: #{attention_dropout.1} parent=1 // pred_fallthru
      _
    // Predicated region
    $region30: #{attention_dropout.1} parent=1 // pred_check
      _
    $region31: #{attention_dropout.1} parent=1 // pred_check_branch
      %4109 = sbr.rel (0) target = $region33
    $region32: #{attention_dropout.1} parent=1 // pred_region
      %4110 = dma.done [#allocation6], 24576
    $region33: #{attention_dropout.1} parent=1 // pred_fallthru
      _
    %4111 = vsyncpa [#allocation5], 1
    %4112 = vsyncpa [#allocation8], 1
    %4113 = vsyncpa [#allocation6], 1

</llo_original>
